<compile_context>
chip_gen: v5e
topology: v5e:2x2
jax: 0.10.0
libtpu: 0.0.40
codegen_flags: <defaults>
</compile_context>

<pallas_src>
import functools

import jax
import jax.numpy as jnp
from jax import lax
from jax.experimental import pallas as pl
from jax.experimental.pallas import tpu as pltpu


_VMEM_LIMIT = 48 * 1024 * 1024   # explicit scoped-VMEM budget (< v7x 64 MiB)


# ----------------------------------------------------------------------------
# Small helpers
# ----------------------------------------------------------------------------
def _ln(x, g, b, eps=1e-5):
    """LayerNorm in f32 (eps matches PyTorch default)."""
    mean = jnp.mean(x, axis=-1, keepdims=True)
    xc = x - mean
    var = jnp.mean(xc * xc, axis=-1, keepdims=True)
    return xc * lax.rsqrt(var + eps) * g + b


def _row_tile(m, target=512):
    """Largest row tile <= target that divides m and is a multiple of 8
    (or the full m when m is small)."""
    if m <= target:
        return m
    t = (target // 8) * 8
    while t >= 8:
        if m % t == 0:
            return t
        t -= 8
    return m


def _col_tile(n, target=512):
    """n is a multiple of 128; pick a lane-dense column tile <= target."""
    t = (target // 128) * 128
    while t >= 128:
        if n % t == 0:
            return t
        t -= 128
    return n


def _ff_tile(fd, target=2048):
    """Hidden-dim tile: full fd when small, else a multiple-of-128 divisor."""
    if fd <= target:
        return fd
    t = (target // 128) * 128
    while t >= 128:
        if fd % t == 0:
            return t
        t -= 128
    return fd


def _const_spec(block_shape):
    """BlockSpec for grid-constant operands (weights / biases / LN params).
    Single-buffered since the index map is constant -> halves their VMEM
    footprint vs. the default double-buffering."""
    nd = len(block_shape)
    index_map = lambda *_: (0,) * nd
    try:
        return pl.BlockSpec(block_shape, index_map,
                            pipeline_mode=pl.Buffered(1))
    except Exception:        # fallback for jax versions without pipeline_mode
        return pl.BlockSpec(block_shape, index_map)


# ----------------------------------------------------------------------------
# Pallas kernels
# ----------------------------------------------------------------------------
def _mha_block_kernel(nhead, xq_ref, xkv_ref, wq_ref, bq_ref, wkv_ref, bkv_ref,
                      wo_ref, bo_ref, g_ref, b_ref, o_ref, kv_ref):
    """One attention sub-layer step for (batch element i, query tile j):
    LN( x_q + OutProj( Attn( QProj(x_q), KVProj(x_kv) ) ) )."""
    xq = xq_ref[0]                               # (tq, D) bf16
    d = xq.shape[1]
    dh = d // nhead
    scale = dh ** -0.5

    # Fused K/V projection computed once per batch element (first query tile),
    # cached in a VMEM scratch and reused by the remaining query tiles.
    @pl.when(pl.program_id(1) == 0)
    def _():
        xkv = xkv_ref[0]                         # (Sk, D) bf16
        kv = (jnp.dot(xkv, wkv_ref[...], preferred_element_type=jnp.float32)
              + bkv_ref[...])
        kv_ref[...] = kv.astype(jnp.bfloat16)

    # Q projection: bf16 operands into the MXU, f32 accumulation, scale folded.
    q = ((jnp.dot(xq, wq_ref[...], preferred_element_type=jnp.float32)
          + bq_ref[...]) * scale).astype(jnp.bfloat16)            # (tq, D)

    kv = kv_ref[...]                              # (Sk, 2D) bf16
    k = kv[:, :d]
    v = kv[:, d:]

    # Per-head softmax(Q K^T) V; contexts are re-assembled into one (tq, D)
    # buffer so the output projection is a single full-D MXU contraction.
    # TODO(synk): at production head dims (dh >= 128) batch the heads through
    # one dot_general instead of lane-slicing per head.
    ctx = []
    for h in range(nhead):
        sl = slice(h * dh, (h + 1) * dh)
        s = lax.dot_general(q[:, sl], k[:, sl], (((1,), (1,)), ((), ())),
                            preferred_element_type=jnp.float32)   # (tq, Sk)
        m = jnp.max(s, axis=-1, keepdims=True)
        p = jnp.exp(s - m)
        p = (p * pl.reciprocal(jnp.sum(p, axis=-1, keepdims=True),
                               approx=True)).astype(jnp.bfloat16)
        ctx.append(jnp.dot(p, v[:, sl], preferred_element_type=jnp.float32))
    ctx = jnp.concatenate(ctx, axis=-1).astype(jnp.bfloat16)       # (tq, D)

    attn = (jnp.dot(ctx, wo_ref[...], preferred_element_type=jnp.float32)
            + bo_ref[...])
    y = xq.astype(jnp.float32) + attn             # residual in f32
    o_ref[0] = _ln(y, g_ref[...], b_ref[...]).astype(o_ref.dtype)


def _ffn_block_kernel(apply_extra_ln, x_ref, w1_ref, b1_ref, w2_ref, b2_ref,
                      g_ref, b_ref, g2_ref, b2ln_ref, o_ref, acc_ref):
    """LN( x + W2 @ relu(W1 @ x + b1) + b2 ), hidden dim tiled over grid axis 1.
    Optionally applies a second LN (fused encoder-final norm) before storing."""
    k = pl.program_id(1)

    @pl.when(k == 0)
    def _():
        acc_ref[...] = jnp.zeros_like(acc_ref)

    x = x_ref[...]                                            # (tm, D) bf16
    h = (jnp.dot(x, w1_ref[...], preferred_element_type=jnp.float32)
         + b1_ref[...])
    h = jnp.maximum(h, 0.0).astype(jnp.bfloat16)
    acc_ref[...] += jnp.dot(h, w2_ref[...],
                            preferred_element_type=jnp.float32)

    @pl.when(k == pl.num_programs(1) - 1)
    def _():
        y = x.astype(jnp.float32) + acc_ref[...] + b2_ref[...]
        y = _ln(y, g_ref[...], b_ref[...])
        if apply_extra_ln:
            y = _ln(y, g2_ref[...], b2ln_ref[...])
        o_ref[...] = y.astype(o_ref.dtype)


def _norm_linear_kernel(x_ref, g_ref, b_ref, w_ref, bias_ref, o_ref, xn_ref):
    """Final decoder LayerNorm fused with the (lane-padded) vocab projection.
    LN computed once per row tile (j == 0) and reused across vocab columns."""
    @pl.when(pl.program_id(1) == 0)
    def _():
        xn = _ln(x_ref[...].astype(jnp.float32), g_ref[...], b_ref[...])
        xn_ref[...] = xn.astype(jnp.bfloat16)
    o_ref[...] = (jnp.dot(xn_ref[...], w_ref[...],
                          preferred_element_type=jnp.float32) + bias_ref[...])


# ----------------------------------------------------------------------------
# pallas_call wrappers
# ----------------------------------------------------------------------------
def mha_block(x_q, x_kv, p, ln_g, ln_b, nhead):
    B, Sq, D = x_q.shape
    Sk = x_kv.shape[1]
    tq = _row_tile(Sq, target=256)
    kern = functools.partial(_mha_block_kernel, nhead)
    return pl.pallas_call(
        kern,
        out_shape=jax.ShapeDtypeStruct((B, Sq, D), jnp.bfloat16),
        grid=(B, Sq // tq),
        in_specs=[
            pl.BlockSpec((1, tq, D), lambda i, j: (i, j, 0)),
            pl.BlockSpec((1, Sk, D), lambda i, j: (i, 0, 0)),
            _const_spec((D, D)),          # wq
            _const_spec((1, D)),          # bq
            _const_spec((D, 2 * D)),      # wkv (fused K/V)
            _const_spec((1, 2 * D)),      # bkv
            _const_spec((D, D)),          # wo
            _const_spec((1, D)),          # bo
            _const_spec((1, D)),          # ln gamma
            _const_spec((1, D)),          # ln beta
        ],
        out_specs=pl.BlockSpec((1, tq, D), lambda i, j: (i, j, 0)),
        scratch_shapes=[pltpu.VMEM((Sk, 2 * D), jnp.bfloat16)],
        compiler_params=pltpu.CompilerParams(
            dimension_semantics=("parallel", "arbitrary"),
            vmem_limit_bytes=_VMEM_LIMIT),
    )(x_q, x_kv, p["wq"], p["bq"], p["wkv"], p["bkv"], p["wo"], p["bo"],
      ln_g, ln_b)


def ffn_block(x, w1, b1, w2, b2, g, b, extra_g=None, extra_b=None):
    apply_extra = extra_g is not None
    if not apply_extra:
        extra_g, extra_b = g, b           # placeholders, unused in-kernel
    B, S, D = x.shape
    M = B * S
    Fd = w1.shape[1]
    tm = _row_tile(M)
    tf = _ff_tile(Fd)
    kern = functools.partial(_ffn_block_kernel, apply_extra)
    out = pl.pallas_call(
        kern,
        out_shape=jax.ShapeDtypeStruct((M, D), jnp.bfloat16),
        grid=(M // tm, Fd // tf),
        in_specs=[
            pl.BlockSpec((tm, D), lambda i, k: (i, 0)),
            pl.BlockSpec((D, tf), lambda i, k: (0, k)),
            pl.BlockSpec((1, tf), lambda i, k: (0, k)),
            pl.BlockSpec((tf, D), lambda i, k: (k, 0)),
            _const_spec((1, D)),          # b2
            _const_spec((1, D)),          # ln gamma
            _const_spec((1, D)),          # ln beta
            _const_spec((1, D)),          # fused-final-norm gamma
            _const_spec((1, D)),          # fused-final-norm beta
        ],
        out_specs=pl.BlockSpec((tm, D), lambda i, k: (i, 0)),
        scratch_shapes=[pltpu.VMEM((tm, D), jnp.float32)],
        compiler_params=pltpu.CompilerParams(
            dimension_semantics=("parallel", "arbitrary"),
            vmem_limit_bytes=_VMEM_LIMIT),
    )(x.reshape(M, D), w1, b1, w2, b2, g, b, extra_g, extra_b)
    return out.reshape(B, S, D)


def norm_linear(x, g, b, w, bias, n_out):
    """LayerNorm + final projection.  w's columns are pre-padded to a multiple
    of 128 (lane-dense stores); padding is sliced off afterwards."""
    B, S, D = x.shape
    M = B * S
    Np = w.shape[1]
    tm = _row_tile(M)
    tn = _col_tile(Np)
    out = pl.pallas_call(
        _norm_linear_kernel,
        out_shape=jax.ShapeDtypeStruct((M, Np), jnp.float32),
        grid=(M // tm, Np // tn),
        in_specs=[
            pl.BlockSpec((tm, D), lambda i, j: (i, 0)),
            _const_spec((1, D)),
            _const_spec((1, D)),
            pl.BlockSpec((D, tn), lambda i, j: (0, j)),
            pl.BlockSpec((1, tn), lambda i, j: (0, j)),
        ],
        out_specs=pl.BlockSpec((tm, tn), lambda i, j: (i, j)),
        scratch_shapes=[pltpu.VMEM((tm, D), jnp.bfloat16)],
        compiler_params=pltpu.CompilerParams(
            dimension_semantics=("parallel", "arbitrary"),
            vmem_limit_bytes=_VMEM_LIMIT),
    )(x.reshape(M, D), g, b, w, bias)
    return out[:, :n_out].reshape(B, S, n_out)


# ----------------------------------------------------------------------------
# Positional encoding (matches the module's positional_encoding method)
# ----------------------------------------------------------------------------
def positional_encoding(d_model, maxlen=5000):
    pos = jnp.arange(0, maxlen, dtype=jnp.float32)[:, None]
    denominator = 10000.0 ** (
        jnp.arange(0, d_model, 2, dtype=jnp.float32) / d_model)
    pe = jnp.zeros((maxlen, d_model), jnp.float32)
    pe = pe.at[:, 0::2].set(jnp.sin(pos / denominator))
    pe = pe.at[:, 1::2].set(jnp.cos(pos / denominator))
    return pe[None]  # (1, maxlen, d_model)


# ----------------------------------------------------------------------------
# Parameter init (deterministic, synthetic; weights stored in bf16)
# ----------------------------------------------------------------------------
def _dense(key, fan_in, fan_out):
    return (jax.random.normal(key, (fan_in, fan_out), jnp.float32)
            * 0.02).astype(jnp.bfloat16)


def _attn_params(key, d_model):
    ks = jax.random.split(key, 4)
    wk = _dense(ks[1], d_model, d_model)
    wv = _dense(ks[2], d_model, d_model)
    return {
        "wq": _dense(ks[0], d_model, d_model),
        "bq": jnp.zeros((1, d_model), jnp.float32),
        "wkv": jnp.concatenate([wk, wv], axis=1),          # fused K/V weight
        "bkv": jnp.zeros((1, 2 * d_model), jnp.float32),
        "wo": _dense(ks[3], d_model, d_model),
        "bo": jnp.zeros((1, d_model), jnp.float32),
    }


def init_params(key, src_vocab, tgt_vocab, d_model, n_enc, n_dec, dim_ff):
    keys = iter(jax.random.split(key, 16 + 8 * (n_enc + n_dec)))
    n_pad = ((tgt_vocab + 127) // 128) * 128
    fc_w = jnp.zeros((d_model, n_pad), jnp.bfloat16)
    fc_w = fc_w.at[:, :tgt_vocab].set(_dense(next(keys), d_model, tgt_vocab))
    params = {
        "src_emb": jax.random.normal(next(keys), (src_vocab, d_model),
                                     jnp.float32) * 0.02,
        "tgt_emb": jax.random.normal(next(keys), (tgt_vocab, d_model),
                                     jnp.float32) * 0.02,
        # PE table built once here (not per forward call).
        "pos_enc": positional_encoding(d_model),
        "fc_w": fc_w,
        "fc_b": jnp.zeros((1, n_pad), jnp.float32),
        "enc_norm_g": jnp.ones((1, d_model), jnp.float32),
        "enc_norm_b": jnp.zeros((1, d_model), jnp.float32),
        "dec_norm_g": jnp.ones((1, d_model), jnp.float32),
        "dec_norm_b": jnp.zeros((1, d_model), jnp.float32),
        "enc_layers": [],
        "dec_layers": [],
    }
    for _ in range(n_enc):
        params["enc_layers"].append({
            "self_attn": _attn_params(next(keys), d_model),
            "ln1_g": jnp.ones((1, d_model), jnp.float32),
            "ln1_b": jnp.zeros((1, d_model), jnp.float32),
            "w1": _dense(next(keys), d_model, dim_ff),
            "b1": jnp.zeros((1, dim_ff), jnp.float32),
            "w2": _dense(next(keys), dim_ff, d_model),
            "b2": jnp.zeros((1, d_model), jnp.float32),
            "ln2_g": jnp.ones((1, d_model), jnp.float32),
            "ln2_b": jnp.zeros((1, d_model), jnp.float32),
        })
    for _ in range(n_dec):
        params["dec_layers"].append({
            "self_attn": _attn_params(next(keys), d_model),
            "cross_attn": _attn_params(next(keys), d_model),
            "ln1_g": jnp.ones((1, d_model), jnp.float32),
            "ln1_b": jnp.zeros((1, d_model), jnp.float32),
            "ln2_g": jnp.ones((1, d_model), jnp.float32),
            "ln2_b": jnp.zeros((1, d_model), jnp.float32),
            "w1": _dense(next(keys), d_model, dim_ff),
            "b1": jnp.zeros((1, dim_ff), jnp.float32),
            "w2": _dense(next(keys), dim_ff, d_model),
            "b2": jnp.zeros((1, d_model), jnp.float32),
            "ln3_g": jnp.ones((1, d_model), jnp.float32),
            "ln3_b": jnp.zeros((1, d_model), jnp.float32),
        })
    return params


# ----------------------------------------------------------------------------
# Full forward pass.
# TODO(synk): src/tgt masks and key-padding masks default to None in this call
# path (matching model(src, tgt)) and are not applied; dropout is identity.
# ----------------------------------------------------------------------------
def transformer_forward(params, src, tgt, *, nhead, tgt_vocab):
    pe = params["pos_enc"]
    x = (jnp.take(params["src_emb"], src, axis=0)
         + pe[:, :src.shape[1], :]).astype(jnp.bfloat16)
    y = (jnp.take(params["tgt_emb"], tgt, axis=0)
         + pe[:, :tgt.shape[1], :]).astype(jnp.bfloat16)

    # --- encoder stack (final encoder LayerNorm fused into the last FFN) ---
    n_enc = len(params["enc_layers"])
    for li, lyr in enumerate(params["enc_layers"]):
        x = mha_block(x, x, lyr["self_attn"], lyr["ln1_g"], lyr["ln1_b"], nhead)
        if li == n_enc - 1:
            x = ffn_block(x, lyr["w1"], lyr["b1"], lyr["w2"], lyr["b2"],
                          lyr["ln2_g"], lyr["ln2_b"],
                          extra_g=params["enc_norm_g"],
                          extra_b=params["enc_norm_b"])
        else:
            x = ffn_block(x, lyr["w1"], lyr["b1"], lyr["w2"], lyr["b2"],
                          lyr["ln2_g"], lyr["ln2_b"])
    memory = x

    # --- decoder stack ---
    for lyr in params["dec_layers"]:
        y = mha_block(y, y, lyr["self_attn"], lyr["ln1_g"], lyr["ln1_b"], nhead)
        y = mha_block(y, memory, lyr["cross_attn"], lyr["ln2_g"], lyr["ln2_b"],
                      nhead)
        y = ffn_block(y, lyr["w1"], lyr["b1"], lyr["w2"], lyr["b2"],
                      lyr["ln3_g"], lyr["ln3_b"])

    # --- final decoder norm fused with vocab projection ---
    return norm_linear(y, params["dec_norm_g"], params["dec_norm_b"],
                       params["fc_w"], params["fc_b"], tgt_vocab)


# ----------------------------------------------------------------------------
if __name__ == "__main__":
    SRC_VOCAB = 50
    TGT_VOCAB = 60
    D_MODEL = 32
    NHEAD = 4
    N_ENC = 2
    N_DEC = 2
    DIM_FF = 64
    BATCH = 2
    SRC_SEQ = 8
    TGT_SEQ = 8

    key = jax.random.PRNGKey(0)
    pkey, skey, tkey = jax.random.split(key, 3)
    params = init_params(pkey, SRC_VOCAB, TGT_VOCAB, D_MODEL, N_ENC, N_DEC,
                         DIM_FF)

    src = jax.random.randint(skey, (BATCH, SRC_SEQ), 0, SRC_VOCAB,
                             dtype=jnp.int32)
    tgt = jax.random.randint(tkey, (BATCH, TGT_SEQ), 0, TGT_VOCAB,
                             dtype=jnp.int32)

    fwd = jax.jit(functools.partial(transformer_forward, nhead=NHEAD,
                                    tgt_vocab=TGT_VOCAB))
    logits = fwd(params, src, tgt)
    jax.block_until_ready(logits)

    assert logits.shape == (BATCH, TGT_SEQ, TGT_VOCAB), logits.shape
    assert logits.dtype == jnp.float32
    assert bool(jnp.all(jnp.isfinite(logits)))
    print("KERNEL_OK")
</pallas_src>

<mosaic_0001>
module attributes {stable_mosaic.version = 11 : i64} {
  func.func @_ffn_block_kernel(%arg0: i32, %arg1: i32, %arg2: memref<16x32xbf16, #tpu.memory_space<vmem>>, %arg3: memref<32x64xbf16, #tpu.memory_space<vmem>>, %arg4: memref<1x64xf32, #tpu.memory_space<vmem>>, %arg5: memref<64x32xbf16, #tpu.memory_space<vmem>>, %arg6: memref<1x32xf32, #tpu.memory_space<vmem>>, %arg7: memref<1x32xf32, #tpu.memory_space<vmem>>, %arg8: memref<1x32xf32, #tpu.memory_space<vmem>>, %arg9: memref<1x32xf32, #tpu.memory_space<vmem>>, %arg10: memref<1x32xf32, #tpu.memory_space<vmem>>, %arg11: memref<16x32xbf16, #tpu.memory_space<vmem>>, %arg12: memref<16x32xf32, #tpu.memory_space<vmem>>) attributes {dimension_semantics = [#tpu.dimension_semantics<parallel>, #tpu.dimension_semantics<arbitrary>], iteration_bounds = array<i64: 1, 1>, scalar_prefetch = 0 : i64, scratch_operands = 1 : i64, tpu.core_type = #tpu.core_type<tc>, window_params = [{transform_indices = @transform_0, window_bounds = array<i64: 16, 32>}, {transform_indices = @transform_1, window_bounds = array<i64: 32, 64>}, {transform_indices = @transform_2, window_bounds = array<i64: 1, 64>}, {transform_indices = @transform_3, window_bounds = array<i64: 64, 32>}, {pipeline_mode = #tpu.pipeline_mode<synchronous>, transform_indices = @transform_4, window_bounds = array<i64: 1, 32>}, {pipeline_mode = #tpu.pipeline_mode<synchronous>, transform_indices = @transform_5, window_bounds = array<i64: 1, 32>}, {pipeline_mode = #tpu.pipeline_mode<synchronous>, transform_indices = @transform_6, window_bounds = array<i64: 1, 32>}, {pipeline_mode = #tpu.pipeline_mode<synchronous>, transform_indices = @transform_7, window_bounds = array<i64: 1, 32>}, {pipeline_mode = #tpu.pipeline_mode<synchronous>, transform_indices = @transform_8, window_bounds = array<i64: 1, 32>}, {transform_indices = @transform_9, window_bounds = array<i64: 16, 32>}]} {
    %c0_i32 = arith.constant 0 : i32
    %0 = arith.cmpi eq, %arg1, %c0_i32 : i32
    %1 = arith.extui %0 : i1 to i32
    %c0_i32_0 = arith.constant 0 : i32
    %2 = arith.cmpi ne, %1, %c0_i32_0 : i32
    scf.if %2 {
      %cst_16 = arith.constant 0.000000e+00 : f32
      %20 = vector.broadcast %cst_16 : f32 to vector<16x32xf32>
      %c0_17 = arith.constant 0 : index
      %c0_18 = arith.constant 0 : index
      %21 = vector.load %arg12[%c0_17, %c0_18] : memref<16x32xf32, #tpu.memory_space<vmem>>, vector<16x32xf32>
      tpu.vector_store %arg12[%c0_17, %c0_18], %20 {strides = array<i32>} : memref<16x32xf32, #tpu.memory_space<vmem>>, vector<16x32xf32>,
    } else {
    }
    %c0 = arith.constant 0 : index
    %c0_1 = arith.constant 0 : index
    %3 = vector.load %arg2[%c0, %c0_1] : memref<16x32xbf16, #tpu.memory_space<vmem>>, vector<16x32xbf16>
    %c0_2 = arith.constant 0 : index
    %c0_3 = arith.constant 0 : index
    %4 = vector.load %arg3[%c0_2, %c0_3] : memref<32x64xbf16, #tpu.memory_space<vmem>>, vector<32x64xbf16>
    %cst = arith.constant dense<0.000000e+00> : vector<16x64xf32>
    %5 = tpu.matmul %3, %4, %cst {dimension_numbers = #tpu.dot_dimension_numbers<[1], [0], [0], [1], [0, 0, 1, 1], [], []>} : vector<16x32xbf16>, vector<32x64xbf16>, vector<16x64xf32> -> vector<16x64xf32>
    %c0_4 = arith.constant 0 : index
    %c0_5 = arith.constant 0 : index
    %6 = vector.load %arg4[%c0_4, %c0_5] : memref<1x64xf32, #tpu.memory_space<vmem>>, vector<1x64xf32>
    %7 = vector.broadcast %6 : vector<1x64xf32> to vector<16x64xf32>
    %8 = arith.addf %5, %7 : vector<16x64xf32>
    %cst_6 = arith.constant 0.000000e+00 : f32
    %9 = vector.broadcast %cst_6 : f32 to vector<16x64xf32>
    %10 = arith.maximumf %8, %9 : vector<16x64xf32>
    %11 = arith.truncf %10 : vector<16x64xf32> to vector<16x64xbf16>
    %c0_7 = arith.constant 0 : index
    %c0_8 = arith.constant 0 : index
    %12 = vector.load %arg12[%c0_7, %c0_8] : memref<16x32xf32, #tpu.memory_space<vmem>>, vector<16x32xf32>
    %c0_9 = arith.constant 0 : index
    %c0_10 = arith.constant 0 : index
    %13 = vector.load %arg5[%c0_9, %c0_10] : memref<64x32xbf16, #tpu.memory_space<vmem>>, vector<64x32xbf16>
    %cst_11 = arith.constant dense<0.000000e+00> : vector<16x32xf32>
    %14 = tpu.matmul %11, %13, %cst_11 {dimension_numbers = #tpu.dot_dimension_numbers<[1], [0], [0], [1], [0, 0, 1, 1], [], []>} : vector<16x64xbf16>, vector<64x32xbf16>, vector<16x32xf32> -> vector<16x32xf32>
    %15 = arith.addf %12, %14 : vector<16x32xf32>
    %c0_12 = arith.constant 0 : index
    %c0_13 = arith.constant 0 : index
    %16 = vector.load %arg12[%c0_12, %c0_13] : memref<16x32xf32, #tpu.memory_space<vmem>>, vector<16x32xf32>
    tpu.vector_store %arg12[%c0_12, %c0_13], %15 {strides = array<i32>} : memref<16x32xf32, #tpu.memory_space<vmem>>, vector<16x32xf32>,
    %c0_i32_14 = arith.constant 0 : i32
    %17 = arith.cmpi eq, %arg1, %c0_i32_14 : i32
    %18 = arith.extui %17 : i1 to i32
    %c0_i32_15 = arith.constant 0 : i32
    %19 = arith.cmpi ne, %18, %c0_i32_15 : i32
    scf.if %19 {
      %20 = arith.extf %3 : vector<16x32xbf16> to vector<16x32xf32>
      %c0_16 = arith.constant 0 : index
      %c0_17 = arith.constant 0 : index
      %21 = vector.load %arg12[%c0_16, %c0_17] : memref<16x32xf32, #tpu.memory_space<vmem>>, vector<16x32xf32>
      %22 = arith.addf %20, %21 : vector<16x32xf32>
      %c0_18 = arith.constant 0 : index
      %c0_19 = arith.constant 0 : index
      %23 = vector.load %arg6[%c0_18, %c0_19] : memref<1x32xf32, #tpu.memory_space<vmem>>, vector<1x32xf32>
      %24 = vector.broadcast %23 : vector<1x32xf32> to vector<16x32xf32>
      %25 = arith.addf %22, %24 : vector<16x32xf32>
      %c0_20 = arith.constant 0 : index
      %c0_21 = arith.constant 0 : index
      %26 = vector.load %arg7[%c0_20, %c0_21] : memref<1x32xf32, #tpu.memory_space<vmem>>, vector<1x32xf32>
      %c0_22 = arith.constant 0 : index
      %c0_23 = arith.constant 0 : index
      %27 = vector.load %arg8[%c0_22, %c0_23] : memref<1x32xf32, #tpu.memory_space<vmem>>, vector<1x32xf32>
      %cst_24 = arith.constant dense<0.000000e+00> : vector<16xf32>
      %28 = vector.multi_reduction <add>, %25, %cst_24 [1] : vector<16x32xf32> to vector<16xf32>
      %29 = vector.shape_cast %28 : vector<16xf32> to vector<16x1xf32>
      %cst_25 = arith.constant 3.200000e+01 : f32
      %30 = vector.broadcast %cst_25 : f32 to vector<16x1xf32>
      %31 = arith.divf %29, %30 : vector<16x1xf32>
      %32 = vector.broadcast %31 : vector<16x1xf32> to vector<16x32xf32>
      %33 = arith.subf %25, %32 : vector<16x32xf32>
      %34 = arith.mulf %33, %33 : vector<16x32xf32>
      %cst_26 = arith.constant dense<0.000000e+00> : vector<16xf32>
      %35 = vector.multi_reduction <add>, %34, %cst_26 [1] : vector<16x32xf32> to vector<16xf32>
      %36 = vector.shape_cast %35 : vector<16xf32> to vector<16x1xf32>
      %cst_27 = arith.constant 3.200000e+01 : f32
      %37 = vector.broadcast %cst_27 : f32 to vector<16x1xf32>
      %38 = arith.divf %36, %37 : vector<16x1xf32>
      %cst_28 = arith.constant 9.99999974E-6 : f32
      %39 = vector.broadcast %cst_28 : f32 to vector<16x1xf32>
      %40 = arith.addf %38, %39 : vector<16x1xf32>
      %41 = math.rsqrt %40 : vector<16x1xf32>
      %42 = vector.broadcast %41 : vector<16x1xf32> to vector<16x32xf32>
      %43 = arith.mulf %33, %42 : vector<16x32xf32>
      %44 = vector.broadcast %26 : vector<1x32xf32> to vector<16x32xf32>
      %45 = arith.mulf %43, %44 : vector<16x32xf32>
      %46 = vector.broadcast %27 : vector<1x32xf32> to vector<16x32xf32>
      %47 = arith.addf %45, %46 : vector<16x32xf32>
      %48 = arith.truncf %47 : vector<16x32xf32> to vector<16x32xbf16>
      %c0_29 = arith.constant 0 : index
      %c0_30 = arith.constant 0 : index
      %49 = vector.load %arg11[%c0_29, %c0_30] : memref<16x32xbf16, #tpu.memory_space<vmem>>, vector<16x32xbf16>
      tpu.vector_store %arg11[%c0_29, %c0_30], %48 {strides = array<i32>} : memref<16x32xbf16, #tpu.memory_space<vmem>>, vector<16x32xbf16>,
    } else {
    }
    return
  }
  func.func @transform_0(%arg0: i32, %arg1: i32) -> (i32, i32) {
    %c0_i32 = arith.constant 0 : i32
    %c0_i32_0 = arith.constant 0 : i32
    return %arg0, %c0_i32 : i32, i32
  }
  func.func @transform_1(%arg0: i32, %arg1: i32) -> (i32, i32) {
    %c0_i32 = arith.constant 0 : i32
    %c0_i32_0 = arith.constant 0 : i32
    return %c0_i32, %arg1 : i32, i32
  }
  func.func @transform_2(%arg0: i32, %arg1: i32) -> (i32, i32) {
    %c0_i32 = arith.constant 0 : i32
    %c0_i32_0 = arith.constant 0 : i32
    return %c0_i32, %arg1 : i32, i32
  }
  func.func @transform_3(%arg0: i32, %arg1: i32) -> (i32, i32) {
    %c0_i32 = arith.constant 0 : i32
    %c0_i32_0 = arith.constant 0 : i32
    return %arg1, %c0_i32 : i32, i32
  }
  func.func @transform_4(%arg0: i32, %arg1: i32) -> (i32, i32) {
    %c0_i32 = arith.constant 0 : i32
    %c0_i32_0 = arith.constant 0 : i32
    %c0_i32_1 = arith.constant 0 : i32
    return %c0_i32, %c0_i32_0 : i32, i32
  }
  func.func @transform_5(%arg0: i32, %arg1: i32) -> (i32, i32) {
    %c0_i32 = arith.constant 0 : i32
    %c0_i32_0 = arith.constant 0 : i32
    %c0_i32_1 = arith.constant 0 : i32
    return %c0_i32, %c0_i32_0 : i32, i32
  }
  func.func @transform_6(%arg0: i32, %arg1: i32) -> (i32, i32) {
    %c0_i32 = arith.constant 0 : i32
    %c0_i32_0 = arith.constant 0 : i32
    %c0_i32_1 = arith.constant 0 : i32
    return %c0_i32, %c0_i32_0 : i32, i32
  }
  func.func @transform_7(%arg0: i32, %arg1: i32) -> (i32, i32) {
    %c0_i32 = arith.constant 0 : i32
    %c0_i32_0 = arith.constant 0 : i32
    %c0_i32_1 = arith.constant 0 : i32
    return %c0_i32, %c0_i32_0 : i32, i32
  }
  func.func @transform_8(%arg0: i32, %arg1: i32) -> (i32, i32) {
    %c0_i32 = arith.constant 0 : i32
    %c0_i32_0 = arith.constant 0 : i32
    %c0_i32_1 = arith.constant 0 : i32
    return %c0_i32, %c0_i32_0 : i32, i32
  }
  func.func @transform_9(%arg0: i32, %arg1: i32) -> (i32, i32) {
    %c0_i32 = arith.constant 0 : i32
    %c0_i32_0 = arith.constant 0 : i32
    return %arg0, %c0_i32 : i32, i32
  }
}

module attributes {stable_mosaic.version = 11 : i64} {
  func.func @_ffn_block_kernel(%arg0: i32, %arg1: i32, %arg2: memref<16x32xbf16, #tpu.memory_space<vmem>>, %arg3: memref<32x64xbf16, #tpu.memory_space<vmem>>, %arg4: memref<1x64xf32, #tpu.memory_space<vmem>>, %arg5: memref<64x32xbf16, #tpu.memory_space<vmem>>, %arg6: memref<1x32xf32, #tpu.memory_space<vmem>>, %arg7: memref<1x32xf32, #tpu.memory_space<vmem>>, %arg8: memref<1x32xf32, #tpu.memory_space<vmem>>, %arg9: memref<1x32xf32, #tpu.memory_space<vmem>>, %arg10: memref<1x32xf32, #tpu.memory_space<vmem>>, %arg11: memref<16x32xbf16, #tpu.memory_space<vmem>>, %arg12: memref<16x32xf32, #tpu.memory_space<vmem>>) attributes {dimension_semantics = [#tpu.dimension_semantics<parallel>, #tpu.dimension_semantics<arbitrary>], iteration_bounds = array<i64: 1, 1>, scalar_prefetch = 0 : i64, scratch_operands = 1 : i64, tpu.core_type = #tpu.core_type<tc>, window_params = [{transform_indices = @transform_0, window_bounds = array<i64: 16, 32>}, {transform_indices = @transform_1, window_bounds = array<i64: 32, 64>}, {transform_indices = @transform_2, window_bounds = array<i64: 1, 64>}, {transform_indices = @transform_3, window_bounds = array<i64: 64, 32>}, {pipeline_mode = #tpu.pipeline_mode<synchronous>, transform_indices = @transform_4, window_bounds = array<i64: 1, 32>}, {pipeline_mode = #tpu.pipeline_mode<synchronous>, transform_indices = @transform_5, window_bounds = array<i64: 1, 32>}, {pipeline_mode = #tpu.pipeline_mode<synchronous>, transform_indices = @transform_6, window_bounds = array<i64: 1, 32>}, {pipeline_mode = #tpu.pipeline_mode<synchronous>, transform_indices = @transform_7, window_bounds = array<i64: 1, 32>}, {pipeline_mode = #tpu.pipeline_mode<synchronous>, transform_indices = @transform_8, window_bounds = array<i64: 1, 32>}, {transform_indices = @transform_9, window_bounds = array<i64: 16, 32>}]} {
    %c0_i32 = arith.constant 0 : i32
    %0 = arith.cmpi eq, %arg1, %c0_i32 : i32
    %1 = arith.extui %0 : i1 to i32
    %c0_i32_0 = arith.constant 0 : i32
    %2 = arith.cmpi ne, %1, %c0_i32_0 : i32
    scf.if %2 {
      %cst_16 = arith.constant 0.000000e+00 : f32
      %20 = vector.broadcast %cst_16 : f32 to vector<16x32xf32>
      %c0_17 = arith.constant 0 : index
      %c0_18 = arith.constant 0 : index
      %21 = vector.load %arg12[%c0_17, %c0_18] : memref<16x32xf32, #tpu.memory_space<vmem>>, vector<16x32xf32>
      tpu.vector_store %arg12[%c0_17, %c0_18], %20 {strides = array<i32>} : memref<16x32xf32, #tpu.memory_space<vmem>>, vector<16x32xf32>,
    } else {
    }
    %c0 = arith.constant 0 : index
    %c0_1 = arith.constant 0 : index
    %3 = vector.load %arg2[%c0, %c0_1] : memref<16x32xbf16, #tpu.memory_space<vmem>>, vector<16x32xbf16>
    %c0_2 = arith.constant 0 : index
    %c0_3 = arith.constant 0 : index
    %4 = vector.load %arg3[%c0_2, %c0_3] : memref<32x64xbf16, #tpu.memory_space<vmem>>, vector<32x64xbf16>
    %cst = arith.constant dense<0.000000e+00> : vector<16x64xf32>
    %5 = tpu.matmul %3, %4, %cst {dimension_numbers = #tpu.dot_dimension_numbers<[1], [0], [0], [1], [0, 0, 1, 1], [], []>} : vector<16x32xbf16>, vector<32x64xbf16>, vector<16x64xf32> -> vector<16x64xf32>
    %c0_4 = arith.constant 0 : index
    %c0_5 = arith.constant 0 : index
    %6 = vector.load %arg4[%c0_4, %c0_5] : memref<1x64xf32, #tpu.memory_space<vmem>>, vector<1x64xf32>
    %7 = vector.broadcast %6 : vector<1x64xf32> to vector<16x64xf32>
    %8 = arith.addf %5, %7 : vector<16x64xf32>
    %cst_6 = arith.constant 0.000000e+00 : f32
    %9 = vector.broadcast %cst_6 : f32 to vector<16x64xf32>
    %10 = arith.maximumf %8, %9 : vector<16x64xf32>
    %11 = arith.truncf %10 : vector<16x64xf32> to vector<16x64xbf16>
    %c0_7 = arith.constant 0 : index
    %c0_8 = arith.constant 0 : index
    %12 = vector.load %arg12[%c0_7, %c0_8] : memref<16x32xf32, #tpu.memory_space<vmem>>, vector<16x32xf32>
    %c0_9 = arith.constant 0 : index
    %c0_10 = arith.constant 0 : index
    %13 = vector.load %arg5[%c0_9, %c0_10] : memref<64x32xbf16, #tpu.memory_space<vmem>>, vector<64x32xbf16>
    %cst_11 = arith.constant dense<0.000000e+00> : vector<16x32xf32>
    %14 = tpu.matmul %11, %13, %cst_11 {dimension_numbers = #tpu.dot_dimension_numbers<[1], [0], [0], [1], [0, 0, 1, 1], [], []>} : vector<16x64xbf16>, vector<64x32xbf16>, vector<16x32xf32> -> vector<16x32xf32>
    %15 = arith.addf %12, %14 : vector<16x32xf32>
    %c0_12 = arith.constant 0 : index
    %c0_13 = arith.constant 0 : index
    %16 = vector.load %arg12[%c0_12, %c0_13] : memref<16x32xf32, #tpu.memory_space<vmem>>, vector<16x32xf32>
    tpu.vector_store %arg12[%c0_12, %c0_13], %15 {strides = array<i32>} : memref<16x32xf32, #tpu.memory_space<vmem>>, vector<16x32xf32>,
    %c0_i32_14 = arith.constant 0 : i32
    %17 = arith.cmpi eq, %arg1, %c0_i32_14 : i32
    %18 = arith.extui %17 : i1 to i32
    %c0_i32_15 = arith.constant 0 : i32
    %19 = arith.cmpi ne, %18, %c0_i32_15 : i32
    scf.if %19 {
      %20 = arith.extf %3 : vector<16x32xbf16> to vector<16x32xf32>
      %c0_16 = arith.constant 0 : index
      %c0_17 = arith.constant 0 : index
      %21 = vector.load %arg12[%c0_16, %c0_17] : memref<16x32xf32, #tpu.memory_space<vmem>>, vector<16x32xf32>
      %22 = arith.addf %20, %21 : vector<16x32xf32>
      %c0_18 = arith.constant 0 : index
      %c0_19 = arith.constant 0 : index
      %23 = vector.load %arg6[%c0_18, %c0_19] : memref<1x32xf32, #tpu.memory_space<vmem>>, vector<1x32xf32>
      %24 = vector.broadcast %23 : vector<1x32xf32> to vector<16x32xf32>
      %25 = arith.addf %22, %24 : vector<16x32xf32>
      %c0_20 = arith.constant 0 : index
      %c0_21 = arith.constant 0 : index
      %26 = vector.load %arg7[%c0_20, %c0_21] : memref<1x32xf32, #tpu.memory_space<vmem>>, vector<1x32xf32>
      %c0_22 = arith.constant 0 : index
      %c0_23 = arith.constant 0 : index
      %27 = vector.load %arg8[%c0_22, %c0_23] : memref<1x32xf32, #tpu.memory_space<vmem>>, vector<1x32xf32>
      %cst_24 = arith.constant dense<0.000000e+00> : vector<16xf32>
      %28 = vector.multi_reduction <add>, %25, %cst_24 [1] : vector<16x32xf32> to vector<16xf32>
      %29 = vector.shape_cast %28 : vector<16xf32> to vector<16x1xf32>
      %cst_25 = arith.constant 3.200000e+01 : f32
      %30 = vector.broadcast %cst_25 : f32 to vector<16x1xf32>
      %31 = arith.divf %29, %30 : vector<16x1xf32>
      %32 = vector.broadcast %31 : vector<16x1xf32> to vector<16x32xf32>
      %33 = arith.subf %25, %32 : vector<16x32xf32>
      %34 = arith.mulf %33, %33 : vector<16x32xf32>
      %cst_26 = arith.constant dense<0.000000e+00> : vector<16xf32>
      %35 = vector.multi_reduction <add>, %34, %cst_26 [1] : vector<16x32xf32> to vector<16xf32>
      %36 = vector.shape_cast %35 : vector<16xf32> to vector<16x1xf32>
      %cst_27 = arith.constant 3.200000e+01 : f32
      %37 = vector.broadcast %cst_27 : f32 to vector<16x1xf32>
      %38 = arith.divf %36, %37 : vector<16x1xf32>
      %cst_28 = arith.constant 9.99999974E-6 : f32
      %39 = vector.broadcast %cst_28 : f32 to vector<16x1xf32>
      %40 = arith.addf %38, %39 : vector<16x1xf32>
      %41 = math.rsqrt %40 : vector<16x1xf32>
      %42 = vector.broadcast %41 : vector<16x1xf32> to vector<16x32xf32>
      %43 = arith.mulf %33, %42 : vector<16x32xf32>
      %44 = vector.broadcast %26 : vector<1x32xf32> to vector<16x32xf32>
      %45 = arith.mulf %43, %44 : vector<16x32xf32>
      %46 = vector.broadcast %27 : vector<1x32xf32> to vector<16x32xf32>
      %47 = arith.addf %45, %46 : vector<16x32xf32>
      %c0_29 = arith.constant 0 : index
      %c0_30 = arith.constant 0 : index
      %48 = vector.load %arg9[%c0_29, %c0_30] : memref<1x32xf32, #tpu.memory_space<vmem>>, vector<1x32xf32>
      %c0_31 = arith.constant 0 : index
      %c0_32 = arith.constant 0 : index
      %49 = vector.load %arg10[%c0_31, %c0_32] : memref<1x32xf32, #tpu.memory_space<vmem>>, vector<1x32xf32>
      %cst_33 = arith.constant dense<0.000000e+00> : vector<16xf32>
      %50 = vector.multi_reduction <add>, %47, %cst_33 [1] : vector<16x32xf32> to vector<16xf32>
      %51 = vector.shape_cast %50 : vector<16xf32> to vector<16x1xf32>
      %cst_34 = arith.constant 3.200000e+01 : f32
      %52 = vector.broadcast %cst_34 : f32 to vector<16x1xf32>
      %53 = arith.divf %51, %52 : vector<16x1xf32>
      %54 = vector.broadcast %53 : vector<16x1xf32> to vector<16x32xf32>
      %55 = arith.subf %47, %54 : vector<16x32xf32>
      %56 = arith.mulf %55, %55 : vector<16x32xf32>
      %cst_35 = arith.constant dense<0.000000e+00> : vector<16xf32>
      %57 = vector.multi_reduction <add>, %56, %cst_35 [1] : vector<16x32xf32> to vector<16xf32>
      %58 = vector.shape_cast %57 : vector<16xf32> to vector<16x1xf32>
      %cst_36 = arith.constant 3.200000e+01 : f32
      %59 = vector.broadcast %cst_36 : f32 to vector<16x1xf32>
      %60 = arith.divf %58, %59 : vector<16x1xf32>
      %cst_37 = arith.constant 9.99999974E-6 : f32
      %61 = vector.broadcast %cst_37 : f32 to vector<16x1xf32>
      %62 = arith.addf %60, %61 : vector<16x1xf32>
      %63 = math.rsqrt %62 : vector<16x1xf32>
      %64 = vector.broadcast %63 : vector<16x1xf32> to vector<16x32xf32>
      %65 = arith.mulf %55, %64 : vector<16x32xf32>
      %66 = vector.broadcast %48 : vector<1x32xf32> to vector<16x32xf32>
      %67 = arith.mulf %65, %66 : vector<16x32xf32>
      %68 = vector.broadcast %49 : vector<1x32xf32> to vector<16x32xf32>
      %69 = arith.addf %67, %68 : vector<16x32xf32>
      %70 = arith.truncf %69 : vector<16x32xf32> to vector<16x32xbf16>
      %c0_38 = arith.constant 0 : index
      %c0_39 = arith.constant 0 : index
      %71 = vector.load %arg11[%c0_38, %c0_39] : memref<16x32xbf16, #tpu.memory_space<vmem>>, vector<16x32xbf16>
      tpu.vector_store %arg11[%c0_38, %c0_39], %70 {strides = array<i32>} : memref<16x32xbf16, #tpu.memory_space<vmem>>, vector<16x32xbf16>,
    } else {
    }
    return
  }
  func.func @transform_0(%arg0: i32, %arg1: i32) -> (i32, i32) {
    %c0_i32 = arith.constant 0 : i32
    %c0_i32_0 = arith.constant 0 : i32
    return %arg0, %c0_i32 : i32, i32
  }
  func.func @transform_1(%arg0: i32, %arg1: i32) -> (i32, i32) {
    %c0_i32 = arith.constant 0 : i32
    %c0_i32_0 = arith.constant 0 : i32
    return %c0_i32, %arg1 : i32, i32
  }
  func.func @transform_2(%arg0: i32, %arg1: i32) -> (i32, i32) {
    %c0_i32 = arith.constant 0 : i32
    %c0_i32_0 = arith.constant 0 : i32
    return %c0_i32, %arg1 : i32, i32
  }
  func.func @transform_3(%arg0: i32, %arg1: i32) -> (i32, i32) {
    %c0_i32 = arith.constant 0 : i32
    %c0_i32_0 = arith.constant 0 : i32
    return %arg1, %c0_i32 : i32, i32
  }
  func.func @transform_4(%arg0: i32, %arg1: i32) -> (i32, i32) {
    %c0_i32 = arith.constant 0 : i32
    %c0_i32_0 = arith.constant 0 : i32
    %c0_i32_1 = arith.constant 0 : i32
    return %c0_i32, %c0_i32_0 : i32, i32
  }
  func.func @transform_5(%arg0: i32, %arg1: i32) -> (i32, i32) {
    %c0_i32 = arith.constant 0 : i32
    %c0_i32_0 = arith.constant 0 : i32
    %c0_i32_1 = arith.constant 0 : i32
    return %c0_i32, %c0_i32_0 : i32, i32
  }
  func.func @transform_6(%arg0: i32, %arg1: i32) -> (i32, i32) {
    %c0_i32 = arith.constant 0 : i32
    %c0_i32_0 = arith.constant 0 : i32
    %c0_i32_1 = arith.constant 0 : i32
    return %c0_i32, %c0_i32_0 : i32, i32
  }
  func.func @transform_7(%arg0: i32, %arg1: i32) -> (i32, i32) {
    %c0_i32 = arith.constant 0 : i32
    %c0_i32_0 = arith.constant 0 : i32
    %c0_i32_1 = arith.constant 0 : i32
    return %c0_i32, %c0_i32_0 : i32, i32
  }
  func.func @transform_8(%arg0: i32, %arg1: i32) -> (i32, i32) {
    %c0_i32 = arith.constant 0 : i32
    %c0_i32_0 = arith.constant 0 : i32
    %c0_i32_1 = arith.constant 0 : i32
    return %c0_i32, %c0_i32_0 : i32, i32
  }
  func.func @transform_9(%arg0: i32, %arg1: i32) -> (i32, i32) {
    %c0_i32 = arith.constant 0 : i32
    %c0_i32_0 = arith.constant 0 : i32
    return %arg0, %c0_i32 : i32, i32
  }
}

module attributes {stable_mosaic.version = 11 : i64} {
  func.func @_mha_block_kernel(%arg0: i32, %arg1: i32, %arg2: memref<1x8x32xbf16, #tpu.memory_space<vmem>>, %arg3: memref<1x8x32xbf16, #tpu.memory_space<vmem>>, %arg4: memref<32x32xbf16, #tpu.memory_space<vmem>>, %arg5: memref<1x32xf32, #tpu.memory_space<vmem>>, %arg6: memref<32x64xbf16, #tpu.memory_space<vmem>>, %arg7: memref<1x64xf32, #tpu.memory_space<vmem>>, %arg8: memref<32x32xbf16, #tpu.memory_space<vmem>>, %arg9: memref<1x32xf32, #tpu.memory_space<vmem>>, %arg10: memref<1x32xf32, #tpu.memory_space<vmem>>, %arg11: memref<1x32xf32, #tpu.memory_space<vmem>>, %arg12: memref<1x8x32xbf16, #tpu.memory_space<vmem>>, %arg13: memref<8x64xbf16, #tpu.memory_space<vmem>>) attributes {dimension_semantics = [#tpu.dimension_semantics<parallel>, #tpu.dimension_semantics<arbitrary>], iteration_bounds = array<i64: 2, 1>, scalar_prefetch = 0 : i64, scratch_operands = 1 : i64, tpu.core_type = #tpu.core_type<tc>, window_params = [{transform_indices = @transform_0, window_bounds = array<i64: 1, 8, 32>}, {transform_indices = @transform_1, window_bounds = array<i64: 1, 8, 32>}, {pipeline_mode = #tpu.pipeline_mode<synchronous>, transform_indices = @transform_2, window_bounds = array<i64: 32, 32>}, {pipeline_mode = #tpu.pipeline_mode<synchronous>, transform_indices = @transform_3, window_bounds = array<i64: 1, 32>}, {pipeline_mode = #tpu.pipeline_mode<synchronous>, transform_indices = @transform_4, window_bounds = array<i64: 32, 64>}, {pipeline_mode = #tpu.pipeline_mode<synchronous>, transform_indices = @transform_5, window_bounds = array<i64: 1, 64>}, {pipeline_mode = #tpu.pipeline_mode<synchronous>, transform_indices = @transform_6, window_bounds = array<i64: 32, 32>}, {pipeline_mode = #tpu.pipeline_mode<synchronous>, transform_indices = @transform_7, window_bounds = array<i64: 1, 32>}, {pipeline_mode = #tpu.pipeline_mode<synchronous>, transform_indices = @transform_8, window_bounds = array<i64: 1, 32>}, {pipeline_mode = #tpu.pipeline_mode<synchronous>, transform_indices = @transform_9, window_bounds = array<i64: 1, 32>}, {transform_indices = @transform_10, window_bounds = array<i64: 1, 8, 32>}]} {
    %c0 = arith.constant 0 : index
    %c0_0 = arith.constant 0 : index
    %c0_1 = arith.constant 0 : index
    %0 = vector.load %arg2[%c0, %c0_0, %c0_1] : memref<1x8x32xbf16, #tpu.memory_space<vmem>>, vector<1x8x32xbf16>
    %1 = vector.shape_cast %0 : vector<1x8x32xbf16> to vector<8x32xbf16>
    %c0_i32 = arith.constant 0 : i32
    %2 = arith.cmpi eq, %arg1, %c0_i32 : i32
    %3 = arith.extui %2 : i1 to i32
    %c0_i32_2 = arith.constant 0 : i32
    %4 = arith.cmpi ne, %3, %c0_i32_2 : i32
    scf.if %4 {
      %c0_43 = arith.constant 0 : index
      %c0_44 = arith.constant 0 : index
      %c0_45 = arith.constant 0 : index
      %115 = vector.load %arg3[%c0_43, %c0_44, %c0_45] : memref<1x8x32xbf16, #tpu.memory_space<vmem>>, vector<1x8x32xbf16>
      %116 = vector.shape_cast %115 : vector<1x8x32xbf16> to vector<8x32xbf16>
      %c0_46 = arith.constant 0 : index
      %c0_47 = arith.constant 0 : index
      %117 = vector.load %arg6[%c0_46, %c0_47] : memref<32x64xbf16, #tpu.memory_space<vmem>>, vector<32x64xbf16>
      %cst_48 = arith.constant dense<0.000000e+00> : vector<8x64xf32>
      %118 = tpu.matmul %116, %117, %cst_48 {dimension_numbers = #tpu.dot_dimension_numbers<[1], [0], [0], [1], [0, 0, 1, 1], [], []>} : vector<8x32xbf16>, vector<32x64xbf16>, vector<8x64xf32> -> vector<8x64xf32>
      %c0_49 = arith.constant 0 : index
      %c0_50 = arith.constant 0 : index
      %119 = vector.load %arg7[%c0_49, %c0_50] : memref<1x64xf32, #tpu.memory_space<vmem>>, vector<1x64xf32>
      %120 = vector.broadcast %119 : vector<1x64xf32> to vector<8x64xf32>
      %121 = arith.addf %118, %120 : vector<8x64xf32>
      %122 = arith.truncf %121 : vector<8x64xf32> to vector<8x64xbf16>
      %c0_51 = arith.constant 0 : index
      %c0_52 = arith.constant 0 : index
      %123 = vector.load %arg13[%c0_51, %c0_52] : memref<8x64xbf16, #tpu.memory_space<vmem>>, vector<8x64xbf16>
      tpu.vector_store %arg13[%c0_51, %c0_52], %122 {strides = array<i32>} : memref<8x64xbf16, #tpu.memory_space<vmem>>, vector<8x64xbf16>,
    } else {
    }
    %c0_3 = arith.constant 0 : index
    %c0_4 = arith.constant 0 : index
    %5 = vector.load %arg4[%c0_3, %c0_4] : memref<32x32xbf16, #tpu.memory_space<vmem>>, vector<32x32xbf16>
    %cst = arith.constant dense<0.000000e+00> : vector<8x32xf32>
    %6 = tpu.matmul %1, %5, %cst {dimension_numbers = #tpu.dot_dimension_numbers<[1], [0], [0], [1], [0, 0, 1, 1], [], []>} : vector<8x32xbf16>, vector<32x32xbf16>, vector<8x32xf32> -> vector<8x32xf32>
    %c0_5 = arith.constant 0 : index
    %c0_6 = arith.constant 0 : index
    %7 = vector.load %arg5[%c0_5, %c0_6] : memref<1x32xf32, #tpu.memory_space<vmem>>, vector<1x32xf32>
    %8 = vector.broadcast %7 : vector<1x32xf32> to vector<8x32xf32>
    %9 = arith.addf %6, %8 : vector<8x32xf32>
    %cst_7 = arith.constant 0.353553385 : f32
    %10 = vector.broadcast %cst_7 : f32 to vector<8x32xf32>
    %11 = arith.mulf %9, %10 : vector<8x32xf32>
    %12 = arith.truncf %11 : vector<8x32xf32> to vector<8x32xbf16>
    %c0_8 = arith.constant 0 : index
    %c0_9 = arith.constant 0 : index
    %13 = vector.load %arg13[%c0_8, %c0_9] : memref<8x64xbf16, #tpu.memory_space<vmem>>, vector<8x64xbf16>
    %14 = vector.extract_strided_slice %13 {offsets = [0, 0], sizes = [8, 32], strides = [1, 1]} : vector<8x64xbf16> to vector<8x32xbf16>
    %15 = vector.extract_strided_slice %13 {offsets = [0, 32], sizes = [8, 32], strides = [1, 1]} : vector<8x64xbf16> to vector<8x32xbf16>
    %16 = vector.extract_strided_slice %12 {offsets = [0, 0], sizes = [8, 8], strides = [1, 1]} : vector<8x32xbf16> to vector<8x8xbf16>
    %17 = vector.extract_strided_slice %14 {offsets = [0, 0], sizes = [8, 8], strides = [1, 1]} : vector<8x32xbf16> to vector<8x8xbf16>
    %cst_10 = arith.constant dense<0.000000e+00> : vector<8x8xf32>
    %18 = tpu.matmul %16, %17, %cst_10 {dimension_numbers = #tpu.dot_dimension_numbers<[1], [1], [0], [0], [0, 0, 1, 0], [], []>} : vector<8x8xbf16>, vector<8x8xbf16>, vector<8x8xf32> -> vector<8x8xf32>
    %cst_11 = arith.constant dense<0xFF800000> : vector<8xf32>
    %19 = vector.multi_reduction <maximumf>, %18, %cst_11 [1] : vector<8x8xf32> to vector<8xf32>
    %20 = vector.shape_cast %19 : vector<8xf32> to vector<8x1xf32>
    %21 = vector.broadcast %20 : vector<8x1xf32> to vector<8x8xf32>
    %22 = arith.subf %18, %21 : vector<8x8xf32>
    %23 = math.exp %22 : vector<8x8xf32>
    %cst_12 = arith.constant dense<0.000000e+00> : vector<8xf32>
    %24 = vector.multi_reduction <add>, %23, %cst_12 [1] : vector<8x8xf32> to vector<8xf32>
    %25 = vector.shape_cast %24 : vector<8xf32> to vector<8x1xf32>
    %26 = tpu.reciprocal %25 {approx = true} : vector<8x1xf32> -> vector<8x1xf32>
    %27 = vector.broadcast %26 : vector<8x1xf32> to vector<8x8xf32>
    %28 = arith.mulf %23, %27 : vector<8x8xf32>
    %29 = arith.truncf %28 : vector<8x8xf32> to vector<8x8xbf16>
    %30 = vector.extract_strided_slice %15 {offsets = [0, 0], sizes = [8, 8], strides = [1, 1]} : vector<8x32xbf16> to vector<8x8xbf16>
    %cst_13 = arith.constant dense<0.000000e+00> : vector<8x8xf32>
    %31 = tpu.matmul %29, %30, %cst_13 {dimension_numbers = #tpu.dot_dimension_numbers<[1], [0], [0], [1], [0, 0, 1, 1], [], []>} : vector<8x8xbf16>, vector<8x8xbf16>, vector<8x8xf32> -> vector<8x8xf32>
    %32 = vector.extract_strided_slice %12 {offsets = [0, 8], sizes = [8, 8], strides = [1, 1]} : vector<8x32xbf16> to vector<8x8xbf16>
    %33 = vector.extract_strided_slice %14 {offsets = [0, 8], sizes = [8, 8], strides = [1, 1]} : vector<8x32xbf16> to vector<8x8xbf16>
    %cst_14 = arith.constant dense<0.000000e+00> : vector<8x8xf32>
    %34 = tpu.matmul %32, %33, %cst_14 {dimension_numbers = #tpu.dot_dimension_numbers<[1], [1], [0], [0], [0, 0, 1, 0], [], []>} : vector<8x8xbf16>, vector<8x8xbf16>, vector<8x8xf32> -> vector<8x8xf32>
    %cst_15 = arith.constant dense<0xFF800000> : vector<8xf32>
    %35 = vector.multi_reduction <maximumf>, %34, %cst_15 [1] : vector<8x8xf32> to vector<8xf32>
    %36 = vector.shape_cast %35 : vector<8xf32> to vector<8x1xf32>
    %37 = vector.broadcast %36 : vector<8x1xf32> to vector<8x8xf32>
    %38 = arith.subf %34, %37 : vector<8x8xf32>
    %39 = math.exp %38 : vector<8x8xf32>
    %cst_16 = arith.constant dense<0.000000e+00> : vector<8xf32>
    %40 = vector.multi_reduction <add>, %39, %cst_16 [1] : vector<8x8xf32> to vector<8xf32>
    %41 = vector.shape_cast %40 : vector<8xf32> to vector<8x1xf32>
    %42 = tpu.reciprocal %41 {approx = true} : vector<8x1xf32> -> vector<8x1xf32>
    %43 = vector.broadcast %42 : vector<8x1xf32> to vector<8x8xf32>
    %44 = arith.mulf %39, %43 : vector<8x8xf32>
    %45 = arith.truncf %44 : vector<8x8xf32> to vector<8x8xbf16>
    %46 = vector.extract_strided_slice %15 {offsets = [0, 8], sizes = [8, 8], strides = [1, 1]} : vector<8x32xbf16> to vector<8x8xbf16>
    %cst_17 = arith.constant dense<0.000000e+00> : vector<8x8xf32>
    %47 = tpu.matmul %45, %46, %cst_17 {dimension_numbers = #tpu.dot_dimension_numbers<[1], [0], [0], [1], [0, 0, 1, 1], [], []>} : vector<8x8xbf16>, vector<8x8xbf16>, vector<8x8xf32> -> vector<8x8xf32>
    %48 = vector.extract_strided_slice %12 {offsets = [0, 16], sizes = [8, 8], strides = [1, 1]} : vector<8x32xbf16> to vector<8x8xbf16>
    %49 = vector.extract_strided_slice %14 {offsets = [0, 16], sizes = [8, 8], strides = [1, 1]} : vector<8x32xbf16> to vector<8x8xbf16>
    %cst_18 = arith.constant dense<0.000000e+00> : vector<8x8xf32>
    %50 = tpu.matmul %48, %49, %cst_18 {dimension_numbers = #tpu.dot_dimension_numbers<[1], [1], [0], [0], [0, 0, 1, 0], [], []>} : vector<8x8xbf16>, vector<8x8xbf16>, vector<8x8xf32> -> vector<8x8xf32>
    %cst_19 = arith.constant dense<0xFF800000> : vector<8xf32>
    %51 = vector.multi_reduction <maximumf>, %50, %cst_19 [1] : vector<8x8xf32> to vector<8xf32>
    %52 = vector.shape_cast %51 : vector<8xf32> to vector<8x1xf32>
    %53 = vector.broadcast %52 : vector<8x1xf32> to vector<8x8xf32>
    %54 = arith.subf %50, %53 : vector<8x8xf32>
    %55 = math.exp %54 : vector<8x8xf32>
    %cst_20 = arith.constant dense<0.000000e+00> : vector<8xf32>
    %56 = vector.multi_reduction <add>, %55, %cst_20 [1] : vector<8x8xf32> to vector<8xf32>
    %57 = vector.shape_cast %56 : vector<8xf32> to vector<8x1xf32>
    %58 = tpu.reciprocal %57 {approx = true} : vector<8x1xf32> -> vector<8x1xf32>
    %59 = vector.broadcast %58 : vector<8x1xf32> to vector<8x8xf32>
    %60 = arith.mulf %55, %59 : vector<8x8xf32>
    %61 = arith.truncf %60 : vector<8x8xf32> to vector<8x8xbf16>
    %62 = vector.extract_strided_slice %15 {offsets = [0, 16], sizes = [8, 8], strides = [1, 1]} : vector<8x32xbf16> to vector<8x8xbf16>
    %cst_21 = arith.constant dense<0.000000e+00> : vector<8x8xf32>
    %63 = tpu.matmul %61, %62, %cst_21 {dimension_numbers = #tpu.dot_dimension_numbers<[1], [0], [0], [1], [0, 0, 1, 1], [], []>} : vector<8x8xbf16>, vector<8x8xbf16>, vector<8x8xf32> -> vector<8x8xf32>
    %64 = vector.extract_strided_slice %12 {offsets = [0, 24], sizes = [8, 8], strides = [1, 1]} : vector<8x32xbf16> to vector<8x8xbf16>
    %65 = vector.extract_strided_slice %14 {offsets = [0, 24], sizes = [8, 8], strides = [1, 1]} : vector<8x32xbf16> to vector<8x8xbf16>
    %cst_22 = arith.constant dense<0.000000e+00> : vector<8x8xf32>
    %66 = tpu.matmul %64, %65, %cst_22 {dimension_numbers = #tpu.dot_dimension_numbers<[1], [1], [0], [0], [0, 0, 1, 0], [], []>} : vector<8x8xbf16>, vector<8x8xbf16>, vector<8x8xf32> -> vector<8x8xf32>
    %cst_23 = arith.constant dense<0xFF800000> : vector<8xf32>
    %67 = vector.multi_reduction <maximumf>, %66, %cst_23 [1] : vector<8x8xf32> to vector<8xf32>
    %68 = vector.shape_cast %67 : vector<8xf32> to vector<8x1xf32>
    %69 = vector.broadcast %68 : vector<8x1xf32> to vector<8x8xf32>
    %70 = arith.subf %66, %69 : vector<8x8xf32>
    %71 = math.exp %70 : vector<8x8xf32>
    %cst_24 = arith.constant dense<0.000000e+00> : vector<8xf32>
    %72 = vector.multi_reduction <add>, %71, %cst_24 [1] : vector<8x8xf32> to vector<8xf32>
    %73 = vector.shape_cast %72 : vector<8xf32> to vector<8x1xf32>
    %74 = tpu.reciprocal %73 {approx = true} : vector<8x1xf32> -> vector<8x1xf32>
    %75 = vector.broadcast %74 : vector<8x1xf32> to vector<8x8xf32>
    %76 = arith.mulf %71, %75 : vector<8x8xf32>
    %77 = arith.truncf %76 : vector<8x8xf32> to vector<8x8xbf16>
    %78 = vector.extract_strided_slice %15 {offsets = [0, 24], sizes = [8, 8], strides = [1, 1]} : vector<8x32xbf16> to vector<8x8xbf16>
    %cst_25 = arith.constant dense<0.000000e+00> : vector<8x8xf32>
    %79 = tpu.matmul %77, %78, %cst_25 {dimension_numbers = #tpu.dot_dimension_numbers<[1], [0], [0], [1], [0, 0, 1, 1], [], []>} : vector<8x8xbf16>, vector<8x8xbf16>, vector<8x8xf32> -> vector<8x8xf32>
    %80 = tpu.concatenate %31, %47, %63, %79 in 1 : vector<8x8xf32>, vector<8x8xf32>, vector<8x8xf32>, vector<8x8xf32> -> vector<8x32xf32>
    %81 = arith.truncf %80 : vector<8x32xf32> to vector<8x32xbf16>
    %c0_26 = arith.constant 0 : index
    %c0_27 = arith.constant 0 : index
    %82 = vector.load %arg8[%c0_26, %c0_27] : memref<32x32xbf16, #tpu.memory_space<vmem>>, vector<32x32xbf16>
    %cst_28 = arith.constant dense<0.000000e+00> : vector<8x32xf32>
    %83 = tpu.matmul %81, %82, %cst_28 {dimension_numbers = #tpu.dot_dimension_numbers<[1], [0], [0], [1], [0, 0, 1, 1], [], []>} : vector<8x32xbf16>, vector<32x32xbf16>, vector<8x32xf32> -> vector<8x32xf32>
    %c0_29 = arith.constant 0 : index
    %c0_30 = arith.constant 0 : index
    %84 = vector.load %arg9[%c0_29, %c0_30] : memref<1x32xf32, #tpu.memory_space<vmem>>, vector<1x32xf32>
    %85 = vector.broadcast %84 : vector<1x32xf32> to vector<8x32xf32>
    %86 = arith.addf %83, %85 : vector<8x32xf32>
    %87 = arith.extf %1 : vector<8x32xbf16> to vector<8x32xf32>
    %88 = arith.addf %87, %86 : vector<8x32xf32>
    %c0_31 = arith.constant 0 : index
    %c0_32 = arith.constant 0 : index
    %89 = vector.load %arg10[%c0_31, %c0_32] : memref<1x32xf32, #tpu.memory_space<vmem>>, vector<1x32xf32>
    %c0_33 = arith.constant 0 : index
    %c0_34 = arith.constant 0 : index
    %90 = vector.load %arg11[%c0_33, %c0_34] : memref<1x32xf32, #tpu.memory_space<vmem>>, vector<1x32xf32>
    %cst_35 = arith.constant dense<0.000000e+00> : vector<8xf32>
    %91 = vector.multi_reduction <add>, %88, %cst_35 [1] : vector<8x32xf32> to vector<8xf32>
    %92 = vector.shape_cast %91 : vector<8xf32> to vector<8x1xf32>
    %cst_36 = arith.constant 3.200000e+01 : f32
    %93 = vector.broadcast %cst_36 : f32 to vector<8x1xf32>
    %94 = arith.divf %92, %93 : vector<8x1xf32>
    %95 = vector.broadcast %94 : vector<8x1xf32> to vector<8x32xf32>
    %96 = arith.subf %88, %95 : vector<8x32xf32>
    %97 = arith.mulf %96, %96 : vector<8x32xf32>
    %cst_37 = arith.constant dense<0.000000e+00> : vector<8xf32>
    %98 = vector.multi_reduction <add>, %97, %cst_37 [1] : vector<8x32xf32> to vector<8xf32>
    %99 = vector.shape_cast %98 : vector<8xf32> to vector<8x1xf32>
    %cst_38 = arith.constant 3.200000e+01 : f32
    %100 = vector.broadcast %cst_38 : f32 to vector<8x1xf32>
    %101 = arith.divf %99, %100 : vector<8x1xf32>
    %cst_39 = arith.constant 9.99999974E-6 : f32
    %102 = vector.broadcast %cst_39 : f32 to vector<8x1xf32>
    %103 = arith.addf %101, %102 : vector<8x1xf32>
    %104 = math.rsqrt %103 : vector<8x1xf32>
    %105 = vector.broadcast %104 : vector<8x1xf32> to vector<8x32xf32>
    %106 = arith.mulf %96, %105 : vector<8x32xf32>
    %107 = vector.broadcast %89 : vector<1x32xf32> to vector<8x32xf32>
    %108 = arith.mulf %106, %107 : vector<8x32xf32>
    %109 = vector.broadcast %90 : vector<1x32xf32> to vector<8x32xf32>
    %110 = arith.addf %108, %109 : vector<8x32xf32>
    %111 = arith.truncf %110 : vector<8x32xf32> to vector<8x32xbf16>
    %c0_40 = arith.constant 0 : index
    %c0_41 = arith.constant 0 : index
    %c0_42 = arith.constant 0 : index
    %112 = vector.load %arg12[%c0_40, %c0_41, %c0_42] : memref<1x8x32xbf16, #tpu.memory_space<vmem>>, vector<1x8x32xbf16>
    %113 = vector.shape_cast %112 : vector<1x8x32xbf16> to vector<8x32xbf16>
    %114 = vector.shape_cast %111 : vector<8x32xbf16> to vector<1x8x32xbf16>
    tpu.vector_store %arg12[%c0_40, %c0_41, %c0_42], %114 {strides = array<i32>} : memref<1x8x32xbf16, #tpu.memory_space<vmem>>, vector<1x8x32xbf16>,
    return
  }
  func.func @transform_0(%arg0: i32, %arg1: i32) -> (i32, i32, i32) {
    %c0_i32 = arith.constant 0 : i32
    %c0_i32_0 = arith.constant 0 : i32
    return %arg0, %arg1, %c0_i32 : i32, i32, i32
  }
  func.func @transform_1(%arg0: i32, %arg1: i32) -> (i32, i32, i32) {
    %c0_i32 = arith.constant 0 : i32
    %c0_i32_0 = arith.constant 0 : i32
    %c0_i32_1 = arith.constant 0 : i32
    return %arg0, %c0_i32, %c0_i32_0 : i32, i32, i32
  }
  func.func @transform_2(%arg0: i32, %arg1: i32) -> (i32, i32) {
    %c0_i32 = arith.constant 0 : i32
    %c0_i32_0 = arith.constant 0 : i32
    %c0_i32_1 = arith.constant 0 : i32
    return %c0_i32, %c0_i32_0 : i32, i32
  }
  func.func @transform_3(%arg0: i32, %arg1: i32) -> (i32, i32) {
    %c0_i32 = arith.constant 0 : i32
    %c0_i32_0 = arith.constant 0 : i32
    %c0_i32_1 = arith.constant 0 : i32
    return %c0_i32, %c0_i32_0 : i32, i32
  }
  func.func @transform_4(%arg0: i32, %arg1: i32) -> (i32, i32) {
    %c0_i32 = arith.constant 0 : i32
    %c0_i32_0 = arith.constant 0 : i32
    %c0_i32_1 = arith.constant 0 : i32
    return %c0_i32, %c0_i32_0 : i32, i32
  }
  func.func @transform_5(%arg0: i32, %arg1: i32) -> (i32, i32) {
    %c0_i32 = arith.constant 0 : i32
    %c0_i32_0 = arith.constant 0 : i32
    %c0_i32_1 = arith.constant 0 : i32
    return %c0_i32, %c0_i32_0 : i32, i32
  }
  func.func @transform_6(%arg0: i32, %arg1: i32) -> (i32, i32) {
    %c0_i32 = arith.constant 0 : i32
    %c0_i32_0 = arith.constant 0 : i32
    %c0_i32_1 = arith.constant 0 : i32
    return %c0_i32, %c0_i32_0 : i32, i32
  }
  func.func @transform_7(%arg0: i32, %arg1: i32) -> (i32, i32) {
    %c0_i32 = arith.constant 0 : i32
    %c0_i32_0 = arith.constant 0 : i32
    %c0_i32_1 = arith.constant 0 : i32
    return %c0_i32, %c0_i32_0 : i32, i32
  }
  func.func @transform_8(%arg0: i32, %arg1: i32) -> (i32, i32) {
    %c0_i32 = arith.constant 0 : i32
    %c0_i32_0 = arith.constant 0 : i32
    %c0_i32_1 = arith.constant 0 : i32
    return %c0_i32, %c0_i32_0 : i32, i32
  }
  func.func @transform_9(%arg0: i32, %arg1: i32) -> (i32, i32) {
    %c0_i32 = arith.constant 0 : i32
    %c0_i32_0 = arith.constant 0 : i32
    %c0_i32_1 = arith.constant 0 : i32
    return %c0_i32, %c0_i32_0 : i32, i32
  }
  func.func @transform_10(%arg0: i32, %arg1: i32) -> (i32, i32, i32) {
    %c0_i32 = arith.constant 0 : i32
    %c0_i32_0 = arith.constant 0 : i32
    return %arg0, %arg1, %c0_i32 : i32, i32, i32
  }
}

module attributes {stable_mosaic.version = 11 : i64} {
  func.func @_mha_block_kernel(%arg0: i32, %arg1: i32, %arg2: memref<1x8x32xbf16, #tpu.memory_space<vmem>>, %arg3: memref<1x8x32xbf16, #tpu.memory_space<vmem>>, %arg4: memref<32x32xbf16, #tpu.memory_space<vmem>>, %arg5: memref<1x32xf32, #tpu.memory_space<vmem>>, %arg6: memref<32x64xbf16, #tpu.memory_space<vmem>>, %arg7: memref<1x64xf32, #tpu.memory_space<vmem>>, %arg8: memref<32x32xbf16, #tpu.memory_space<vmem>>, %arg9: memref<1x32xf32, #tpu.memory_space<vmem>>, %arg10: memref<1x32xf32, #tpu.memory_space<vmem>>, %arg11: memref<1x32xf32, #tpu.memory_space<vmem>>, %arg12: memref<1x8x32xbf16, #tpu.memory_space<vmem>>, %arg13: memref<8x64xbf16, #tpu.memory_space<vmem>>) attributes {dimension_semantics = [#tpu.dimension_semantics<parallel>, #tpu.dimension_semantics<arbitrary>], iteration_bounds = array<i64: 2, 1>, scalar_prefetch = 0 : i64, scratch_operands = 1 : i64, tpu.core_type = #tpu.core_type<tc>, window_params = [{transform_indices = @transform_0, window_bounds = array<i64: 1, 8, 32>}, {transform_indices = @transform_1, window_bounds = array<i64: 1, 8, 32>}, {pipeline_mode = #tpu.pipeline_mode<synchronous>, transform_indices = @transform_2, window_bounds = array<i64: 32, 32>}, {pipeline_mode = #tpu.pipeline_mode<synchronous>, transform_indices = @transform_3, window_bounds = array<i64: 1, 32>}, {pipeline_mode = #tpu.pipeline_mode<synchronous>, transform_indices = @transform_4, window_bounds = array<i64: 32, 64>}, {pipeline_mode = #tpu.pipeline_mode<synchronous>, transform_indices = @transform_5, window_bounds = array<i64: 1, 64>}, {pipeline_mode = #tpu.pipeline_mode<synchronous>, transform_indices = @transform_6, window_bounds = array<i64: 32, 32>}, {pipeline_mode = #tpu.pipeline_mode<synchronous>, transform_indices = @transform_7, window_bounds = array<i64: 1, 32>}, {pipeline_mode = #tpu.pipeline_mode<synchronous>, transform_indices = @transform_8, window_bounds = array<i64: 1, 32>}, {pipeline_mode = #tpu.pipeline_mode<synchronous>, transform_indices = @transform_9, window_bounds = array<i64: 1, 32>}, {transform_indices = @transform_10, window_bounds = array<i64: 1, 8, 32>}]} {
    %c0 = arith.constant 0 : index
    %c0_0 = arith.constant 0 : index
    %c0_1 = arith.constant 0 : index
    %0 = vector.load %arg2[%c0, %c0_0, %c0_1] : memref<1x8x32xbf16, #tpu.memory_space<vmem>>, vector<1x8x32xbf16>
    %1 = vector.shape_cast %0 : vector<1x8x32xbf16> to vector<8x32xbf16>
    %c0_i32 = arith.constant 0 : i32
    %2 = arith.cmpi eq, %arg1, %c0_i32 : i32
    %3 = arith.extui %2 : i1 to i32
    %c0_i32_2 = arith.constant 0 : i32
    %4 = arith.cmpi ne, %3, %c0_i32_2 : i32
    scf.if %4 {
      %c0_43 = arith.constant 0 : index
      %c0_44 = arith.constant 0 : index
      %c0_45 = arith.constant 0 : index
      %115 = vector.load %arg3[%c0_43, %c0_44, %c0_45] : memref<1x8x32xbf16, #tpu.memory_space<vmem>>, vector<1x8x32xbf16>
      %116 = vector.shape_cast %115 : vector<1x8x32xbf16> to vector<8x32xbf16>
      %c0_46 = arith.constant 0 : index
      %c0_47 = arith.constant 0 : index
      %117 = vector.load %arg6[%c0_46, %c0_47] : memref<32x64xbf16, #tpu.memory_space<vmem>>, vector<32x64xbf16>
      %cst_48 = arith.constant dense<0.000000e+00> : vector<8x64xf32>
      %118 = tpu.matmul %116, %117, %cst_48 {dimension_numbers = #tpu.dot_dimension_numbers<[1], [0], [0], [1], [0, 0, 1, 1], [], []>} : vector<8x32xbf16>, vector<32x64xbf16>, vector<8x64xf32> -> vector<8x64xf32>
      %c0_49 = arith.constant 0 : index
      %c0_50 = arith.constant 0 : index
      %119 = vector.load %arg7[%c0_49, %c0_50] : memref<1x64xf32, #tpu.memory_space<vmem>>, vector<1x64xf32>
      %120 = vector.broadcast %119 : vector<1x64xf32> to vector<8x64xf32>
      %121 = arith.addf %118, %120 : vector<8x64xf32>
      %122 = arith.truncf %121 : vector<8x64xf32> to vector<8x64xbf16>
      %c0_51 = arith.constant 0 : index
      %c0_52 = arith.constant 0 : index
      %123 = vector.load %arg13[%c0_51, %c0_52] : memref<8x64xbf16, #tpu.memory_space<vmem>>, vector<8x64xbf16>
      tpu.vector_store %arg13[%c0_51, %c0_52], %122 {strides = array<i32>} : memref<8x64xbf16, #tpu.memory_space<vmem>>, vector<8x64xbf16>,
    } else {
    }
    %c0_3 = arith.constant 0 : index
    %c0_4 = arith.constant 0 : index
    %5 = vector.load %arg4[%c0_3, %c0_4] : memref<32x32xbf16, #tpu.memory_space<vmem>>, vector<32x32xbf16>
    %cst = arith.constant dense<0.000000e+00> : vector<8x32xf32>
    %6 = tpu.matmul %1, %5, %cst {dimension_numbers = #tpu.dot_dimension_numbers<[1], [0], [0], [1], [0, 0, 1, 1], [], []>} : vector<8x32xbf16>, vector<32x32xbf16>, vector<8x32xf32> -> vector<8x32xf32>
    %c0_5 = arith.constant 0 : index
    %c0_6 = arith.constant 0 : index
    %7 = vector.load %arg5[%c0_5, %c0_6] : memref<1x32xf32, #tpu.memory_space<vmem>>, vector<1x32xf32>
    %8 = vector.broadcast %7 : vector<1x32xf32> to vector<8x32xf32>
    %9 = arith.addf %6, %8 : vector<8x32xf32>
    %cst_7 = arith.constant 0.353553385 : f32
    %10 = vector.broadcast %cst_7 : f32 to vector<8x32xf32>
    %11 = arith.mulf %9, %10 : vector<8x32xf32>
    %12 = arith.truncf %11 : vector<8x32xf32> to vector<8x32xbf16>
    %c0_8 = arith.constant 0 : index
    %c0_9 = arith.constant 0 : index
    %13 = vector.load %arg13[%c0_8, %c0_9] : memref<8x64xbf16, #tpu.memory_space<vmem>>, vector<8x64xbf16>
    %14 = vector.extract_strided_slice %13 {offsets = [0, 0], sizes = [8, 32], strides = [1, 1]} : vector<8x64xbf16> to vector<8x32xbf16>
    %15 = vector.extract_strided_slice %13 {offsets = [0, 32], sizes = [8, 32], strides = [1, 1]} : vector<8x64xbf16> to vector<8x32xbf16>
    %16 = vector.extract_strided_slice %12 {offsets = [0, 0], sizes = [8, 8], strides = [1, 1]} : vector<8x32xbf16> to vector<8x8xbf16>
    %17 = vector.extract_strided_slice %14 {offsets = [0, 0], sizes = [8, 8], strides = [1, 1]} : vector<8x32xbf16> to vector<8x8xbf16>
    %cst_10 = arith.constant dense<0.000000e+00> : vector<8x8xf32>
    %18 = tpu.matmul %16, %17, %cst_10 {dimension_numbers = #tpu.dot_dimension_numbers<[1], [1], [0], [0], [0, 0, 1, 0], [], []>} : vector<8x8xbf16>, vector<8x8xbf16>, vector<8x8xf32> -> vector<8x8xf32>
    %cst_11 = arith.constant dense<0xFF800000> : vector<8xf32>
    %19 = vector.multi_reduction <maximumf>, %18, %cst_11 [1] : vector<8x8xf32> to vector<8xf32>
    %20 = vector.shape_cast %19 : vector<8xf32> to vector<8x1xf32>
    %21 = vector.broadcast %20 : vector<8x1xf32> to vector<8x8xf32>
    %22 = arith.subf %18, %21 : vector<8x8xf32>
    %23 = math.exp %22 : vector<8x8xf32>
    %cst_12 = arith.constant dense<0.000000e+00> : vector<8xf32>
    %24 = vector.multi_reduction <add>, %23, %cst_12 [1] : vector<8x8xf32> to vector<8xf32>
    %25 = vector.shape_cast %24 : vector<8xf32> to vector<8x1xf32>
    %26 = tpu.reciprocal %25 {approx = true} : vector<8x1xf32> -> vector<8x1xf32>
    %27 = vector.broadcast %26 : vector<8x1xf32> to vector<8x8xf32>
    %28 = arith.mulf %23, %27 : vector<8x8xf32>
    %29 = arith.truncf %28 : vector<8x8xf32> to vector<8x8xbf16>
    %30 = vector.extract_strided_slice %15 {offsets = [0, 0], sizes = [8, 8], strides = [1, 1]} : vector<8x32xbf16> to vector<8x8xbf16>
    %cst_13 = arith.constant dense<0.000000e+00> : vector<8x8xf32>
    %31 = tpu.matmul %29, %30, %cst_13 {dimension_numbers = #tpu.dot_dimension_numbers<[1], [0], [0], [1], [0, 0, 1, 1], [], []>} : vector<8x8xbf16>, vector<8x8xbf16>, vector<8x8xf32> -> vector<8x8xf32>
    %32 = vector.extract_strided_slice %12 {offsets = [0, 8], sizes = [8, 8], strides = [1, 1]} : vector<8x32xbf16> to vector<8x8xbf16>
    %33 = vector.extract_strided_slice %14 {offsets = [0, 8], sizes = [8, 8], strides = [1, 1]} : vector<8x32xbf16> to vector<8x8xbf16>
    %cst_14 = arith.constant dense<0.000000e+00> : vector<8x8xf32>
    %34 = tpu.matmul %32, %33, %cst_14 {dimension_numbers = #tpu.dot_dimension_numbers<[1], [1], [0], [0], [0, 0, 1, 0], [], []>} : vector<8x8xbf16>, vector<8x8xbf16>, vector<8x8xf32> -> vector<8x8xf32>
    %cst_15 = arith.constant dense<0xFF800000> : vector<8xf32>
    %35 = vector.multi_reduction <maximumf>, %34, %cst_15 [1] : vector<8x8xf32> to vector<8xf32>
    %36 = vector.shape_cast %35 : vector<8xf32> to vector<8x1xf32>
    %37 = vector.broadcast %36 : vector<8x1xf32> to vector<8x8xf32>
    %38 = arith.subf %34, %37 : vector<8x8xf32>
    %39 = math.exp %38 : vector<8x8xf32>
    %cst_16 = arith.constant dense<0.000000e+00> : vector<8xf32>
    %40 = vector.multi_reduction <add>, %39, %cst_16 [1] : vector<8x8xf32> to vector<8xf32>
    %41 = vector.shape_cast %40 : vector<8xf32> to vector<8x1xf32>
    %42 = tpu.reciprocal %41 {approx = true} : vector<8x1xf32> -> vector<8x1xf32>
    %43 = vector.broadcast %42 : vector<8x1xf32> to vector<8x8xf32>
    %44 = arith.mulf %39, %43 : vector<8x8xf32>
    %45 = arith.truncf %44 : vector<8x8xf32> to vector<8x8xbf16>
    %46 = vector.extract_strided_slice %15 {offsets = [0, 8], sizes = [8, 8], strides = [1, 1]} : vector<8x32xbf16> to vector<8x8xbf16>
    %cst_17 = arith.constant dense<0.000000e+00> : vector<8x8xf32>
    %47 = tpu.matmul %45, %46, %cst_17 {dimension_numbers = #tpu.dot_dimension_numbers<[1], [0], [0], [1], [0, 0, 1, 1], [], []>} : vector<8x8xbf16>, vector<8x8xbf16>, vector<8x8xf32> -> vector<8x8xf32>
    %48 = vector.extract_strided_slice %12 {offsets = [0, 16], sizes = [8, 8], strides = [1, 1]} : vector<8x32xbf16> to vector<8x8xbf16>
    %49 = vector.extract_strided_slice %14 {offsets = [0, 16], sizes = [8, 8], strides = [1, 1]} : vector<8x32xbf16> to vector<8x8xbf16>
    %cst_18 = arith.constant dense<0.000000e+00> : vector<8x8xf32>
    %50 = tpu.matmul %48, %49, %cst_18 {dimension_numbers = #tpu.dot_dimension_numbers<[1], [1], [0], [0], [0, 0, 1, 0], [], []>} : vector<8x8xbf16>, vector<8x8xbf16>, vector<8x8xf32> -> vector<8x8xf32>
    %cst_19 = arith.constant dense<0xFF800000> : vector<8xf32>
    %51 = vector.multi_reduction <maximumf>, %50, %cst_19 [1] : vector<8x8xf32> to vector<8xf32>
    %52 = vector.shape_cast %51 : vector<8xf32> to vector<8x1xf32>
    %53 = vector.broadcast %52 : vector<8x1xf32> to vector<8x8xf32>
    %54 = arith.subf %50, %53 : vector<8x8xf32>
    %55 = math.exp %54 : vector<8x8xf32>
    %cst_20 = arith.constant dense<0.000000e+00> : vector<8xf32>
    %56 = vector.multi_reduction <add>, %55, %cst_20 [1] : vector<8x8xf32> to vector<8xf32>
    %57 = vector.shape_cast %56 : vector<8xf32> to vector<8x1xf32>
    %58 = tpu.reciprocal %57 {approx = true} : vector<8x1xf32> -> vector<8x1xf32>
    %59 = vector.broadcast %58 : vector<8x1xf32> to vector<8x8xf32>
    %60 = arith.mulf %55, %59 : vector<8x8xf32>
    %61 = arith.truncf %60 : vector<8x8xf32> to vector<8x8xbf16>
    %62 = vector.extract_strided_slice %15 {offsets = [0, 16], sizes = [8, 8], strides = [1, 1]} : vector<8x32xbf16> to vector<8x8xbf16>
    %cst_21 = arith.constant dense<0.000000e+00> : vector<8x8xf32>
    %63 = tpu.matmul %61, %62, %cst_21 {dimension_numbers = #tpu.dot_dimension_numbers<[1], [0], [0], [1], [0, 0, 1, 1], [], []>} : vector<8x8xbf16>, vector<8x8xbf16>, vector<8x8xf32> -> vector<8x8xf32>
    %64 = vector.extract_strided_slice %12 {offsets = [0, 24], sizes = [8, 8], strides = [1, 1]} : vector<8x32xbf16> to vector<8x8xbf16>
    %65 = vector.extract_strided_slice %14 {offsets = [0, 24], sizes = [8, 8], strides = [1, 1]} : vector<8x32xbf16> to vector<8x8xbf16>
    %cst_22 = arith.constant dense<0.000000e+00> : vector<8x8xf32>
    %66 = tpu.matmul %64, %65, %cst_22 {dimension_numbers = #tpu.dot_dimension_numbers<[1], [1], [0], [0], [0, 0, 1, 0], [], []>} : vector<8x8xbf16>, vector<8x8xbf16>, vector<8x8xf32> -> vector<8x8xf32>
    %cst_23 = arith.constant dense<0xFF800000> : vector<8xf32>
    %67 = vector.multi_reduction <maximumf>, %66, %cst_23 [1] : vector<8x8xf32> to vector<8xf32>
    %68 = vector.shape_cast %67 : vector<8xf32> to vector<8x1xf32>
    %69 = vector.broadcast %68 : vector<8x1xf32> to vector<8x8xf32>
    %70 = arith.subf %66, %69 : vector<8x8xf32>
    %71 = math.exp %70 : vector<8x8xf32>
    %cst_24 = arith.constant dense<0.000000e+00> : vector<8xf32>
    %72 = vector.multi_reduction <add>, %71, %cst_24 [1] : vector<8x8xf32> to vector<8xf32>
    %73 = vector.shape_cast %72 : vector<8xf32> to vector<8x1xf32>
    %74 = tpu.reciprocal %73 {approx = true} : vector<8x1xf32> -> vector<8x1xf32>
    %75 = vector.broadcast %74 : vector<8x1xf32> to vector<8x8xf32>
    %76 = arith.mulf %71, %75 : vector<8x8xf32>
    %77 = arith.truncf %76 : vector<8x8xf32> to vector<8x8xbf16>
    %78 = vector.extract_strided_slice %15 {offsets = [0, 24], sizes = [8, 8], strides = [1, 1]} : vector<8x32xbf16> to vector<8x8xbf16>
    %cst_25 = arith.constant dense<0.000000e+00> : vector<8x8xf32>
    %79 = tpu.matmul %77, %78, %cst_25 {dimension_numbers = #tpu.dot_dimension_numbers<[1], [0], [0], [1], [0, 0, 1, 1], [], []>} : vector<8x8xbf16>, vector<8x8xbf16>, vector<8x8xf32> -> vector<8x8xf32>
    %80 = tpu.concatenate %31, %47, %63, %79 in 1 : vector<8x8xf32>, vector<8x8xf32>, vector<8x8xf32>, vector<8x8xf32> -> vector<8x32xf32>
    %81 = arith.truncf %80 : vector<8x32xf32> to vector<8x32xbf16>
    %c0_26 = arith.constant 0 : index
    %c0_27 = arith.constant 0 : index
    %82 = vector.load %arg8[%c0_26, %c0_27] : memref<32x32xbf16, #tpu.memory_space<vmem>>, vector<32x32xbf16>
    %cst_28 = arith.constant dense<0.000000e+00> : vector<8x32xf32>
    %83 = tpu.matmul %81, %82, %cst_28 {dimension_numbers = #tpu.dot_dimension_numbers<[1], [0], [0], [1], [0, 0, 1, 1], [], []>} : vector<8x32xbf16>, vector<32x32xbf16>, vector<8x32xf32> -> vector<8x32xf32>
    %c0_29 = arith.constant 0 : index
    %c0_30 = arith.constant 0 : index
    %84 = vector.load %arg9[%c0_29, %c0_30] : memref<1x32xf32, #tpu.memory_space<vmem>>, vector<1x32xf32>
    %85 = vector.broadcast %84 : vector<1x32xf32> to vector<8x32xf32>
    %86 = arith.addf %83, %85 : vector<8x32xf32>
    %87 = arith.extf %1 : vector<8x32xbf16> to vector<8x32xf32>
    %88 = arith.addf %87, %86 : vector<8x32xf32>
    %c0_31 = arith.constant 0 : index
    %c0_32 = arith.constant 0 : index
    %89 = vector.load %arg10[%c0_31, %c0_32] : memref<1x32xf32, #tpu.memory_space<vmem>>, vector<1x32xf32>
    %c0_33 = arith.constant 0 : index
    %c0_34 = arith.constant 0 : index
    %90 = vector.load %arg11[%c0_33, %c0_34] : memref<1x32xf32, #tpu.memory_space<vmem>>, vector<1x32xf32>
    %cst_35 = arith.constant dense<0.000000e+00> : vector<8xf32>
    %91 = vector.multi_reduction <add>, %88, %cst_35 [1] : vector<8x32xf32> to vector<8xf32>
    %92 = vector.shape_cast %91 : vector<8xf32> to vector<8x1xf32>
    %cst_36 = arith.constant 3.200000e+01 : f32
    %93 = vector.broadcast %cst_36 : f32 to vector<8x1xf32>
    %94 = arith.divf %92, %93 : vector<8x1xf32>
    %95 = vector.broadcast %94 : vector<8x1xf32> to vector<8x32xf32>
    %96 = arith.subf %88, %95 : vector<8x32xf32>
    %97 = arith.mulf %96, %96 : vector<8x32xf32>
    %cst_37 = arith.constant dense<0.000000e+00> : vector<8xf32>
    %98 = vector.multi_reduction <add>, %97, %cst_37 [1] : vector<8x32xf32> to vector<8xf32>
    %99 = vector.shape_cast %98 : vector<8xf32> to vector<8x1xf32>
    %cst_38 = arith.constant 3.200000e+01 : f32
    %100 = vector.broadcast %cst_38 : f32 to vector<8x1xf32>
    %101 = arith.divf %99, %100 : vector<8x1xf32>
    %cst_39 = arith.constant 9.99999974E-6 : f32
    %102 = vector.broadcast %cst_39 : f32 to vector<8x1xf32>
    %103 = arith.addf %101, %102 : vector<8x1xf32>
    %104 = math.rsqrt %103 : vector<8x1xf32>
    %105 = vector.broadcast %104 : vector<8x1xf32> to vector<8x32xf32>
    %106 = arith.mulf %96, %105 : vector<8x32xf32>
    %107 = vector.broadcast %89 : vector<1x32xf32> to vector<8x32xf32>
    %108 = arith.mulf %106, %107 : vector<8x32xf32>
    %109 = vector.broadcast %90 : vector<1x32xf32> to vector<8x32xf32>
    %110 = arith.addf %108, %109 : vector<8x32xf32>
    %111 = arith.truncf %110 : vector<8x32xf32> to vector<8x32xbf16>
    %c0_40 = arith.constant 0 : index
    %c0_41 = arith.constant 0 : index
    %c0_42 = arith.constant 0 : index
    %112 = vector.load %arg12[%c0_40, %c0_41, %c0_42] : memref<1x8x32xbf16, #tpu.memory_space<vmem>>, vector<1x8x32xbf16>
    %113 = vector.shape_cast %112 : vector<1x8x32xbf16> to vector<8x32xbf16>
    %114 = vector.shape_cast %111 : vector<8x32xbf16> to vector<1x8x32xbf16>
    tpu.vector_store %arg12[%c0_40, %c0_41, %c0_42], %114 {strides = array<i32>} : memref<1x8x32xbf16, #tpu.memory_space<vmem>>, vector<1x8x32xbf16>,
    return
  }
  func.func @transform_0(%arg0: i32, %arg1: i32) -> (i32, i32, i32) {
    %c0_i32 = arith.constant 0 : i32
    %c0_i32_0 = arith.constant 0 : i32
    return %arg0, %arg1, %c0_i32 : i32, i32, i32
  }
  func.func @transform_1(%arg0: i32, %arg1: i32) -> (i32, i32, i32) {
    %c0_i32 = arith.constant 0 : i32
    %c0_i32_0 = arith.constant 0 : i32
    %c0_i32_1 = arith.constant 0 : i32
    return %arg0, %c0_i32, %c0_i32_0 : i32, i32, i32
  }
  func.func @transform_2(%arg0: i32, %arg1: i32) -> (i32, i32) {
    %c0_i32 = arith.constant 0 : i32
    %c0_i32_0 = arith.constant 0 : i32
    %c0_i32_1 = arith.constant 0 : i32
    return %c0_i32, %c0_i32_0 : i32, i32
  }
  func.func @transform_3(%arg0: i32, %arg1: i32) -> (i32, i32) {
    %c0_i32 = arith.constant 0 : i32
    %c0_i32_0 = arith.constant 0 : i32
    %c0_i32_1 = arith.constant 0 : i32
    return %c0_i32, %c0_i32_0 : i32, i32
  }
  func.func @transform_4(%arg0: i32, %arg1: i32) -> (i32, i32) {
    %c0_i32 = arith.constant 0 : i32
    %c0_i32_0 = arith.constant 0 : i32
    %c0_i32_1 = arith.constant 0 : i32
    return %c0_i32, %c0_i32_0 : i32, i32
  }
  func.func @transform_5(%arg0: i32, %arg1: i32) -> (i32, i32) {
    %c0_i32 = arith.constant 0 : i32
    %c0_i32_0 = arith.constant 0 : i32
    %c0_i32_1 = arith.constant 0 : i32
    return %c0_i32, %c0_i32_0 : i32, i32
  }
  func.func @transform_6(%arg0: i32, %arg1: i32) -> (i32, i32) {
    %c0_i32 = arith.constant 0 : i32
    %c0_i32_0 = arith.constant 0 : i32
    %c0_i32_1 = arith.constant 0 : i32
    return %c0_i32, %c0_i32_0 : i32, i32
  }
  func.func @transform_7(%arg0: i32, %arg1: i32) -> (i32, i32) {
    %c0_i32 = arith.constant 0 : i32
    %c0_i32_0 = arith.constant 0 : i32
    %c0_i32_1 = arith.constant 0 : i32
    return %c0_i32, %c0_i32_0 : i32, i32
  }
  func.func @transform_8(%arg0: i32, %arg1: i32) -> (i32, i32) {
    %c0_i32 = arith.constant 0 : i32
    %c0_i32_0 = arith.constant 0 : i32
    %c0_i32_1 = arith.constant 0 : i32
    return %c0_i32, %c0_i32_0 : i32, i32
  }
  func.func @transform_9(%arg0: i32, %arg1: i32) -> (i32, i32) {
    %c0_i32 = arith.constant 0 : i32
    %c0_i32_0 = arith.constant 0 : i32
    %c0_i32_1 = arith.constant 0 : i32
    return %c0_i32, %c0_i32_0 : i32, i32
  }
  func.func @transform_10(%arg0: i32, %arg1: i32) -> (i32, i32, i32) {
    %c0_i32 = arith.constant 0 : i32
    %c0_i32_0 = arith.constant 0 : i32
    return %arg0, %arg1, %c0_i32 : i32, i32, i32
  }
}

module attributes {stable_mosaic.version = 11 : i64} {
  func.func @_ffn_block_kernel(%arg0: i32, %arg1: i32, %arg2: memref<16x32xbf16, #tpu.memory_space<vmem>>, %arg3: memref<32x64xbf16, #tpu.memory_space<vmem>>, %arg4: memref<1x64xf32, #tpu.memory_space<vmem>>, %arg5: memref<64x32xbf16, #tpu.memory_space<vmem>>, %arg6: memref<1x32xf32, #tpu.memory_space<vmem>>, %arg7: memref<1x32xf32, #tpu.memory_space<vmem>>, %arg8: memref<1x32xf32, #tpu.memory_space<vmem>>, %arg9: memref<1x32xf32, #tpu.memory_space<vmem>>, %arg10: memref<1x32xf32, #tpu.memory_space<vmem>>, %arg11: memref<16x32xbf16, #tpu.memory_space<vmem>>, %arg12: memref<16x32xf32, #tpu.memory_space<vmem>>) attributes {dimension_semantics = [#tpu.dimension_semantics<parallel>, #tpu.dimension_semantics<arbitrary>], iteration_bounds = array<i64: 1, 1>, scalar_prefetch = 0 : i64, scratch_operands = 1 : i64, tpu.core_type = #tpu.core_type<tc>, window_params = [{transform_indices = @transform_0, window_bounds = array<i64: 16, 32>}, {transform_indices = @transform_1, window_bounds = array<i64: 32, 64>}, {transform_indices = @transform_2, window_bounds = array<i64: 1, 64>}, {transform_indices = @transform_3, window_bounds = array<i64: 64, 32>}, {pipeline_mode = #tpu.pipeline_mode<synchronous>, transform_indices = @transform_4, window_bounds = array<i64: 1, 32>}, {pipeline_mode = #tpu.pipeline_mode<synchronous>, transform_indices = @transform_5, window_bounds = array<i64: 1, 32>}, {pipeline_mode = #tpu.pipeline_mode<synchronous>, transform_indices = @transform_6, window_bounds = array<i64: 1, 32>}, {pipeline_mode = #tpu.pipeline_mode<synchronous>, transform_indices = @transform_7, window_bounds = array<i64: 1, 32>}, {pipeline_mode = #tpu.pipeline_mode<synchronous>, transform_indices = @transform_8, window_bounds = array<i64: 1, 32>}, {transform_indices = @transform_9, window_bounds = array<i64: 16, 32>}]} {
    %c0_i32 = arith.constant 0 : i32
    %0 = arith.cmpi eq, %arg1, %c0_i32 : i32
    %1 = arith.extui %0 : i1 to i32
    %c0_i32_0 = arith.constant 0 : i32
    %2 = arith.cmpi ne, %1, %c0_i32_0 : i32
    scf.if %2 {
      %cst_16 = arith.constant 0.000000e+00 : f32
      %20 = vector.broadcast %cst_16 : f32 to vector<16x32xf32>
      %c0_17 = arith.constant 0 : index
      %c0_18 = arith.constant 0 : index
      %21 = vector.load %arg12[%c0_17, %c0_18] : memref<16x32xf32, #tpu.memory_space<vmem>>, vector<16x32xf32>
      tpu.vector_store %arg12[%c0_17, %c0_18], %20 {strides = array<i32>} : memref<16x32xf32, #tpu.memory_space<vmem>>, vector<16x32xf32>,
    } else {
    }
    %c0 = arith.constant 0 : index
    %c0_1 = arith.constant 0 : index
    %3 = vector.load %arg2[%c0, %c0_1] : memref<16x32xbf16, #tpu.memory_space<vmem>>, vector<16x32xbf16>
    %c0_2 = arith.constant 0 : index
    %c0_3 = arith.constant 0 : index
    %4 = vector.load %arg3[%c0_2, %c0_3] : memref<32x64xbf16, #tpu.memory_space<vmem>>, vector<32x64xbf16>
    %cst = arith.constant dense<0.000000e+00> : vector<16x64xf32>
    %5 = tpu.matmul %3, %4, %cst {dimension_numbers = #tpu.dot_dimension_numbers<[1], [0], [0], [1], [0, 0, 1, 1], [], []>} : vector<16x32xbf16>, vector<32x64xbf16>, vector<16x64xf32> -> vector<16x64xf32>
    %c0_4 = arith.constant 0 : index
    %c0_5 = arith.constant 0 : index
    %6 = vector.load %arg4[%c0_4, %c0_5] : memref<1x64xf32, #tpu.memory_space<vmem>>, vector<1x64xf32>
    %7 = vector.broadcast %6 : vector<1x64xf32> to vector<16x64xf32>
    %8 = arith.addf %5, %7 : vector<16x64xf32>
    %cst_6 = arith.constant 0.000000e+00 : f32
    %9 = vector.broadcast %cst_6 : f32 to vector<16x64xf32>
    %10 = arith.maximumf %8, %9 : vector<16x64xf32>
    %11 = arith.truncf %10 : vector<16x64xf32> to vector<16x64xbf16>
    %c0_7 = arith.constant 0 : index
    %c0_8 = arith.constant 0 : index
    %12 = vector.load %arg12[%c0_7, %c0_8] : memref<16x32xf32, #tpu.memory_space<vmem>>, vector<16x32xf32>
    %c0_9 = arith.constant 0 : index
    %c0_10 = arith.constant 0 : index
    %13 = vector.load %arg5[%c0_9, %c0_10] : memref<64x32xbf16, #tpu.memory_space<vmem>>, vector<64x32xbf16>
    %cst_11 = arith.constant dense<0.000000e+00> : vector<16x32xf32>
    %14 = tpu.matmul %11, %13, %cst_11 {dimension_numbers = #tpu.dot_dimension_numbers<[1], [0], [0], [1], [0, 0, 1, 1], [], []>} : vector<16x64xbf16>, vector<64x32xbf16>, vector<16x32xf32> -> vector<16x32xf32>
    %15 = arith.addf %12, %14 : vector<16x32xf32>
    %c0_12 = arith.constant 0 : index
    %c0_13 = arith.constant 0 : index
    %16 = vector.load %arg12[%c0_12, %c0_13] : memref<16x32xf32, #tpu.memory_space<vmem>>, vector<16x32xf32>
    tpu.vector_store %arg12[%c0_12, %c0_13], %15 {strides = array<i32>} : memref<16x32xf32, #tpu.memory_space<vmem>>, vector<16x32xf32>,
    %c0_i32_14 = arith.constant 0 : i32
    %17 = arith.cmpi eq, %arg1, %c0_i32_14 : i32
    %18 = arith.extui %17 : i1 to i32
    %c0_i32_15 = arith.constant 0 : i32
    %19 = arith.cmpi ne, %18, %c0_i32_15 : i32
    scf.if %19 {
      %20 = arith.extf %3 : vector<16x32xbf16> to vector<16x32xf32>
      %c0_16 = arith.constant 0 : index
      %c0_17 = arith.constant 0 : index
      %21 = vector.load %arg12[%c0_16, %c0_17] : memref<16x32xf32, #tpu.memory_space<vmem>>, vector<16x32xf32>
      %22 = arith.addf %20, %21 : vector<16x32xf32>
      %c0_18 = arith.constant 0 : index
      %c0_19 = arith.constant 0 : index
      %23 = vector.load %arg6[%c0_18, %c0_19] : memref<1x32xf32, #tpu.memory_space<vmem>>, vector<1x32xf32>
      %24 = vector.broadcast %23 : vector<1x32xf32> to vector<16x32xf32>
      %25 = arith.addf %22, %24 : vector<16x32xf32>
      %c0_20 = arith.constant 0 : index
      %c0_21 = arith.constant 0 : index
      %26 = vector.load %arg7[%c0_20, %c0_21] : memref<1x32xf32, #tpu.memory_space<vmem>>, vector<1x32xf32>
      %c0_22 = arith.constant 0 : index
      %c0_23 = arith.constant 0 : index
      %27 = vector.load %arg8[%c0_22, %c0_23] : memref<1x32xf32, #tpu.memory_space<vmem>>, vector<1x32xf32>
      %cst_24 = arith.constant dense<0.000000e+00> : vector<16xf32>
      %28 = vector.multi_reduction <add>, %25, %cst_24 [1] : vector<16x32xf32> to vector<16xf32>
      %29 = vector.shape_cast %28 : vector<16xf32> to vector<16x1xf32>
      %cst_25 = arith.constant 3.200000e+01 : f32
      %30 = vector.broadcast %cst_25 : f32 to vector<16x1xf32>
      %31 = arith.divf %29, %30 : vector<16x1xf32>
      %32 = vector.broadcast %31 : vector<16x1xf32> to vector<16x32xf32>
      %33 = arith.subf %25, %32 : vector<16x32xf32>
      %34 = arith.mulf %33, %33 : vector<16x32xf32>
      %cst_26 = arith.constant dense<0.000000e+00> : vector<16xf32>
      %35 = vector.multi_reduction <add>, %34, %cst_26 [1] : vector<16x32xf32> to vector<16xf32>
      %36 = vector.shape_cast %35 : vector<16xf32> to vector<16x1xf32>
      %cst_27 = arith.constant 3.200000e+01 : f32
      %37 = vector.broadcast %cst_27 : f32 to vector<16x1xf32>
      %38 = arith.divf %36, %37 : vector<16x1xf32>
      %cst_28 = arith.constant 9.99999974E-6 : f32
      %39 = vector.broadcast %cst_28 : f32 to vector<16x1xf32>
      %40 = arith.addf %38, %39 : vector<16x1xf32>
      %41 = math.rsqrt %40 : vector<16x1xf32>
      %42 = vector.broadcast %41 : vector<16x1xf32> to vector<16x32xf32>
      %43 = arith.mulf %33, %42 : vector<16x32xf32>
      %44 = vector.broadcast %26 : vector<1x32xf32> to vector<16x32xf32>
      %45 = arith.mulf %43, %44 : vector<16x32xf32>
      %46 = vector.broadcast %27 : vector<1x32xf32> to vector<16x32xf32>
      %47 = arith.addf %45, %46 : vector<16x32xf32>
      %48 = arith.truncf %47 : vector<16x32xf32> to vector<16x32xbf16>
      %c0_29 = arith.constant 0 : index
      %c0_30 = arith.constant 0 : index
      %49 = vector.load %arg11[%c0_29, %c0_30] : memref<16x32xbf16, #tpu.memory_space<vmem>>, vector<16x32xbf16>
      tpu.vector_store %arg11[%c0_29, %c0_30], %48 {strides = array<i32>} : memref<16x32xbf16, #tpu.memory_space<vmem>>, vector<16x32xbf16>,
    } else {
    }
    return
  }
  func.func @transform_0(%arg0: i32, %arg1: i32) -> (i32, i32) {
    %c0_i32 = arith.constant 0 : i32
    %c0_i32_0 = arith.constant 0 : i32
    return %arg0, %c0_i32 : i32, i32
  }
  func.func @transform_1(%arg0: i32, %arg1: i32) -> (i32, i32) {
    %c0_i32 = arith.constant 0 : i32
    %c0_i32_0 = arith.constant 0 : i32
    return %c0_i32, %arg1 : i32, i32
  }
  func.func @transform_2(%arg0: i32, %arg1: i32) -> (i32, i32) {
    %c0_i32 = arith.constant 0 : i32
    %c0_i32_0 = arith.constant 0 : i32
    return %c0_i32, %arg1 : i32, i32
  }
  func.func @transform_3(%arg0: i32, %arg1: i32) -> (i32, i32) {
    %c0_i32 = arith.constant 0 : i32
    %c0_i32_0 = arith.constant 0 : i32
    return %arg1, %c0_i32 : i32, i32
  }
  func.func @transform_4(%arg0: i32, %arg1: i32) -> (i32, i32) {
    %c0_i32 = arith.constant 0 : i32
    %c0_i32_0 = arith.constant 0 : i32
    %c0_i32_1 = arith.constant 0 : i32
    return %c0_i32, %c0_i32_0 : i32, i32
  }
  func.func @transform_5(%arg0: i32, %arg1: i32) -> (i32, i32) {
    %c0_i32 = arith.constant 0 : i32
    %c0_i32_0 = arith.constant 0 : i32
    %c0_i32_1 = arith.constant 0 : i32
    return %c0_i32, %c0_i32_0 : i32, i32
  }
  func.func @transform_6(%arg0: i32, %arg1: i32) -> (i32, i32) {
    %c0_i32 = arith.constant 0 : i32
    %c0_i32_0 = arith.constant 0 : i32
    %c0_i32_1 = arith.constant 0 : i32
    return %c0_i32, %c0_i32_0 : i32, i32
  }
  func.func @transform_7(%arg0: i32, %arg1: i32) -> (i32, i32) {
    %c0_i32 = arith.constant 0 : i32
    %c0_i32_0 = arith.constant 0 : i32
    %c0_i32_1 = arith.constant 0 : i32
    return %c0_i32, %c0_i32_0 : i32, i32
  }
  func.func @transform_8(%arg0: i32, %arg1: i32) -> (i32, i32) {
    %c0_i32 = arith.constant 0 : i32
    %c0_i32_0 = arith.constant 0 : i32
    %c0_i32_1 = arith.constant 0 : i32
    return %c0_i32, %c0_i32_0 : i32, i32
  }
  func.func @transform_9(%arg0: i32, %arg1: i32) -> (i32, i32) {
    %c0_i32 = arith.constant 0 : i32
    %c0_i32_0 = arith.constant 0 : i32
    return %arg0, %c0_i32 : i32, i32
  }
}

module attributes {stable_mosaic.version = 11 : i64} {
  func.func @_mha_block_kernel(%arg0: i32, %arg1: i32, %arg2: memref<1x8x32xbf16, #tpu.memory_space<vmem>>, %arg3: memref<1x8x32xbf16, #tpu.memory_space<vmem>>, %arg4: memref<32x32xbf16, #tpu.memory_space<vmem>>, %arg5: memref<1x32xf32, #tpu.memory_space<vmem>>, %arg6: memref<32x64xbf16, #tpu.memory_space<vmem>>, %arg7: memref<1x64xf32, #tpu.memory_space<vmem>>, %arg8: memref<32x32xbf16, #tpu.memory_space<vmem>>, %arg9: memref<1x32xf32, #tpu.memory_space<vmem>>, %arg10: memref<1x32xf32, #tpu.memory_space<vmem>>, %arg11: memref<1x32xf32, #tpu.memory_space<vmem>>, %arg12: memref<1x8x32xbf16, #tpu.memory_space<vmem>>, %arg13: memref<8x64xbf16, #tpu.memory_space<vmem>>) attributes {dimension_semantics = [#tpu.dimension_semantics<parallel>, #tpu.dimension_semantics<arbitrary>], iteration_bounds = array<i64: 2, 1>, scalar_prefetch = 0 : i64, scratch_operands = 1 : i64, tpu.core_type = #tpu.core_type<tc>, window_params = [{transform_indices = @transform_0, window_bounds = array<i64: 1, 8, 32>}, {transform_indices = @transform_1, window_bounds = array<i64: 1, 8, 32>}, {pipeline_mode = #tpu.pipeline_mode<synchronous>, transform_indices = @transform_2, window_bounds = array<i64: 32, 32>}, {pipeline_mode = #tpu.pipeline_mode<synchronous>, transform_indices = @transform_3, window_bounds = array<i64: 1, 32>}, {pipeline_mode = #tpu.pipeline_mode<synchronous>, transform_indices = @transform_4, window_bounds = array<i64: 32, 64>}, {pipeline_mode = #tpu.pipeline_mode<synchronous>, transform_indices = @transform_5, window_bounds = array<i64: 1, 64>}, {pipeline_mode = #tpu.pipeline_mode<synchronous>, transform_indices = @transform_6, window_bounds = array<i64: 32, 32>}, {pipeline_mode = #tpu.pipeline_mode<synchronous>, transform_indices = @transform_7, window_bounds = array<i64: 1, 32>}, {pipeline_mode = #tpu.pipeline_mode<synchronous>, transform_indices = @transform_8, window_bounds = array<i64: 1, 32>}, {pipeline_mode = #tpu.pipeline_mode<synchronous>, transform_indices = @transform_9, window_bounds = array<i64: 1, 32>}, {transform_indices = @transform_10, window_bounds = array<i64: 1, 8, 32>}]} {
    %c0 = arith.constant 0 : index
    %c0_0 = arith.constant 0 : index
    %c0_1 = arith.constant 0 : index
    %0 = vector.load %arg2[%c0, %c0_0, %c0_1] : memref<1x8x32xbf16, #tpu.memory_space<vmem>>, vector<1x8x32xbf16>
    %1 = vector.shape_cast %0 : vector<1x8x32xbf16> to vector<8x32xbf16>
    %c0_i32 = arith.constant 0 : i32
    %2 = arith.cmpi eq, %arg1, %c0_i32 : i32
    %3 = arith.extui %2 : i1 to i32
    %c0_i32_2 = arith.constant 0 : i32
    %4 = arith.cmpi ne, %3, %c0_i32_2 : i32
    scf.if %4 {
      %c0_43 = arith.constant 0 : index
      %c0_44 = arith.constant 0 : index
      %c0_45 = arith.constant 0 : index
      %115 = vector.load %arg3[%c0_43, %c0_44, %c0_45] : memref<1x8x32xbf16, #tpu.memory_space<vmem>>, vector<1x8x32xbf16>
      %116 = vector.shape_cast %115 : vector<1x8x32xbf16> to vector<8x32xbf16>
      %c0_46 = arith.constant 0 : index
      %c0_47 = arith.constant 0 : index
      %117 = vector.load %arg6[%c0_46, %c0_47] : memref<32x64xbf16, #tpu.memory_space<vmem>>, vector<32x64xbf16>
      %cst_48 = arith.constant dense<0.000000e+00> : vector<8x64xf32>
      %118 = tpu.matmul %116, %117, %cst_48 {dimension_numbers = #tpu.dot_dimension_numbers<[1], [0], [0], [1], [0, 0, 1, 1], [], []>} : vector<8x32xbf16>, vector<32x64xbf16>, vector<8x64xf32> -> vector<8x64xf32>
      %c0_49 = arith.constant 0 : index
      %c0_50 = arith.constant 0 : index
      %119 = vector.load %arg7[%c0_49, %c0_50] : memref<1x64xf32, #tpu.memory_space<vmem>>, vector<1x64xf32>
      %120 = vector.broadcast %119 : vector<1x64xf32> to vector<8x64xf32>
      %121 = arith.addf %118, %120 : vector<8x64xf32>
      %122 = arith.truncf %121 : vector<8x64xf32> to vector<8x64xbf16>
      %c0_51 = arith.constant 0 : index
      %c0_52 = arith.constant 0 : index
      %123 = vector.load %arg13[%c0_51, %c0_52] : memref<8x64xbf16, #tpu.memory_space<vmem>>, vector<8x64xbf16>
      tpu.vector_store %arg13[%c0_51, %c0_52], %122 {strides = array<i32>} : memref<8x64xbf16, #tpu.memory_space<vmem>>, vector<8x64xbf16>,
    } else {
    }
    %c0_3 = arith.constant 0 : index
    %c0_4 = arith.constant 0 : index
    %5 = vector.load %arg4[%c0_3, %c0_4] : memref<32x32xbf16, #tpu.memory_space<vmem>>, vector<32x32xbf16>
    %cst = arith.constant dense<0.000000e+00> : vector<8x32xf32>
    %6 = tpu.matmul %1, %5, %cst {dimension_numbers = #tpu.dot_dimension_numbers<[1], [0], [0], [1], [0, 0, 1, 1], [], []>} : vector<8x32xbf16>, vector<32x32xbf16>, vector<8x32xf32> -> vector<8x32xf32>
    %c0_5 = arith.constant 0 : index
    %c0_6 = arith.constant 0 : index
    %7 = vector.load %arg5[%c0_5, %c0_6] : memref<1x32xf32, #tpu.memory_space<vmem>>, vector<1x32xf32>
    %8 = vector.broadcast %7 : vector<1x32xf32> to vector<8x32xf32>
    %9 = arith.addf %6, %8 : vector<8x32xf32>
    %cst_7 = arith.constant 0.353553385 : f32
    %10 = vector.broadcast %cst_7 : f32 to vector<8x32xf32>
    %11 = arith.mulf %9, %10 : vector<8x32xf32>
    %12 = arith.truncf %11 : vector<8x32xf32> to vector<8x32xbf16>
    %c0_8 = arith.constant 0 : index
    %c0_9 = arith.constant 0 : index
    %13 = vector.load %arg13[%c0_8, %c0_9] : memref<8x64xbf16, #tpu.memory_space<vmem>>, vector<8x64xbf16>
    %14 = vector.extract_strided_slice %13 {offsets = [0, 0], sizes = [8, 32], strides = [1, 1]} : vector<8x64xbf16> to vector<8x32xbf16>
    %15 = vector.extract_strided_slice %13 {offsets = [0, 32], sizes = [8, 32], strides = [1, 1]} : vector<8x64xbf16> to vector<8x32xbf16>
    %16 = vector.extract_strided_slice %12 {offsets = [0, 0], sizes = [8, 8], strides = [1, 1]} : vector<8x32xbf16> to vector<8x8xbf16>
    %17 = vector.extract_strided_slice %14 {offsets = [0, 0], sizes = [8, 8], strides = [1, 1]} : vector<8x32xbf16> to vector<8x8xbf16>
    %cst_10 = arith.constant dense<0.000000e+00> : vector<8x8xf32>
    %18 = tpu.matmul %16, %17, %cst_10 {dimension_numbers = #tpu.dot_dimension_numbers<[1], [1], [0], [0], [0, 0, 1, 0], [], []>} : vector<8x8xbf16>, vector<8x8xbf16>, vector<8x8xf32> -> vector<8x8xf32>
    %cst_11 = arith.constant dense<0xFF800000> : vector<8xf32>
    %19 = vector.multi_reduction <maximumf>, %18, %cst_11 [1] : vector<8x8xf32> to vector<8xf32>
    %20 = vector.shape_cast %19 : vector<8xf32> to vector<8x1xf32>
    %21 = vector.broadcast %20 : vector<8x1xf32> to vector<8x8xf32>
    %22 = arith.subf %18, %21 : vector<8x8xf32>
    %23 = math.exp %22 : vector<8x8xf32>
    %cst_12 = arith.constant dense<0.000000e+00> : vector<8xf32>
    %24 = vector.multi_reduction <add>, %23, %cst_12 [1] : vector<8x8xf32> to vector<8xf32>
    %25 = vector.shape_cast %24 : vector<8xf32> to vector<8x1xf32>
    %26 = tpu.reciprocal %25 {approx = true} : vector<8x1xf32> -> vector<8x1xf32>
    %27 = vector.broadcast %26 : vector<8x1xf32> to vector<8x8xf32>
    %28 = arith.mulf %23, %27 : vector<8x8xf32>
    %29 = arith.truncf %28 : vector<8x8xf32> to vector<8x8xbf16>
    %30 = vector.extract_strided_slice %15 {offsets = [0, 0], sizes = [8, 8], strides = [1, 1]} : vector<8x32xbf16> to vector<8x8xbf16>
    %cst_13 = arith.constant dense<0.000000e+00> : vector<8x8xf32>
    %31 = tpu.matmul %29, %30, %cst_13 {dimension_numbers = #tpu.dot_dimension_numbers<[1], [0], [0], [1], [0, 0, 1, 1], [], []>} : vector<8x8xbf16>, vector<8x8xbf16>, vector<8x8xf32> -> vector<8x8xf32>
    %32 = vector.extract_strided_slice %12 {offsets = [0, 8], sizes = [8, 8], strides = [1, 1]} : vector<8x32xbf16> to vector<8x8xbf16>
    %33 = vector.extract_strided_slice %14 {offsets = [0, 8], sizes = [8, 8], strides = [1, 1]} : vector<8x32xbf16> to vector<8x8xbf16>
    %cst_14 = arith.constant dense<0.000000e+00> : vector<8x8xf32>
    %34 = tpu.matmul %32, %33, %cst_14 {dimension_numbers = #tpu.dot_dimension_numbers<[1], [1], [0], [0], [0, 0, 1, 0], [], []>} : vector<8x8xbf16>, vector<8x8xbf16>, vector<8x8xf32> -> vector<8x8xf32>
    %cst_15 = arith.constant dense<0xFF800000> : vector<8xf32>
    %35 = vector.multi_reduction <maximumf>, %34, %cst_15 [1] : vector<8x8xf32> to vector<8xf32>
    %36 = vector.shape_cast %35 : vector<8xf32> to vector<8x1xf32>
    %37 = vector.broadcast %36 : vector<8x1xf32> to vector<8x8xf32>
    %38 = arith.subf %34, %37 : vector<8x8xf32>
    %39 = math.exp %38 : vector<8x8xf32>
    %cst_16 = arith.constant dense<0.000000e+00> : vector<8xf32>
    %40 = vector.multi_reduction <add>, %39, %cst_16 [1] : vector<8x8xf32> to vector<8xf32>
    %41 = vector.shape_cast %40 : vector<8xf32> to vector<8x1xf32>
    %42 = tpu.reciprocal %41 {approx = true} : vector<8x1xf32> -> vector<8x1xf32>
    %43 = vector.broadcast %42 : vector<8x1xf32> to vector<8x8xf32>
    %44 = arith.mulf %39, %43 : vector<8x8xf32>
    %45 = arith.truncf %44 : vector<8x8xf32> to vector<8x8xbf16>
    %46 = vector.extract_strided_slice %15 {offsets = [0, 8], sizes = [8, 8], strides = [1, 1]} : vector<8x32xbf16> to vector<8x8xbf16>
    %cst_17 = arith.constant dense<0.000000e+00> : vector<8x8xf32>
    %47 = tpu.matmul %45, %46, %cst_17 {dimension_numbers = #tpu.dot_dimension_numbers<[1], [0], [0], [1], [0, 0, 1, 1], [], []>} : vector<8x8xbf16>, vector<8x8xbf16>, vector<8x8xf32> -> vector<8x8xf32>
    %48 = vector.extract_strided_slice %12 {offsets = [0, 16], sizes = [8, 8], strides = [1, 1]} : vector<8x32xbf16> to vector<8x8xbf16>
    %49 = vector.extract_strided_slice %14 {offsets = [0, 16], sizes = [8, 8], strides = [1, 1]} : vector<8x32xbf16> to vector<8x8xbf16>
    %cst_18 = arith.constant dense<0.000000e+00> : vector<8x8xf32>
    %50 = tpu.matmul %48, %49, %cst_18 {dimension_numbers = #tpu.dot_dimension_numbers<[1], [1], [0], [0], [0, 0, 1, 0], [], []>} : vector<8x8xbf16>, vector<8x8xbf16>, vector<8x8xf32> -> vector<8x8xf32>
    %cst_19 = arith.constant dense<0xFF800000> : vector<8xf32>
    %51 = vector.multi_reduction <maximumf>, %50, %cst_19 [1] : vector<8x8xf32> to vector<8xf32>
    %52 = vector.shape_cast %51 : vector<8xf32> to vector<8x1xf32>
    %53 = vector.broadcast %52 : vector<8x1xf32> to vector<8x8xf32>
    %54 = arith.subf %50, %53 : vector<8x8xf32>
    %55 = math.exp %54 : vector<8x8xf32>
    %cst_20 = arith.constant dense<0.000000e+00> : vector<8xf32>
    %56 = vector.multi_reduction <add>, %55, %cst_20 [1] : vector<8x8xf32> to vector<8xf32>
    %57 = vector.shape_cast %56 : vector<8xf32> to vector<8x1xf32>
    %58 = tpu.reciprocal %57 {approx = true} : vector<8x1xf32> -> vector<8x1xf32>
    %59 = vector.broadcast %58 : vector<8x1xf32> to vector<8x8xf32>
    %60 = arith.mulf %55, %59 : vector<8x8xf32>
    %61 = arith.truncf %60 : vector<8x8xf32> to vector<8x8xbf16>
    %62 = vector.extract_strided_slice %15 {offsets = [0, 16], sizes = [8, 8], strides = [1, 1]} : vector<8x32xbf16> to vector<8x8xbf16>
    %cst_21 = arith.constant dense<0.000000e+00> : vector<8x8xf32>
    %63 = tpu.matmul %61, %62, %cst_21 {dimension_numbers = #tpu.dot_dimension_numbers<[1], [0], [0], [1], [0, 0, 1, 1], [], []>} : vector<8x8xbf16>, vector<8x8xbf16>, vector<8x8xf32> -> vector<8x8xf32>
    %64 = vector.extract_strided_slice %12 {offsets = [0, 24], sizes = [8, 8], strides = [1, 1]} : vector<8x32xbf16> to vector<8x8xbf16>
    %65 = vector.extract_strided_slice %14 {offsets = [0, 24], sizes = [8, 8], strides = [1, 1]} : vector<8x32xbf16> to vector<8x8xbf16>
    %cst_22 = arith.constant dense<0.000000e+00> : vector<8x8xf32>
    %66 = tpu.matmul %64, %65, %cst_22 {dimension_numbers = #tpu.dot_dimension_numbers<[1], [1], [0], [0], [0, 0, 1, 0], [], []>} : vector<8x8xbf16>, vector<8x8xbf16>, vector<8x8xf32> -> vector<8x8xf32>
    %cst_23 = arith.constant dense<0xFF800000> : vector<8xf32>
    %67 = vector.multi_reduction <maximumf>, %66, %cst_23 [1] : vector<8x8xf32> to vector<8xf32>
    %68 = vector.shape_cast %67 : vector<8xf32> to vector<8x1xf32>
    %69 = vector.broadcast %68 : vector<8x1xf32> to vector<8x8xf32>
    %70 = arith.subf %66, %69 : vector<8x8xf32>
    %71 = math.exp %70 : vector<8x8xf32>
    %cst_24 = arith.constant dense<0.000000e+00> : vector<8xf32>
    %72 = vector.multi_reduction <add>, %71, %cst_24 [1] : vector<8x8xf32> to vector<8xf32>
    %73 = vector.shape_cast %72 : vector<8xf32> to vector<8x1xf32>
    %74 = tpu.reciprocal %73 {approx = true} : vector<8x1xf32> -> vector<8x1xf32>
    %75 = vector.broadcast %74 : vector<8x1xf32> to vector<8x8xf32>
    %76 = arith.mulf %71, %75 : vector<8x8xf32>
    %77 = arith.truncf %76 : vector<8x8xf32> to vector<8x8xbf16>
    %78 = vector.extract_strided_slice %15 {offsets = [0, 24], sizes = [8, 8], strides = [1, 1]} : vector<8x32xbf16> to vector<8x8xbf16>
    %cst_25 = arith.constant dense<0.000000e+00> : vector<8x8xf32>
    %79 = tpu.matmul %77, %78, %cst_25 {dimension_numbers = #tpu.dot_dimension_numbers<[1], [0], [0], [1], [0, 0, 1, 1], [], []>} : vector<8x8xbf16>, vector<8x8xbf16>, vector<8x8xf32> -> vector<8x8xf32>
    %80 = tpu.concatenate %31, %47, %63, %79 in 1 : vector<8x8xf32>, vector<8x8xf32>, vector<8x8xf32>, vector<8x8xf32> -> vector<8x32xf32>
    %81 = arith.truncf %80 : vector<8x32xf32> to vector<8x32xbf16>
    %c0_26 = arith.constant 0 : index
    %c0_27 = arith.constant 0 : index
    %82 = vector.load %arg8[%c0_26, %c0_27] : memref<32x32xbf16, #tpu.memory_space<vmem>>, vector<32x32xbf16>
    %cst_28 = arith.constant dense<0.000000e+00> : vector<8x32xf32>
    %83 = tpu.matmul %81, %82, %cst_28 {dimension_numbers = #tpu.dot_dimension_numbers<[1], [0], [0], [1], [0, 0, 1, 1], [], []>} : vector<8x32xbf16>, vector<32x32xbf16>, vector<8x32xf32> -> vector<8x32xf32>
    %c0_29 = arith.constant 0 : index
    %c0_30 = arith.constant 0 : index
    %84 = vector.load %arg9[%c0_29, %c0_30] : memref<1x32xf32, #tpu.memory_space<vmem>>, vector<1x32xf32>
    %85 = vector.broadcast %84 : vector<1x32xf32> to vector<8x32xf32>
    %86 = arith.addf %83, %85 : vector<8x32xf32>
    %87 = arith.extf %1 : vector<8x32xbf16> to vector<8x32xf32>
    %88 = arith.addf %87, %86 : vector<8x32xf32>
    %c0_31 = arith.constant 0 : index
    %c0_32 = arith.constant 0 : index
    %89 = vector.load %arg10[%c0_31, %c0_32] : memref<1x32xf32, #tpu.memory_space<vmem>>, vector<1x32xf32>
    %c0_33 = arith.constant 0 : index
    %c0_34 = arith.constant 0 : index
    %90 = vector.load %arg11[%c0_33, %c0_34] : memref<1x32xf32, #tpu.memory_space<vmem>>, vector<1x32xf32>
    %cst_35 = arith.constant dense<0.000000e+00> : vector<8xf32>
    %91 = vector.multi_reduction <add>, %88, %cst_35 [1] : vector<8x32xf32> to vector<8xf32>
    %92 = vector.shape_cast %91 : vector<8xf32> to vector<8x1xf32>
    %cst_36 = arith.constant 3.200000e+01 : f32
    %93 = vector.broadcast %cst_36 : f32 to vector<8x1xf32>
    %94 = arith.divf %92, %93 : vector<8x1xf32>
    %95 = vector.broadcast %94 : vector<8x1xf32> to vector<8x32xf32>
    %96 = arith.subf %88, %95 : vector<8x32xf32>
    %97 = arith.mulf %96, %96 : vector<8x32xf32>
    %cst_37 = arith.constant dense<0.000000e+00> : vector<8xf32>
    %98 = vector.multi_reduction <add>, %97, %cst_37 [1] : vector<8x32xf32> to vector<8xf32>
    %99 = vector.shape_cast %98 : vector<8xf32> to vector<8x1xf32>
    %cst_38 = arith.constant 3.200000e+01 : f32
    %100 = vector.broadcast %cst_38 : f32 to vector<8x1xf32>
    %101 = arith.divf %99, %100 : vector<8x1xf32>
    %cst_39 = arith.constant 9.99999974E-6 : f32
    %102 = vector.broadcast %cst_39 : f32 to vector<8x1xf32>
    %103 = arith.addf %101, %102 : vector<8x1xf32>
    %104 = math.rsqrt %103 : vector<8x1xf32>
    %105 = vector.broadcast %104 : vector<8x1xf32> to vector<8x32xf32>
    %106 = arith.mulf %96, %105 : vector<8x32xf32>
    %107 = vector.broadcast %89 : vector<1x32xf32> to vector<8x32xf32>
    %108 = arith.mulf %106, %107 : vector<8x32xf32>
    %109 = vector.broadcast %90 : vector<1x32xf32> to vector<8x32xf32>
    %110 = arith.addf %108, %109 : vector<8x32xf32>
    %111 = arith.truncf %110 : vector<8x32xf32> to vector<8x32xbf16>
    %c0_40 = arith.constant 0 : index
    %c0_41 = arith.constant 0 : index
    %c0_42 = arith.constant 0 : index
    %112 = vector.load %arg12[%c0_40, %c0_41, %c0_42] : memref<1x8x32xbf16, #tpu.memory_space<vmem>>, vector<1x8x32xbf16>
    %113 = vector.shape_cast %112 : vector<1x8x32xbf16> to vector<8x32xbf16>
    %114 = vector.shape_cast %111 : vector<8x32xbf16> to vector<1x8x32xbf16>
    tpu.vector_store %arg12[%c0_40, %c0_41, %c0_42], %114 {strides = array<i32>} : memref<1x8x32xbf16, #tpu.memory_space<vmem>>, vector<1x8x32xbf16>,
    return
  }
  func.func @transform_0(%arg0: i32, %arg1: i32) -> (i32, i32, i32) {
    %c0_i32 = arith.constant 0 : i32
    %c0_i32_0 = arith.constant 0 : i32
    return %arg0, %arg1, %c0_i32 : i32, i32, i32
  }
  func.func @transform_1(%arg0: i32, %arg1: i32) -> (i32, i32, i32) {
    %c0_i32 = arith.constant 0 : i32
    %c0_i32_0 = arith.constant 0 : i32
    %c0_i32_1 = arith.constant 0 : i32
    return %arg0, %c0_i32, %c0_i32_0 : i32, i32, i32
  }
  func.func @transform_2(%arg0: i32, %arg1: i32) -> (i32, i32) {
    %c0_i32 = arith.constant 0 : i32
    %c0_i32_0 = arith.constant 0 : i32
    %c0_i32_1 = arith.constant 0 : i32
    return %c0_i32, %c0_i32_0 : i32, i32
  }
  func.func @transform_3(%arg0: i32, %arg1: i32) -> (i32, i32) {
    %c0_i32 = arith.constant 0 : i32
    %c0_i32_0 = arith.constant 0 : i32
    %c0_i32_1 = arith.constant 0 : i32
    return %c0_i32, %c0_i32_0 : i32, i32
  }
  func.func @transform_4(%arg0: i32, %arg1: i32) -> (i32, i32) {
    %c0_i32 = arith.constant 0 : i32
    %c0_i32_0 = arith.constant 0 : i32
    %c0_i32_1 = arith.constant 0 : i32
    return %c0_i32, %c0_i32_0 : i32, i32
  }
  func.func @transform_5(%arg0: i32, %arg1: i32) -> (i32, i32) {
    %c0_i32 = arith.constant 0 : i32
    %c0_i32_0 = arith.constant 0 : i32
    %c0_i32_1 = arith.constant 0 : i32
    return %c0_i32, %c0_i32_0 : i32, i32
  }
  func.func @transform_6(%arg0: i32, %arg1: i32) -> (i32, i32) {
    %c0_i32 = arith.constant 0 : i32
    %c0_i32_0 = arith.constant 0 : i32
    %c0_i32_1 = arith.constant 0 : i32
    return %c0_i32, %c0_i32_0 : i32, i32
  }
  func.func @transform_7(%arg0: i32, %arg1: i32) -> (i32, i32) {
    %c0_i32 = arith.constant 0 : i32
    %c0_i32_0 = arith.constant 0 : i32
    %c0_i32_1 = arith.constant 0 : i32
    return %c0_i32, %c0_i32_0 : i32, i32
  }
  func.func @transform_8(%arg0: i32, %arg1: i32) -> (i32, i32) {
    %c0_i32 = arith.constant 0 : i32
    %c0_i32_0 = arith.constant 0 : i32
    %c0_i32_1 = arith.constant 0 : i32
    return %c0_i32, %c0_i32_0 : i32, i32
  }
  func.func @transform_9(%arg0: i32, %arg1: i32) -> (i32, i32) {
    %c0_i32 = arith.constant 0 : i32
    %c0_i32_0 = arith.constant 0 : i32
    %c0_i32_1 = arith.constant 0 : i32
    return %c0_i32, %c0_i32_0 : i32, i32
  }
  func.func @transform_10(%arg0: i32, %arg1: i32) -> (i32, i32, i32) {
    %c0_i32 = arith.constant 0 : i32
    %c0_i32_0 = arith.constant 0 : i32
    return %arg0, %arg1, %c0_i32 : i32, i32, i32
  }
}

module attributes {stable_mosaic.version = 11 : i64} {
  func.func @_norm_linear_kernel(%arg0: i32, %arg1: i32, %arg2: memref<16x32xbf16, #tpu.memory_space<vmem>>, %arg3: memref<1x32xf32, #tpu.memory_space<vmem>>, %arg4: memref<1x32xf32, #tpu.memory_space<vmem>>, %arg5: memref<32x128xbf16, #tpu.memory_space<vmem>>, %arg6: memref<1x128xf32, #tpu.memory_space<vmem>>, %arg7: memref<16x128xf32, #tpu.memory_space<vmem>>, %arg8: memref<16x32xbf16, #tpu.memory_space<vmem>>) attributes {dimension_semantics = [#tpu.dimension_semantics<parallel>, #tpu.dimension_semantics<arbitrary>], iteration_bounds = array<i64: 1, 1>, scalar_prefetch = 0 : i64, scratch_operands = 1 : i64, tpu.core_type = #tpu.core_type<tc>, window_params = [{transform_indices = @transform_0, window_bounds = array<i64: 16, 32>}, {pipeline_mode = #tpu.pipeline_mode<synchronous>, transform_indices = @transform_1, window_bounds = array<i64: 1, 32>}, {pipeline_mode = #tpu.pipeline_mode<synchronous>, transform_indices = @transform_2, window_bounds = array<i64: 1, 32>}, {transform_indices = @transform_3, window_bounds = array<i64: 32, 128>}, {transform_indices = @transform_4, window_bounds = array<i64: 1, 128>}, {transform_indices = @transform_5, window_bounds = array<i64: 16, 128>}]} {
    %c0_i32 = arith.constant 0 : i32
    %0 = arith.cmpi eq, %arg1, %c0_i32 : i32
    %1 = arith.extui %0 : i1 to i32
    %c0_i32_0 = arith.constant 0 : i32
    %2 = arith.cmpi ne, %1, %c0_i32_0 : i32
    scf.if %2 {
      %c0_8 = arith.constant 0 : index
      %c0_9 = arith.constant 0 : index
      %10 = vector.load %arg2[%c0_8, %c0_9] : memref<16x32xbf16, #tpu.memory_space<vmem>>, vector<16x32xbf16>
      %11 = arith.extf %10 : vector<16x32xbf16> to vector<16x32xf32>
      %c0_10 = arith.constant 0 : index
      %c0_11 = arith.constant 0 : index
      %12 = vector.load %arg3[%c0_10, %c0_11] : memref<1x32xf32, #tpu.memory_space<vmem>>, vector<1x32xf32>
      %c0_12 = arith.constant 0 : index
      %c0_13 = arith.constant 0 : index
      %13 = vector.load %arg4[%c0_12, %c0_13] : memref<1x32xf32, #tpu.memory_space<vmem>>, vector<1x32xf32>
      %cst_14 = arith.constant dense<0.000000e+00> : vector<16xf32>
      %14 = vector.multi_reduction <add>, %11, %cst_14 [1] : vector<16x32xf32> to vector<16xf32>
      %15 = vector.shape_cast %14 : vector<16xf32> to vector<16x1xf32>
      %cst_15 = arith.constant 3.200000e+01 : f32
      %16 = vector.broadcast %cst_15 : f32 to vector<16x1xf32>
      %17 = arith.divf %15, %16 : vector<16x1xf32>
      %18 = vector.broadcast %17 : vector<16x1xf32> to vector<16x32xf32>
      %19 = arith.subf %11, %18 : vector<16x32xf32>
      %20 = arith.mulf %19, %19 : vector<16x32xf32>
      %cst_16 = arith.constant dense<0.000000e+00> : vector<16xf32>
      %21 = vector.multi_reduction <add>, %20, %cst_16 [1] : vector<16x32xf32> to vector<16xf32>
      %22 = vector.shape_cast %21 : vector<16xf32> to vector<16x1xf32>
      %cst_17 = arith.constant 3.200000e+01 : f32
      %23 = vector.broadcast %cst_17 : f32 to vector<16x1xf32>
      %24 = arith.divf %22, %23 : vector<16x1xf32>
      %cst_18 = arith.constant 9.99999974E-6 : f32
      %25 = vector.broadcast %cst_18 : f32 to vector<16x1xf32>
      %26 = arith.addf %24, %25 : vector<16x1xf32>
      %27 = math.rsqrt %26 : vector<16x1xf32>
      %28 = vector.broadcast %27 : vector<16x1xf32> to vector<16x32xf32>
      %29 = arith.mulf %19, %28 : vector<16x32xf32>
      %30 = vector.broadcast %12 : vector<1x32xf32> to vector<16x32xf32>
      %31 = arith.mulf %29, %30 : vector<16x32xf32>
      %32 = vector.broadcast %13 : vector<1x32xf32> to vector<16x32xf32>
      %33 = arith.addf %31, %32 : vector<16x32xf32>
      %34 = arith.truncf %33 : vector<16x32xf32> to vector<16x32xbf16>
      %c0_19 = arith.constant 0 : index
      %c0_20 = arith.constant 0 : index
      %35 = vector.load %arg8[%c0_19, %c0_20] : memref<16x32xbf16, #tpu.memory_space<vmem>>, vector<16x32xbf16>
      tpu.vector_store %arg8[%c0_19, %c0_20], %34 {strides = array<i32>} : memref<16x32xbf16, #tpu.memory_space<vmem>>, vector<16x32xbf16>,
    } else {
    }
    %c0 = arith.constant 0 : index
    %c0_1 = arith.constant 0 : index
    %3 = vector.load %arg8[%c0, %c0_1] : memref<16x32xbf16, #tpu.memory_space<vmem>>, vector<16x32xbf16>
    %c0_2 = arith.constant 0 : index
    %c0_3 = arith.constant 0 : index
    %4 = vector.load %arg5[%c0_2, %c0_3] : memref<32x128xbf16, #tpu.memory_space<vmem>>, vector<32x128xbf16>
    %cst = arith.constant dense<0.000000e+00> : vector<16x128xf32>
    %5 = tpu.matmul %3, %4, %cst {dimension_numbers = #tpu.dot_dimension_numbers<[1], [0], [0], [1], [0, 0, 1, 1], [], []>} : vector<16x32xbf16>, vector<32x128xbf16>, vector<16x128xf32> -> vector<16x128xf32>
    %c0_4 = arith.constant 0 : index
    %c0_5 = arith.constant 0 : index
    %6 = vector.load %arg6[%c0_4, %c0_5] : memref<1x128xf32, #tpu.memory_space<vmem>>, vector<1x128xf32>
    %7 = vector.broadcast %6 : vector<1x128xf32> to vector<16x128xf32>
    %8 = arith.addf %5, %7 : vector<16x128xf32>
    %c0_6 = arith.constant 0 : index
    %c0_7 = arith.constant 0 : index
    %9 = vector.load %arg7[%c0_6, %c0_7] : memref<16x128xf32, #tpu.memory_space<vmem>>, vector<16x128xf32>
    tpu.vector_store %arg7[%c0_6, %c0_7], %8 {strides = array<i32>} : memref<16x128xf32, #tpu.memory_space<vmem>>, vector<16x128xf32>,
    return
  }
  func.func @transform_0(%arg0: i32, %arg1: i32) -> (i32, i32) {
    %c0_i32 = arith.constant 0 : i32
    %c0_i32_0 = arith.constant 0 : i32
    return %arg0, %c0_i32 : i32, i32
  }
  func.func @transform_1(%arg0: i32, %arg1: i32) -> (i32, i32) {
    %c0_i32 = arith.constant 0 : i32
    %c0_i32_0 = arith.constant 0 : i32
    %c0_i32_1 = arith.constant 0 : i32
    return %c0_i32, %c0_i32_0 : i32, i32
  }
  func.func @transform_2(%arg0: i32, %arg1: i32) -> (i32, i32) {
    %c0_i32 = arith.constant 0 : i32
    %c0_i32_0 = arith.constant 0 : i32
    %c0_i32_1 = arith.constant 0 : i32
    return %c0_i32, %c0_i32_0 : i32, i32
  }
  func.func @transform_3(%arg0: i32, %arg1: i32) -> (i32, i32) {
    %c0_i32 = arith.constant 0 : i32
    %c0_i32_0 = arith.constant 0 : i32
    return %c0_i32, %arg1 : i32, i32
  }
  func.func @transform_4(%arg0: i32, %arg1: i32) -> (i32, i32) {
    %c0_i32 = arith.constant 0 : i32
    %c0_i32_0 = arith.constant 0 : i32
    return %c0_i32, %arg1 : i32, i32
  }
  func.func @transform_5(%arg0: i32, %arg1: i32) -> (i32, i32) {
    %c0_i32 = arith.constant 0 : i32
    return %arg0, %arg1 : i32, i32
  }
}

</mosaic_0001>

<llo_original>
// kernel: transformer_forward.14
$region0: #{transformer_forward.14}
  #allocation0 [shape = 'u32[]', space=smem, size = 0x4, offset = 0x4, fixed_abs, tag = 'smem constant byte address 0x4 - core index']
  #allocation1 [shape = 'u32[72,128]{1,0:T(1,128)}', space=vmem, size = 0x9000, scoped, tag = 'internal scratch']
  #allocation2 [shape = 'f32[16,32]{1,0:T(8,128)}', space=vmem, size = 0x2000, scoped, tag = 'scratch operand']
  %s0 = inlined_call_operand.vmem [shape: bf16[16,32], index: 0, kind: input, shape index: {}]
  %s1 = inlined_call_operand.vmem [shape: bf16[32,64], index: 1, kind: input, shape index: {}]
  %s2 = inlined_call_operand.vmem [shape: f32[1,64], index: 2, kind: input, shape index: {}]
  %s3 = inlined_call_operand.vmem [shape: bf16[64,32], index: 3, kind: input, shape index: {}]
  %s4 = inlined_call_operand.vmem [shape: f32[1,32], index: 4, kind: input, shape index: {}]
  %s5 = inlined_call_operand.vmem [shape: f32[1,32], index: 5, kind: input, shape index: {}]
  %s6 = inlined_call_operand.vmem [shape: f32[1,32], index: 6, kind: input, shape index: {}]
  %s7 = inlined_call_operand.hbm [shape: f32[1,32], index: 7, kind: input, shape index: {}]
  %s8 = inlined_call_operand.hbm [shape: f32[1,32], index: 8, kind: input, shape index: {}]
  %s9 = inlined_call_operand.vmem [shape: bf16[16,32], index: 9, kind: output, shape index: {}]
  %s10 = sld [smem:[#allocation0]]
  $region62: #{transformer_forward.14} parent=0
    _
  %s12 = ssub.s32 1, %s10
  %s13 = scalar_select 0, %s12, %s10
  $region1: #{transformer_forward.14} parent=0
    #allocation3 [shape = 'u8[512]{0}', space=vmem, size = 0x400, scoped, tag = 'input window, operand 7, single buffered']
    #allocation4 [shape = 's32[1]{0}', space=sflag, size = 0x4, scoped, tag = 'scoped memory for transformer_forward.14']
    #allocation5 [shape = 'u8[512]{0}', space=vmem, size = 0x400, scoped, tag = 'input window, operand 8, single buffered']
    #allocation6 [shape = 's32[1]{0}', space=sflag, size = 0x4, scoped, tag = 'scoped memory for transformer_forward.14']
    %14 = vsyncpa [#allocation4], 0
    %15 = vsyncpa [#allocation6], 0
    // Predicated region
    $region2: #{transformer_forward.14} parent=1 // pred_check
      _
    $region3: #{transformer_forward.14} parent=1 // pred_check_branch
      %17 = sbr.rel (0) target = $region5
    $region4: #{transformer_forward.14} parent=1 // pred_region
      _
    $region5: #{transformer_forward.14} parent=1 // pred_fallthru
      _
    // Predicated region
    $region6: #{transformer_forward.14} parent=1 // pred_check
      _
    $region7: #{transformer_forward.14} parent=1 // pred_check_branch
      %19 = sbr.rel (0) target = $region9
    $region8: #{transformer_forward.14} parent=1 // pred_region
      _
    $region9: #{transformer_forward.14} parent=1 // pred_fallthru
      _
    // Predicated region
    $region10: #{transformer_forward.14} parent=1 // pred_check
      _
    $region11: #{transformer_forward.14} parent=1 // pred_check_branch
      %21 = sbr.rel (0) target = $region13
    $region12: #{transformer_forward.14} parent=1 // pred_region
      _
    $region13: #{transformer_forward.14} parent=1 // pred_fallthru
      _
    // Predicated region
    $region14: #{transformer_forward.14} parent=1 // pred_check
      _
    $region15: #{transformer_forward.14} parent=1 // pred_check_branch
      %23 = sbr.rel (0) target = $region17
    $region16: #{transformer_forward.14} parent=1 // pred_region
      _
    $region17: #{transformer_forward.14} parent=1 // pred_fallthru
      _
    // Predicated region
    $region18: #{transformer_forward.14} parent=1 // pred_check
      _
    $region19: #{transformer_forward.14} parent=1 // pred_check_branch
      %25 = sbr.rel (0) target = $region21
    $region20: #{transformer_forward.14} parent=1 // pred_region
      _
    $region21: #{transformer_forward.14} parent=1 // pred_fallthru
      _
    // Predicated region
    $region22: #{transformer_forward.14} parent=1 // pred_check
      _
    $region23: #{transformer_forward.14} parent=1 // pred_check_branch
      %27 = sbr.rel (0) target = $region25
    $region24: #{transformer_forward.14} parent=1 // pred_region
      _
    $region25: #{transformer_forward.14} parent=1 // pred_fallthru
      _
    // Predicated region
    $region26: #{transformer_forward.14} parent=1 // pred_check
      _
    $region27: #{transformer_forward.14} parent=1 // pred_check_branch
      %29 = sbr.rel (0) target = $region29
    $region28: #{transformer_forward.14} parent=1 // pred_region
      _
    $region29: #{transformer_forward.14} parent=1 // pred_fallthru
      _
    // Predicated region
    $region30: #{transformer_forward.14} parent=1 // pred_check
      _
    $region31: #{transformer_forward.14} parent=1 // pred_check_branch
      %31 = sbr.rel (0) target = $region33
    $region32: #{transformer_forward.14} parent=1 // pred_region
      %33 = vsyncadd [#allocation4], 0
      %s35 = sshll.u32 %s7, 4
      %s36 = int_to_ptr.hbm [resolvable:$true] %s35
      %s37 = sshll.u32 [#allocation3], 4
      %s38 = int_to_ptr.vmem [resolvable:$true] %s37
      %40 = dma.hbm_to_vmem [thread:$0]  %s36, 16, %s38, [#allocation4]
    $region33: #{transformer_forward.14} parent=1 // pred_fallthru
      _
    // Predicated region
    $region34: #{transformer_forward.14} parent=1 // pred_check
      _
    $region35: #{transformer_forward.14} parent=1 // pred_check_branch
      %42 = sbr.rel (0) target = $region37
    $region36: #{transformer_forward.14} parent=1 // pred_region
      %44 = vsyncadd [#allocation6], 0
      %s46 = sshll.u32 %s8, 4
      %s47 = int_to_ptr.hbm [resolvable:$true] %s46
      %s48 = sshll.u32 [#allocation5], 4
      %s49 = int_to_ptr.vmem [resolvable:$true] %s48
      %51 = dma.hbm_to_vmem [thread:$0]  %s47, 16, %s49, [#allocation6]
    $region37: #{transformer_forward.14} parent=1 // pred_fallthru
      _
    // Predicated region
    $region38: #{transformer_forward.14} parent=1 // pred_check
      _
    $region39: #{transformer_forward.14} parent=1 // pred_check_branch
      %53 = sbr.rel (0) target = $region41
    $region40: #{transformer_forward.14} parent=1 // pred_region
      %55 = dma.done [#allocation4], 16
    $region41: #{transformer_forward.14} parent=1 // pred_fallthru
      _
    // Predicated region
    $region42: #{transformer_forward.14} parent=1 // pred_check
      _
    $region43: #{transformer_forward.14} parent=1 // pred_check_branch
      %57 = sbr.rel (0) target = $region45
    $region44: #{transformer_forward.14} parent=1 // pred_region
      %59 = dma.done [#allocation6], 16
    $region45: #{transformer_forward.14} parent=1 // pred_fallthru
      _
    %p61 = scmp.eq.s32.totalorder 0, 0
    // Predicated region
    $region46: #{transformer_forward.14} parent=1 // pred_check
      %p62 = pneg %p61
    $region47: #{transformer_forward.14} parent=1 // pred_check_branch
      %64 = sbr.rel (%p62) target = $region49
    $region48: #{transformer_forward.14} parent=1 // pred_region
      %vm65 = vcmask 261120
      %66 = vst.msk [vmem:[#allocation2] sm:$0xff] %vm65, 0.0
      %67 = vst.msk [vmem:[#allocation2 + $0x8] sm:$0xff] %vm65, 0.0
    $region49: #{transformer_forward.14} parent=1 // pred_fallthru
      _
    %v68 = vld [vmem:[%s0] sm:$0xf]
    %v69 = vld [vmem:[%s0 + $0x4] sm:$0xf]
    %v70 = vld [vmem:[%s1] sm:$0xf]
    %v71 = vld [vmem:[%s1 + $0x4] sm:$0xf]
    %v72 = vld [vmem:[%s1 + $0x8] sm:$0xf]
    %v73 = vld [vmem:[%s1 + $0xc] sm:$0xf]
    %v74 = vld [vmem:[%s2] sm:$0x1]
    %v76 = vperm.slane %v74, 0
    %v80 = vunpack.c.l.b16 %v68
    %v81 = vunpack.c.l.b16 %v69
    %v82 = vpack.c.b16 %v81, %v80
    %v87 = vunpack.c.l.b16 %v70
    %v88 = vunpack.c.l.b16 %v71
    %v89 = vunpack.c.l.b16 %v72
    %v90 = vunpack.c.l.b16 %v73
    %v91 = vpack.c.b16 %v88, %v87
    %v92 = vpack.c.b16 %v90, %v89
    %vm95 = vcmask 261120
    %v97 = vsel %vm95, %v82, 0
    %99 = vmatpush.bf16.msra.mxu0 0
    %100 = vmatpush.bf16.msra.mxu0 0
    %101 = vmatpush.bf16.msra.mxu0 0
    %102 = vmatpush.bf16.msra.mxu0 0
    %103 = vmatpush.bf16.msra.mxu0 0
    %104 = vmatpush.bf16.msra.mxu0 0
    %105 = vmatpush.bf16.msra.mxu0 %v92
    %106 = vmatpush.bf16.msra.mxu0 %v91
    %107 = vmatmul.bf16.gmra.mxu0 %v97
    %v108 = vpop.f32.mrf.mxu0
    %v109 = vadd.f32 %v76, %v108
    %v110 = vpop.f32.mrf.mxu0
    %v111 = vadd.f32 %v76, %v110
    %112 = vdwg.mxu0
    %v113 = vmax.f32 %v109, 0.0
    %v114 = vmax.f32 %v111, 0.0
    %v115 = vpack.c.bf16 %v114, %v113
    %v116 = vld [vmem:[#allocation2] sm:$0xff]
    %v117 = vld [vmem:[#allocation2 + $0x8] sm:$0xff]
    %v118 = vld [vmem:[%s3] sm:$0xf]
    %v119 = vld [vmem:[%s3 + $0x4] sm:$0xf]
    %v120 = vld [vmem:[%s3 + $0x8] sm:$0xf]
    %v121 = vld [vmem:[%s3 + $0xc] sm:$0xf]
    %v122 = vld [vmem:[%s3 + $0x10] sm:$0xf]
    %v123 = vld [vmem:[%s3 + $0x14] sm:$0xf]
    %v124 = vld [vmem:[%s3 + $0x18] sm:$0xf]
    %v125 = vld [vmem:[%s3 + $0x1c] sm:$0xf]
    %v134 = vunpack.c.l.b16 %v118
    %v135 = vunpack.c.l.b16 %v119
    %v136 = vunpack.c.l.b16 %v120
    %v137 = vunpack.c.l.b16 %v121
    %v138 = vunpack.c.l.b16 %v122
    %v139 = vunpack.c.l.b16 %v123
    %v140 = vunpack.c.l.b16 %v124
    %v141 = vunpack.c.l.b16 %v125
    %v142 = vpack.c.b16 %v135, %v134
    %v143 = vpack.c.b16 %v137, %v136
    %v144 = vpack.c.b16 %v139, %v138
    %v145 = vpack.c.b16 %v141, %v140
    %vm150 = vcmask 523264
    %v152 = vsel %vm150, %v115, 0
    %154 = vmatpush.bf16.msra.mxu0 0
    %155 = vmatpush.bf16.msra.mxu0 0
    %156 = vmatpush.bf16.msra.mxu0 0
    %157 = vmatpush.bf16.msra.mxu0 0
    %158 = vmatpush.bf16.msra.mxu0 %v145
    %159 = vmatpush.bf16.msra.mxu0 %v144
    %160 = vmatpush.bf16.msra.mxu0 %v143
    %161 = vmatpush.bf16.msra.mxu0 %v142
    %162 = vmatmul.bf16.gmra.mxu0 %v152
    %v163 = vpop.f32.mrf.mxu0
    %v164 = vadd.f32 0.0, %v163
    %v165 = vpop.f32.mrf.mxu0
    %v166 = vadd.f32 0.0, %v165
    %167 = vdwg.mxu0
    %v168 = vadd.f32 %v116, %v164
    %v169 = vadd.f32 %v117, %v166
    %170 = vst.msk [vmem:[#allocation2] sm:$0xff] %vm95, %v168
    %171 = vst.msk [vmem:[#allocation2 + $0x8] sm:$0xff] %vm95, %v169
    // Predicated region
    $region50: #{transformer_forward.14} parent=1 // pred_check
      %p172 = pneg %p61
    $region51: #{transformer_forward.14} parent=1 // pred_check_branch
      %174 = sbr.rel (%p172) target = $region53
    $region52: #{transformer_forward.14} parent=1 // pred_region
      %v175 = vunpack.c.l.bf16 %v68
      %v176 = vunpack.c.l.bf16 %v69
      %v177 = vld [vmem:[#allocation2] sm:$0xff]
      %v178 = vld [vmem:[#allocation2 + $0x8] sm:$0xff]
      %v179 = vadd.f32 %v175, %v177
      %v180 = vadd.f32 %v176, %v178
      %v181 = vld [vmem:[%s4] sm:$0x1]
      %v183 = vperm.slane %v181, 0
      %v185 = vadd.f32 %v179, %v183
      %v186 = vadd.f32 %v180, %v183
      %v187 = vld [vmem:[%s5] sm:$0x1]
      %v188 = vld [vmem:[%s6] sm:$0x1]
      %v189 = vsel %vm95, %v185, 0.0
      %190 = vadd.xlane.f32.xlu0 %v189
      %v191 = vpop.xlane.xlu0 %190
      %v192 = vsel %vm95, %v186, 0.0
      %193 = vadd.xlane.f32.xlu0 %v192
      %v194 = vpop.xlane.xlu0 %193
      %v195 = vrcp.pop 32.0
      %v196 = vmul.f32 32.0, %v195
      %v197 = vsub.f32 1.0, %v196
      %v198 = vmul.f32 %v195, %v197
      %v199 = vadd.f32 %v195, %v198
      %vm200 = vweird.f32 %v195
      %v201 = vsel %vm200, %v195, %v199
      %v202 = vmul.f32 %v191, %v201
      %v203 = vmul.f32 %v194, %v201
      %v204 = vsub.f32 %v185, %v202
      %v205 = vsub.f32 %v186, %v203
      %v206 = vmul.f32 %v204, %v204
      %v207 = vmul.f32 %v205, %v205
      %v208 = vsel %vm95, %v206, 0.0
      %209 = vadd.xlane.f32.xlu0 %v208
      %v210 = vpop.xlane.xlu0 %209
      %v211 = vsel %vm95, %v207, 0.0
      %212 = vadd.xlane.f32.xlu0 %v211
      %v213 = vpop.xlane.xlu0 %212
      %v214 = vmul.f32 %v210, %v201
      %v215 = vmul.f32 %v213, %v201
      %v216 = vadd.f32 %v214, 1e-05
      %v217 = vadd.f32 %v215, 1e-05
      %v218 = vrsqrt.pop %v216
      %v219 = vmul.f32 %v218, %v216
      %v220 = vmul.f32 %v219, %v218
      %v221 = vmul.f32 0.5, %v220
      %v222 = vsub.f32 1.5, %v221
      %v223 = vmul.f32 %v218, %v222
      %vm224 = vweird.f32 %v216
      %vm225 = vweird.f32 %v218
      %vm226 = vmor %vm224, %vm225
      %v227 = vsel %vm226, %v218, %v223
      %v228 = vrsqrt.pop %v217
      %v229 = vmul.f32 %v228, %v217
      %v230 = vmul.f32 %v229, %v228
      %v231 = vmul.f32 0.5, %v230
      %v232 = vsub.f32 1.5, %v231
      %v233 = vmul.f32 %v228, %v232
      %vm234 = vweird.f32 %v217
      %vm235 = vweird.f32 %v228
      %vm236 = vmor %vm234, %vm235
      %v237 = vsel %vm236, %v228, %v233
      %v238 = vmul.f32 %v204, %v227
      %v239 = vmul.f32 %v205, %v237
      %v241 = vperm.slane %v187, 0
      %v243 = vmul.f32 %v238, %v241
      %v244 = vmul.f32 %v239, %v241
      %v246 = vperm.slane %v188, 0
      %v248 = vadd.f32 %v243, %v246
      %v249 = vadd.f32 %v244, %v246
      %v250 = vld [vmem:[#allocation3] sm:$0x1]
      %v251 = vld [vmem:[#allocation5] sm:$0x1]
      %v252 = vsel %vm95, %v248, 0.0
      %253 = vadd.xlane.f32.xlu0 %v252
      %v254 = vpop.xlane.xlu0 %253
      %v255 = vsel %vm95, %v249, 0.0
      %256 = vadd.xlane.f32.xlu0 %v255
      %v257 = vpop.xlane.xlu0 %256
      %v258 = vmul.f32 %v254, %v201
      %v259 = vmul.f32 %v257, %v201
      %v260 = vsub.f32 %v248, %v258
      %v261 = vsub.f32 %v249, %v259
      %v262 = vmul.f32 %v260, %v260
      %v263 = vmul.f32 %v261, %v261
      %v264 = vsel %vm95, %v262, 0.0
      %265 = vadd.xlane.f32.xlu0 %v264
      %v266 = vpop.xlane.xlu0 %265
      %v267 = vsel %vm95, %v263, 0.0
      %268 = vadd.xlane.f32.xlu0 %v267
      %v269 = vpop.xlane.xlu0 %268
      %v270 = vmul.f32 %v266, %v201
      %v271 = vmul.f32 %v269, %v201
      %v272 = vadd.f32 %v270, 1e-05
      %v273 = vadd.f32 %v271, 1e-05
      %v274 = vrsqrt.pop %v272
      %v275 = vmul.f32 %v274, %v272
      %v276 = vmul.f32 %v275, %v274
      %v277 = vmul.f32 0.5, %v276
      %v278 = vsub.f32 1.5, %v277
      %v279 = vmul.f32 %v274, %v278
      %vm280 = vweird.f32 %v272
      %vm281 = vweird.f32 %v274
      %vm282 = vmor %vm280, %vm281
      %v283 = vsel %vm282, %v274, %v279
      %v284 = vrsqrt.pop %v273
      %v285 = vmul.f32 %v284, %v273
      %v286 = vmul.f32 %v285, %v284
      %v287 = vmul.f32 0.5, %v286
      %v288 = vsub.f32 1.5, %v287
      %v289 = vmul.f32 %v284, %v288
      %vm290 = vweird.f32 %v273
      %vm291 = vweird.f32 %v284
      %vm292 = vmor %vm290, %vm291
      %v293 = vsel %vm292, %v284, %v289
      %v294 = vmul.f32 %v260, %v283
      %v295 = vmul.f32 %v261, %v293
      %v297 = vperm.slane %v250, 0
      %v299 = vmul.f32 %v294, %v297
      %v300 = vmul.f32 %v295, %v297
      %v302 = vperm.slane %v251, 0
      %v304 = vadd.f32 %v299, %v302
      %v305 = vadd.f32 %v300, %v302
      %v306 = vpack.c.bf16 %v304, %v304
      %v307 = vpack.c.bf16 %v305, %v305
      %vm308 = vcmask 257024
      %309 = vst.msk [vmem:[%s9] sm:$0xf] %vm308, %v306
      %310 = vst.msk [vmem:[%s9 + $0x4] sm:$0xf] %vm308, %v307
    $region53: #{transformer_forward.14} parent=1 // pred_fallthru
      _
    // Predicated region
    $region54: #{transformer_forward.14} parent=1 // pred_check
      _
    $region55: #{transformer_forward.14} parent=1 // pred_check_branch
      %312 = sbr.rel (0) target = $region57
    $region56: #{transformer_forward.14} parent=1 // pred_region
      _
    $region57: #{transformer_forward.14} parent=1 // pred_fallthru
      _
    // Predicated region
    $region58: #{transformer_forward.14} parent=1 // pred_check
      _
    $region59: #{transformer_forward.14} parent=1 // pred_check_branch
      %314 = sbr.rel (0) target = $region61
    $region60: #{transformer_forward.14} parent=1 // pred_region
      _
    $region61: #{transformer_forward.14} parent=1 // pred_fallthru
      _
    %315 = vsyncpa [#allocation4], 1
    %316 = vsyncpa [#allocation6], 1

// kernel: transformer_forward.12
$region0: #{transformer_forward.12}
  #allocation0 [shape = 'u32[]', space=smem, size = 0x4, offset = 0x4, fixed_abs, tag = 'smem constant byte address 0x4 - core index']
  #allocation1 [shape = 'u32[72,128]{1,0:T(1,128)}', space=vmem, size = 0x9000, scoped, tag = 'internal scratch']
  #allocation2 [shape = 'f32[16,32]{1,0:T(8,128)}', space=vmem, size = 0x2000, scoped, tag = 'scratch operand']
  %s0 = inlined_call_operand.vmem [shape: bf16[16,32], index: 0, kind: input, shape index: {}]
  %s1 = inlined_call_operand.vmem [shape: bf16[32,64], index: 1, kind: input, shape index: {}]
  %s2 = inlined_call_operand.vmem [shape: f32[1,64], index: 2, kind: input, shape index: {}]
  %s3 = inlined_call_operand.vmem [shape: bf16[64,32], index: 3, kind: input, shape index: {}]
  %s4 = inlined_call_operand.vmem [shape: f32[1,32], index: 4, kind: input, shape index: {}]
  %s5 = inlined_call_operand.vmem [shape: f32[1,32], index: 5, kind: input, shape index: {}, may-alias: {5,7}]
  %s6 = inlined_call_operand.vmem [shape: f32[1,32], index: 6, kind: input, shape index: {}, may-alias: {6,8}]
  %s7 = inlined_call_operand.vmem [shape: f32[1,32], index: 7, kind: input, shape index: {}, may-alias: {5,7}]
  %s8 = inlined_call_operand.vmem [shape: f32[1,32], index: 8, kind: input, shape index: {}, may-alias: {6,8}]
  %s9 = inlined_call_operand.vmem [shape: bf16[16,32], index: 9, kind: output, shape index: {}]
  %s10 = sld [smem:[#allocation0]]
  $region54: #{transformer_forward.12} parent=0
    _
  %s12 = ssub.s32 1, %s10
  %s13 = scalar_select 0, %s12, %s10
  // Predicated region
  $region2: #{transformer_forward.12} parent=0 // pred_check
    _
  $region3: #{transformer_forward.12} parent=0 // pred_check_branch
    %15 = sbr.rel (0) target = $region5
  $region4: #{transformer_forward.12} parent=0 // pred_region
    _
  $region5: #{transformer_forward.12} parent=0 // pred_fallthru
    _
  // Predicated region
  $region6: #{transformer_forward.12} parent=0 // pred_check
    _
  $region7: #{transformer_forward.12} parent=0 // pred_check_branch
    %17 = sbr.rel (0) target = $region9
  $region8: #{transformer_forward.12} parent=0 // pred_region
    _
  $region9: #{transformer_forward.12} parent=0 // pred_fallthru
    _
  // Predicated region
  $region10: #{transformer_forward.12} parent=0 // pred_check
    _
  $region11: #{transformer_forward.12} parent=0 // pred_check_branch
    %19 = sbr.rel (0) target = $region13
  $region12: #{transformer_forward.12} parent=0 // pred_region
    _
  $region13: #{transformer_forward.12} parent=0 // pred_fallthru
    _
  // Predicated region
  $region14: #{transformer_forward.12} parent=0 // pred_check
    _
  $region15: #{transformer_forward.12} parent=0 // pred_check_branch
    %21 = sbr.rel (0) target = $region17
  $region16: #{transformer_forward.12} parent=0 // pred_region
    _
  $region17: #{transformer_forward.12} parent=0 // pred_fallthru
    _
  // Predicated region
  $region18: #{transformer_forward.12} parent=0 // pred_check
    _
  $region19: #{transformer_forward.12} parent=0 // pred_check_branch
    %23 = sbr.rel (0) target = $region21
  $region20: #{transformer_forward.12} parent=0 // pred_region
    _
  $region21: #{transformer_forward.12} parent=0 // pred_fallthru
    _
  // Predicated region
  $region22: #{transformer_forward.12} parent=0 // pred_check
    _
  $region23: #{transformer_forward.12} parent=0 // pred_check_branch
    %25 = sbr.rel (0) target = $region25
  $region24: #{transformer_forward.12} parent=0 // pred_region
    _
  $region25: #{transformer_forward.12} parent=0 // pred_fallthru
    _
  // Predicated region
  $region26: #{transformer_forward.12} parent=0 // pred_check
    _
  $region27: #{transformer_forward.12} parent=0 // pred_check_branch
    %27 = sbr.rel (0) target = $region29
  $region28: #{transformer_forward.12} parent=0 // pred_region
    _
  $region29: #{transformer_forward.12} parent=0 // pred_fallthru
    _
  // Predicated region
  $region30: #{transformer_forward.12} parent=0 // pred_check
    _
  $region31: #{transformer_forward.12} parent=0 // pred_check_branch
    %29 = sbr.rel (0) target = $region33
  $region32: #{transformer_forward.12} parent=0 // pred_region
    _
  $region33: #{transformer_forward.12} parent=0 // pred_fallthru
    _
  // Predicated region
  $region34: #{transformer_forward.12} parent=0 // pred_check
    _
  $region35: #{transformer_forward.12} parent=0 // pred_check_branch
    %31 = sbr.rel (0) target = $region37
  $region36: #{transformer_forward.12} parent=0 // pred_region
    _
  $region37: #{transformer_forward.12} parent=0 // pred_fallthru
    _
  %p33 = scmp.eq.s32.totalorder 0, 0
  // Predicated region
  $region38: #{transformer_forward.12} parent=0 // pred_check
    %p34 = pneg %p33
  $region39: #{transformer_forward.12} parent=0 // pred_check_branch
    %36 = sbr.rel (%p34) target = $region41
  $region40: #{transformer_forward.12} parent=0 // pred_region
    %vm37 = vcmask 261120
    %38 = vst.msk [vmem:[#allocation2] sm:$0xff] %vm37, 0.0
    %39 = vst.msk [vmem:[#allocation2 + $0x8] sm:$0xff] %vm37, 0.0
  $region41: #{transformer_forward.12} parent=0 // pred_fallthru
    _
  %v40 = vld [vmem:[%s0] sm:$0xf]
  %v41 = vld [vmem:[%s0 + $0x4] sm:$0xf]
  %v42 = vld [vmem:[%s1] sm:$0xf]
  %v43 = vld [vmem:[%s1 + $0x4] sm:$0xf]
  %v44 = vld [vmem:[%s1 + $0x8] sm:$0xf]
  %v45 = vld [vmem:[%s1 + $0xc] sm:$0xf]
  %v46 = vld [vmem:[%s2] sm:$0x1]
  %v48 = vperm.slane %v46, 0
  %v52 = vunpack.c.l.b16 %v40
  %v53 = vunpack.c.l.b16 %v41
  %v54 = vpack.c.b16 %v53, %v52
  %v59 = vunpack.c.l.b16 %v42
  %v60 = vunpack.c.l.b16 %v43
  %v61 = vunpack.c.l.b16 %v44
  %v62 = vunpack.c.l.b16 %v45
  %v63 = vpack.c.b16 %v60, %v59
  %v64 = vpack.c.b16 %v62, %v61
  %vm67 = vcmask 261120
  %v69 = vsel %vm67, %v54, 0
  %71 = vmatpush.bf16.msra.mxu0 0
  %72 = vmatpush.bf16.msra.mxu0 0
  %73 = vmatpush.bf16.msra.mxu0 0
  %74 = vmatpush.bf16.msra.mxu0 0
  %75 = vmatpush.bf16.msra.mxu0 0
  %76 = vmatpush.bf16.msra.mxu0 0
  %77 = vmatpush.bf16.msra.mxu0 %v64
  %78 = vmatpush.bf16.msra.mxu0 %v63
  %79 = vmatmul.bf16.gmra.mxu0 %v69
  %v80 = vpop.f32.mrf.mxu0
  %v81 = vadd.f32 %v48, %v80
  %v82 = vpop.f32.mrf.mxu0
  %v83 = vadd.f32 %v48, %v82
  %84 = vdwg.mxu0
  %v85 = vmax.f32 %v81, 0.0
  %v86 = vmax.f32 %v83, 0.0
  %v87 = vpack.c.bf16 %v86, %v85
  %v88 = vld [vmem:[#allocation2] sm:$0xff]
  %v89 = vld [vmem:[#allocation2 + $0x8] sm:$0xff]
  %v90 = vld [vmem:[%s3] sm:$0xf]
  %v91 = vld [vmem:[%s3 + $0x4] sm:$0xf]
  %v92 = vld [vmem:[%s3 + $0x8] sm:$0xf]
  %v93 = vld [vmem:[%s3 + $0xc] sm:$0xf]
  %v94 = vld [vmem:[%s3 + $0x10] sm:$0xf]
  %v95 = vld [vmem:[%s3 + $0x14] sm:$0xf]
  %v96 = vld [vmem:[%s3 + $0x18] sm:$0xf]
  %v97 = vld [vmem:[%s3 + $0x1c] sm:$0xf]
  %v106 = vunpack.c.l.b16 %v90
  %v107 = vunpack.c.l.b16 %v91
  %v108 = vunpack.c.l.b16 %v92
  %v109 = vunpack.c.l.b16 %v93
  %v110 = vunpack.c.l.b16 %v94
  %v111 = vunpack.c.l.b16 %v95
  %v112 = vunpack.c.l.b16 %v96
  %v113 = vunpack.c.l.b16 %v97
  %v114 = vpack.c.b16 %v107, %v106
  %v115 = vpack.c.b16 %v109, %v108
  %v116 = vpack.c.b16 %v111, %v110
  %v117 = vpack.c.b16 %v113, %v112
  %vm122 = vcmask 523264
  %v124 = vsel %vm122, %v87, 0
  %126 = vmatpush.bf16.msra.mxu0 0
  %127 = vmatpush.bf16.msra.mxu0 0
  %128 = vmatpush.bf16.msra.mxu0 0
  %129 = vmatpush.bf16.msra.mxu0 0
  %130 = vmatpush.bf16.msra.mxu0 %v117
  %131 = vmatpush.bf16.msra.mxu0 %v116
  %132 = vmatpush.bf16.msra.mxu0 %v115
  %133 = vmatpush.bf16.msra.mxu0 %v114
  %134 = vmatmul.bf16.gmra.mxu0 %v124
  %v135 = vpop.f32.mrf.mxu0
  %v136 = vadd.f32 0.0, %v135
  %v137 = vpop.f32.mrf.mxu0
  %v138 = vadd.f32 0.0, %v137
  %139 = vdwg.mxu0
  %v140 = vadd.f32 %v88, %v136
  %v141 = vadd.f32 %v89, %v138
  %142 = vst.msk [vmem:[#allocation2] sm:$0xff] %vm67, %v140
  %143 = vst.msk [vmem:[#allocation2 + $0x8] sm:$0xff] %vm67, %v141
  // Predicated region
  $region42: #{transformer_forward.12} parent=0 // pred_check
    %p144 = pneg %p33
  $region43: #{transformer_forward.12} parent=0 // pred_check_branch
    %146 = sbr.rel (%p144) target = $region45
  $region44: #{transformer_forward.12} parent=0 // pred_region
    %v147 = vunpack.c.l.bf16 %v40
    %v148 = vunpack.c.l.bf16 %v41
    %v149 = vld [vmem:[#allocation2] sm:$0xff]
    %v150 = vld [vmem:[#allocation2 + $0x8] sm:$0xff]
    %v151 = vadd.f32 %v147, %v149
    %v152 = vadd.f32 %v148, %v150
    %v153 = vld [vmem:[%s4] sm:$0x1]
    %v155 = vperm.slane %v153, 0
    %v157 = vadd.f32 %v151, %v155
    %v158 = vadd.f32 %v152, %v155
    %v159 = vld [vmem:[%s5] sm:$0x1]
    %v160 = vld [vmem:[%s6] sm:$0x1]
    %v161 = vsel %vm67, %v157, 0.0
    %162 = vadd.xlane.f32.xlu0 %v161
    %v163 = vpop.xlane.xlu0 %162
    %v164 = vsel %vm67, %v158, 0.0
    %165 = vadd.xlane.f32.xlu0 %v164
    %v166 = vpop.xlane.xlu0 %165
    %v167 = vrcp.pop 32.0
    %v168 = vmul.f32 32.0, %v167
    %v169 = vsub.f32 1.0, %v168
    %v170 = vmul.f32 %v167, %v169
    %v171 = vadd.f32 %v167, %v170
    %vm172 = vweird.f32 %v167
    %v173 = vsel %vm172, %v167, %v171
    %v174 = vmul.f32 %v163, %v173
    %v175 = vmul.f32 %v166, %v173
    %v176 = vsub.f32 %v157, %v174
    %v177 = vsub.f32 %v158, %v175
    %v178 = vmul.f32 %v176, %v176
    %v179 = vmul.f32 %v177, %v177
    %v180 = vsel %vm67, %v178, 0.0
    %181 = vadd.xlane.f32.xlu0 %v180
    %v182 = vpop.xlane.xlu0 %181
    %v183 = vsel %vm67, %v179, 0.0
    %184 = vadd.xlane.f32.xlu0 %v183
    %v185 = vpop.xlane.xlu0 %184
    %v186 = vmul.f32 %v182, %v173
    %v187 = vmul.f32 %v185, %v173
    %v188 = vadd.f32 %v186, 1e-05
    %v189 = vadd.f32 %v187, 1e-05
    %v190 = vrsqrt.pop %v188
    %v191 = vmul.f32 %v190, %v188
    %v192 = vmul.f32 %v191, %v190
    %v193 = vmul.f32 0.5, %v192
    %v194 = vsub.f32 1.5, %v193
    %v195 = vmul.f32 %v190, %v194
    %vm196 = vweird.f32 %v188
    %vm197 = vweird.f32 %v190
    %vm198 = vmor %vm196, %vm197
    %v199 = vsel %vm198, %v190, %v195
    %v200 = vrsqrt.pop %v189
    %v201 = vmul.f32 %v200, %v189
    %v202 = vmul.f32 %v201, %v200
    %v203 = vmul.f32 0.5, %v202
    %v204 = vsub.f32 1.5, %v203
    %v205 = vmul.f32 %v200, %v204
    %vm206 = vweird.f32 %v189
    %vm207 = vweird.f32 %v200
    %vm208 = vmor %vm206, %vm207
    %v209 = vsel %vm208, %v200, %v205
    %v210 = vmul.f32 %v176, %v199
    %v211 = vmul.f32 %v177, %v209
    %v213 = vperm.slane %v159, 0
    %v215 = vmul.f32 %v210, %v213
    %v216 = vmul.f32 %v211, %v213
    %v218 = vperm.slane %v160, 0
    %v220 = vadd.f32 %v215, %v218
    %v221 = vadd.f32 %v216, %v218
    %v222 = vpack.c.bf16 %v220, %v220
    %v223 = vpack.c.bf16 %v221, %v221
    %vm224 = vcmask 257024
    %225 = vst.msk [vmem:[%s9] sm:$0xf] %vm224, %v222
    %226 = vst.msk [vmem:[%s9 + $0x4] sm:$0xf] %vm224, %v223
  $region45: #{transformer_forward.12} parent=0 // pred_fallthru
    _
  // Predicated region
  $region46: #{transformer_forward.12} parent=0 // pred_check
    _
  $region47: #{transformer_forward.12} parent=0 // pred_check_branch
    %228 = sbr.rel (0) target = $region49
  $region48: #{transformer_forward.12} parent=0 // pred_region
    _
  $region49: #{transformer_forward.12} parent=0 // pred_fallthru
    _
  // Predicated region
  $region50: #{transformer_forward.12} parent=0 // pred_check
    _
  $region51: #{transformer_forward.12} parent=0 // pred_check_branch
    %230 = sbr.rel (0) target = $region53
  $region52: #{transformer_forward.12} parent=0 // pred_region
    _
  $region53: #{transformer_forward.12} parent=0 // pred_fallthru
    _

// kernel: transformer_forward.11
$region0: #{transformer_forward.11}
  #allocation0 [shape = 'u32[]', space=smem, size = 0x4, offset = 0x4, fixed_abs, tag = 'smem constant byte address 0x4 - core index']
  #allocation1 [shape = 'u32[72,128]{1,0:T(1,128)}', space=vmem, size = 0x9000, scoped, tag = 'internal scratch']
  #allocation2 [shape = 'bf16[8,64]{1,0:T(8,128)(2,1)}', space=vmem, size = 0x800, scoped, tag = 'scratch operand']
  %s0 = inlined_call_operand.vmem [shape: bf16[2,8,32], index: 0, kind: input, shape index: {}, may-alias: {0,1}]
  %s1 = inlined_call_operand.vmem [shape: bf16[2,8,32], index: 1, kind: input, shape index: {}, may-alias: {0,1}]
  %s2 = inlined_call_operand.vmem [shape: bf16[32,32], index: 2, kind: input, shape index: {}]
  %s3 = inlined_call_operand.vmem [shape: f32[1,32], index: 3, kind: input, shape index: {}]
  %s4 = inlined_call_operand.vmem [shape: bf16[32,64], index: 4, kind: input, shape index: {}]
  %s5 = inlined_call_operand.vmem [shape: f32[1,64], index: 5, kind: input, shape index: {}]
  %s6 = inlined_call_operand.vmem [shape: bf16[32,32], index: 6, kind: input, shape index: {}]
  %s7 = inlined_call_operand.vmem [shape: f32[1,32], index: 7, kind: input, shape index: {}]
  %s8 = inlined_call_operand.vmem [shape: f32[1,32], index: 8, kind: input, shape index: {}]
  %s9 = inlined_call_operand.vmem [shape: f32[1,32], index: 9, kind: input, shape index: {}]
  %s10 = inlined_call_operand.vmem [shape: bf16[2,8,32], index: 10, kind: output, shape index: {}]
  %s11 = sld [smem:[#allocation0]]
  $region77: #{transformer_forward.11} parent=0
    _
  %s13 = ssub.s32 1, %s11
  %s14 = scalar_select 0, %s13, %s11
  loop: start=0, step=1, limit=4
  $region2: #{transformer_forward.11} parent=0 // loop_pre_header
    _
  $region3: #{transformer_forward.11} parent=0 // loop_header
    %s16 = sphi 0, %s20
    %p17 = scmp.ge.s32.totalorder %s16, 4
    %s23 = sphi 0, %s35
    %s24 = sphi 0, %s31
    %s25 = sphi 0, %s23
    %s26 = sphi 0, %s24
    %s27 = sphi 0, %s25
    %s28 = sphi 0, %s26
    %s40 = sphi 0, %s42
    %s43 = sphi 0, %s40
    %s44 = sphi 0, %s43
    %s60 = sphi 0, %s44
    %s66 = sphi 0, %s68
    %s69 = sphi 0, %s66
    %s70 = sphi 0, %s69
    %s86 = sphi 0, %s70
    %s90 = sphi 0, %s90
    %s92 = sphi 0, %s90
    %s93 = sphi 0, %s92
    %s107 = sphi 0, %s93
    %s111 = sphi 0, %s111
    %s113 = sphi 0, %s111
    %s114 = sphi 0, %s113
    %s128 = sphi 0, %s114
    %s132 = sphi 0, %s132
    %s134 = sphi 0, %s132
    %s135 = sphi 0, %s134
    %s149 = sphi 0, %s135
    %s153 = sphi 0, %s153
    %s155 = sphi 0, %s153
    %s156 = sphi 0, %s155
    %s170 = sphi 0, %s156
    %s174 = sphi 0, %s174
    %s176 = sphi 0, %s174
    %s177 = sphi 0, %s176
    %s191 = sphi 0, %s177
    %s195 = sphi 0, %s195
    %s197 = sphi 0, %s195
    %s198 = sphi 0, %s197
    %s212 = sphi 0, %s198
    %s216 = sphi 0, %s216
    %s218 = sphi 0, %s216
    %s219 = sphi 0, %s218
    %s233 = sphi 0, %s219
    %s237 = sphi 0, %s237
    %s239 = sphi 0, %s237
    %s240 = sphi 0, %s239
    %s254 = sphi 0, %s240
    %s262 = sphi 0, %s264
    %s265 = sphi 0, %s262
    %s266 = sphi 0, %s265
    %s282 = sphi 0, %s266
  $region4: #{transformer_forward.11} parent=0 // loop_header_branch
    %19 = sbr.rel (%p17) target = $region8
  $region5: #{transformer_forward.11} parent=0 // loop_body
    %s21 = ssub.s32 %s16, 1
    %s22 = ssub.s32 %s16, 2
    %s29 = sadd.s32 1, %s24
    %p30 = scmp.ge.s32.totalorder %s29, 1
    %s31 = scalar_select %p30, 0, %s29
    %s32 = sadd.s32 1, %s23
    %s33 = scalar_select %p30, %s32, %s23
    %p34 = scmp.ge.s32.totalorder %s33, 2
    %s35 = scalar_select %p34, 0, %s33
    %s36 = ssub.s32 %s23, %s35
    %s37 = ssub.s32 %s24, %s31
    %s38 = sor.u32 %s36, %s37
    %p39 = scmp.eq.s32.totalorder %s38, 0
    %s41 = sadd.s32 %s40, 1
    %s42 = scalar_select %p39, %s40, %s41
    %p45 = pneg %p39
    %p46 = scmp.eq.s32.totalorder %s16, 1
    %p47 = por %p45, %p46
    %p48 = scmp.ne.s32.totalorder %s40, %s43
    %p49 = scmp.eq.s32.totalorder %s16, 0
    %p50 = por %p48, %p49
    %p51 = scmp.ne.s32.totalorder %s40, %s43
    %p52 = scmp.eq.s32.totalorder %s21, 1
    %p53 = por %p51, %p52
    %p54 = scmp.ne.s32.totalorder %s43, %s44
    %p55 = scmp.eq.s32.totalorder %s21, 0
    %p56 = por %p54, %p55
    %p57 = scmp.ne.s32.totalorder %s43, %s44
    %p58 = scmp.eq.s32.totalorder %s22, 1
    %p59 = por %p57, %p58
    %p61 = scmp.ne.s32.totalorder %s44, %s60
    %p62 = scmp.eq.s32.totalorder %s22, 0
    %p63 = por %p61, %p62
    %s64 = ssub.s32 %s23, %s35
    %p65 = scmp.eq.s32.totalorder %s64, 0
    %s67 = sadd.s32 %s66, 1
    %s68 = scalar_select %p65, %s66, %s67
    %p71 = pneg %p65
    %p72 = scmp.eq.s32.totalorder %s16, 1
    %p73 = por %p71, %p72
    %p74 = scmp.ne.s32.totalorder %s66, %s69
    %p75 = scmp.eq.s32.totalorder %s16, 0
    %p76 = por %p74, %p75
    %p77 = scmp.ne.s32.totalorder %s66, %s69
    %p78 = scmp.eq.s32.totalorder %s21, 1
    %p79 = por %p77, %p78
    %p80 = scmp.ne.s32.totalorder %s69, %s70
    %p81 = scmp.eq.s32.totalorder %s21, 0
    %p82 = por %p80, %p81
    %p83 = scmp.ne.s32.totalorder %s69, %s70
    %p84 = scmp.eq.s32.totalorder %s22, 1
    %p85 = por %p83, %p84
    %p87 = scmp.ne.s32.totalorder %s70, %s86
    %p88 = scmp.eq.s32.totalorder %s22, 0
    %p89 = por %p87, %p88
    %s91 = sadd.s32 %s90, 1
    %p94 = scmp.eq.s32.totalorder %s16, 1
    %p95 = scmp.ne.s32.totalorder %s90, %s92
    %p96 = scmp.eq.s32.totalorder %s16, 0
    %p97 = por %p95, %p96
    %p98 = scmp.ne.s32.totalorder %s90, %s92
    %p99 = scmp.eq.s32.totalorder %s21, 1
    %p100 = por %p98, %p99
    %p101 = scmp.ne.s32.totalorder %s92, %s93
    %p102 = scmp.eq.s32.totalorder %s21, 0
    %p103 = por %p101, %p102
    %p104 = scmp.ne.s32.totalorder %s92, %s93
    %p105 = scmp.eq.s32.totalorder %s22, 1
    %p106 = por %p104, %p105
    %p108 = scmp.ne.s32.totalorder %s93, %s107
    %p109 = scmp.eq.s32.totalorder %s22, 0
    %p110 = por %p108, %p109
    %s112 = sadd.s32 %s111, 1
    %p115 = scmp.eq.s32.totalorder %s16, 1
    %p116 = scmp.ne.s32.totalorder %s111, %s113
    %p117 = scmp.eq.s32.totalorder %s16, 0
    %p118 = por %p116, %p117
    %p119 = scmp.ne.s32.totalorder %s111, %s113
    %p120 = scmp.eq.s32.totalorder %s21, 1
    %p121 = por %p119, %p120
    %p122 = scmp.ne.s32.totalorder %s113, %s114
    %p123 = scmp.eq.s32.totalorder %s21, 0
    %p124 = por %p122, %p123
    %p125 = scmp.ne.s32.totalorder %s113, %s114
    %p126 = scmp.eq.s32.totalorder %s22, 1
    %p127 = por %p125, %p126
    %p129 = scmp.ne.s32.totalorder %s114, %s128
    %p130 = scmp.eq.s32.totalorder %s22, 0
    %p131 = por %p129, %p130
    %s133 = sadd.s32 %s132, 1
    %p136 = scmp.eq.s32.totalorder %s16, 1
    %p137 = scmp.ne.s32.totalorder %s132, %s134
    %p138 = scmp.eq.s32.totalorder %s16, 0
    %p139 = por %p137, %p138
    %p140 = scmp.ne.s32.totalorder %s132, %s134
    %p141 = scmp.eq.s32.totalorder %s21, 1
    %p142 = por %p140, %p141
    %p143 = scmp.ne.s32.totalorder %s134, %s135
    %p144 = scmp.eq.s32.totalorder %s21, 0
    %p145 = por %p143, %p144
    %p146 = scmp.ne.s32.totalorder %s134, %s135
    %p147 = scmp.eq.s32.totalorder %s22, 1
    %p148 = por %p146, %p147
    %p150 = scmp.ne.s32.totalorder %s135, %s149
    %p151 = scmp.eq.s32.totalorder %s22, 0
    %p152 = por %p150, %p151
    %s154 = sadd.s32 %s153, 1
    %p157 = scmp.eq.s32.totalorder %s16, 1
    %p158 = scmp.ne.s32.totalorder %s153, %s155
    %p159 = scmp.eq.s32.totalorder %s16, 0
    %p160 = por %p158, %p159
    %p161 = scmp.ne.s32.totalorder %s153, %s155
    %p162 = scmp.eq.s32.totalorder %s21, 1
    %p163 = por %p161, %p162
    %p164 = scmp.ne.s32.totalorder %s155, %s156
    %p165 = scmp.eq.s32.totalorder %s21, 0
    %p166 = por %p164, %p165
    %p167 = scmp.ne.s32.totalorder %s155, %s156
    %p168 = scmp.eq.s32.totalorder %s22, 1
    %p169 = por %p167, %p168
    %p171 = scmp.ne.s32.totalorder %s156, %s170
    %p172 = scmp.eq.s32.totalorder %s22, 0
    %p173 = por %p171, %p172
    %s175 = sadd.s32 %s174, 1
    %p178 = scmp.eq.s32.totalorder %s16, 1
    %p179 = scmp.ne.s32.totalorder %s174, %s176
    %p180 = scmp.eq.s32.totalorder %s16, 0
    %p181 = por %p179, %p180
    %p182 = scmp.ne.s32.totalorder %s174, %s176
    %p183 = scmp.eq.s32.totalorder %s21, 1
    %p184 = por %p182, %p183
    %p185 = scmp.ne.s32.totalorder %s176, %s177
    %p186 = scmp.eq.s32.totalorder %s21, 0
    %p187 = por %p185, %p186
    %p188 = scmp.ne.s32.totalorder %s176, %s177
    %p189 = scmp.eq.s32.totalorder %s22, 1
    %p190 = por %p188, %p189
    %p192 = scmp.ne.s32.totalorder %s177, %s191
    %p193 = scmp.eq.s32.totalorder %s22, 0
    %p194 = por %p192, %p193
    %s196 = sadd.s32 %s195, 1
    %p199 = scmp.eq.s32.totalorder %s16, 1
    %p200 = scmp.ne.s32.totalorder %s195, %s197
    %p201 = scmp.eq.s32.totalorder %s16, 0
    %p202 = por %p200, %p201
    %p203 = scmp.ne.s32.totalorder %s195, %s197
    %p204 = scmp.eq.s32.totalorder %s21, 1
    %p205 = por %p203, %p204
    %p206 = scmp.ne.s32.totalorder %s197, %s198
    %p207 = scmp.eq.s32.totalorder %s21, 0
    %p208 = por %p206, %p207
    %p209 = scmp.ne.s32.totalorder %s197, %s198
    %p210 = scmp.eq.s32.totalorder %s22, 1
    %p211 = por %p209, %p210
    %p213 = scmp.ne.s32.totalorder %s198, %s212
    %p214 = scmp.eq.s32.totalorder %s22, 0
    %p215 = por %p213, %p214
    %s217 = sadd.s32 %s216, 1
    %p220 = scmp.eq.s32.totalorder %s16, 1
    %p221 = scmp.ne.s32.totalorder %s216, %s218
    %p222 = scmp.eq.s32.totalorder %s16, 0
    %p223 = por %p221, %p222
    %p224 = scmp.ne.s32.totalorder %s216, %s218
    %p225 = scmp.eq.s32.totalorder %s21, 1
    %p226 = por %p224, %p225
    %p227 = scmp.ne.s32.totalorder %s218, %s219
    %p228 = scmp.eq.s32.totalorder %s21, 0
    %p229 = por %p227, %p228
    %p230 = scmp.ne.s32.totalorder %s218, %s219
    %p231 = scmp.eq.s32.totalorder %s22, 1
    %p232 = por %p230, %p231
    %p234 = scmp.ne.s32.totalorder %s219, %s233
    %p235 = scmp.eq.s32.totalorder %s22, 0
    %p236 = por %p234, %p235
    %s238 = sadd.s32 %s237, 1
    %p241 = scmp.eq.s32.totalorder %s16, 1
    %p242 = scmp.ne.s32.totalorder %s237, %s239
    %p243 = scmp.eq.s32.totalorder %s16, 0
    %p244 = por %p242, %p243
    %p245 = scmp.ne.s32.totalorder %s237, %s239
    %p246 = scmp.eq.s32.totalorder %s21, 1
    %p247 = por %p245, %p246
    %p248 = scmp.ne.s32.totalorder %s239, %s240
    %p249 = scmp.eq.s32.totalorder %s21, 0
    %p250 = por %p248, %p249
    %p251 = scmp.ne.s32.totalorder %s239, %s240
    %p252 = scmp.eq.s32.totalorder %s22, 1
    %p253 = por %p251, %p252
    %p255 = scmp.ne.s32.totalorder %s240, %s254
    %p256 = scmp.eq.s32.totalorder %s22, 0
    %p257 = por %p255, %p256
    %s258 = ssub.s32 %s23, %s35
    %s259 = ssub.s32 %s24, %s31
    %s260 = sor.u32 %s258, %s259
    %p261 = scmp.eq.s32.totalorder %s260, 0
    %s263 = sadd.s32 %s262, 1
    %s264 = scalar_select %p261, %s262, %s263
    %p267 = pneg %p261
    %p268 = scmp.eq.s32.totalorder %s16, 1
    %p269 = por %p267, %p268
    %p270 = scmp.ne.s32.totalorder %s262, %s265
    %p271 = scmp.eq.s32.totalorder %s16, 0
    %p272 = por %p270, %p271
    %p273 = scmp.ne.s32.totalorder %s262, %s265
    %p274 = scmp.eq.s32.totalorder %s21, 1
    %p275 = por %p273, %p274
    %p276 = scmp.ne.s32.totalorder %s265, %s266
    %p277 = scmp.eq.s32.totalorder %s21, 0
    %p278 = por %p276, %p277
    %p279 = scmp.ne.s32.totalorder %s265, %s266
    %p280 = scmp.eq.s32.totalorder %s22, 1
    %p281 = por %p279, %p280
    %p283 = scmp.ne.s32.totalorder %s266, %s282
    %p284 = scmp.eq.s32.totalorder %s22, 0
    %p285 = por %p283, %p284
    %p286 = scmp.le.s32.totalorder 1, %s16
    %p287 = scmp.lt.s32.totalorder %s16, 3
    %p288 = pnand %p286, %p287
    %p289 = pneg %p288
    // Predicated region
    $region9: #{transformer_forward.11} parent=5 // pred_check
      _
    $region10: #{transformer_forward.11} parent=5 // pred_check_branch
      %291 = sbr.rel (%p288) target = $region12
    $region11: #{transformer_forward.11} parent=5 // pred_region
      %s292 = ssub.s32 %s16, 1
      // Predicated region
      $region13: #{transformer_forward.11} parent=11 // pred_check
        %p293 = pneg %p103
      $region14: #{transformer_forward.11} parent=11 // pred_check_branch
        %295 = sbr.rel (%p293) target = $region16
      $region15: #{transformer_forward.11} parent=11 // pred_region
        _
      $region16: #{transformer_forward.11} parent=11 // pred_fallthru
        _
      // Predicated region
      $region17: #{transformer_forward.11} parent=11 // pred_check
        %p296 = pneg %p124
      $region18: #{transformer_forward.11} parent=11 // pred_check_branch
        %298 = sbr.rel (%p296) target = $region20
      $region19: #{transformer_forward.11} parent=11 // pred_region
        _
      $region20: #{transformer_forward.11} parent=11 // pred_fallthru
        _
      // Predicated region
      $region21: #{transformer_forward.11} parent=11 // pred_check
        %p299 = pneg %p145
      $region22: #{transformer_forward.11} parent=11 // pred_check_branch
        %301 = sbr.rel (%p299) target = $region24
      $region23: #{transformer_forward.11} parent=11 // pred_region
        _
      $region24: #{transformer_forward.11} parent=11 // pred_fallthru
        _
      // Predicated region
      $region25: #{transformer_forward.11} parent=11 // pred_check
        %p302 = pneg %p166
      $region26: #{transformer_forward.11} parent=11 // pred_check_branch
        %304 = sbr.rel (%p302) target = $region28
      $region27: #{transformer_forward.11} parent=11 // pred_region
        _
      $region28: #{transformer_forward.11} parent=11 // pred_fallthru
        _
      // Predicated region
      $region29: #{transformer_forward.11} parent=11 // pred_check
        %p305 = pneg %p187
      $region30: #{transformer_forward.11} parent=11 // pred_check_branch
        %307 = sbr.rel (%p305) target = $region32
      $region31: #{transformer_forward.11} parent=11 // pred_region
        _
      $region32: #{transformer_forward.11} parent=11 // pred_fallthru
        _
      // Predicated region
      $region33: #{transformer_forward.11} parent=11 // pred_check
        %p308 = pneg %p208
      $region34: #{transformer_forward.11} parent=11 // pred_check_branch
        %310 = sbr.rel (%p308) target = $region36
      $region35: #{transformer_forward.11} parent=11 // pred_region
        _
      $region36: #{transformer_forward.11} parent=11 // pred_fallthru
        _
      // Predicated region
      $region37: #{transformer_forward.11} parent=11 // pred_check
        %p311 = pneg %p229
      $region38: #{transformer_forward.11} parent=11 // pred_check_branch
        %313 = sbr.rel (%p311) target = $region40
      $region39: #{transformer_forward.11} parent=11 // pred_region
        _
      $region40: #{transformer_forward.11} parent=11 // pred_fallthru
        _
      // Predicated region
      $region41: #{transformer_forward.11} parent=11 // pred_check
        %p314 = pneg %p250
      $region42: #{transformer_forward.11} parent=11 // pred_check_branch
        %316 = sbr.rel (%p314) target = $region44
      $region43: #{transformer_forward.11} parent=11 // pred_region
        _
      $region44: #{transformer_forward.11} parent=11 // pred_fallthru
        _
    $region12: #{transformer_forward.11} parent=5 // pred_fallthru
      _
    %p317 = scmp.lt.s32.totalorder %s16, 2
    // Predicated region
    $region45: #{transformer_forward.11} parent=5 // pred_check
      %p318 = pneg %p317
    $region46: #{transformer_forward.11} parent=5 // pred_check_branch
      %320 = sbr.rel (%p318) target = $region48
    $region47: #{transformer_forward.11} parent=5 // pred_region
      // Predicated region
      $region49: #{transformer_forward.11} parent=47 // pred_check
        %p321 = pneg %p50
      $region50: #{transformer_forward.11} parent=47 // pred_check_branch
        %323 = sbr.rel (%p321) target = $region52
      $region51: #{transformer_forward.11} parent=47 // pred_region
        %p324 = scmp.lt.s32.totalorder %s23, 1
        %s325 = scalar_select %p324, %s23, 1
        %p326 = scmp.lt.s32.totalorder %s24, 0
        %s327 = scalar_select %p326, %s24, 0
        %s328 = sadd.s32 %s327, %s325
        %s329 = smul.addr %s328, 4
        %s330 = scalar_lea.vmem %s0, %s329
      $region52: #{transformer_forward.11} parent=47 // pred_fallthru
        _
      // Predicated region
      $region53: #{transformer_forward.11} parent=47 // pred_check
        %p331 = pneg %p76
      $region54: #{transformer_forward.11} parent=47 // pred_check_branch
        %333 = sbr.rel (%p331) target = $region56
      $region55: #{transformer_forward.11} parent=47 // pred_region
        %p334 = scmp.lt.s32.totalorder %s23, 1
        %s335 = scalar_select %p334, %s23, 1
        %s336 = smul.addr %s335, 4
        %s337 = scalar_lea.vmem %s1, %s336
      $region56: #{transformer_forward.11} parent=47 // pred_fallthru
        _
    $region48: #{transformer_forward.11} parent=5 // pred_fallthru
      _
    %p338 = scmp.le.s32.totalorder 1, %s16
    %p339 = scmp.lt.s32.totalorder %s16, 3
    %p340 = pnand %p338, %p339
    %p341 = pneg %p340
    // Predicated region
    $region57: #{transformer_forward.11} parent=5 // pred_check
      _
    $region58: #{transformer_forward.11} parent=5 // pred_check_branch
      %343 = sbr.rel (%p340) target = $region60
    $region59: #{transformer_forward.11} parent=5 // pred_region
      %s344 = ssub.s32 %s16, 1
      %p345 = scmp.lt.s32.totalorder %s25, 1
      %s346 = scalar_select %p345, %s25, 1
      %p347 = scmp.lt.s32.totalorder %s26, 0
      %s348 = scalar_select %p347, %s26, 0
      %s349 = sadd.s32 %s348, %s346
      %s350 = smul.addr %s349, 4
      %s351 = scalar_lea.vmem %s0, %s350
      %p352 = pneg %p56
      %p353 = pneg %p53
      %p354 = scmp.lt.s32.totalorder %s25, 1
      %s355 = scalar_select %p354, %s25, 1
      %s356 = smul.addr %s355, 4
      %s357 = scalar_lea.vmem %s1, %s356
      %p358 = pneg %p82
      %p359 = pneg %p79
      %p360 = pneg %p103
      %p361 = pneg %p100
      %p362 = pneg %p124
      %p363 = pneg %p121
      %p364 = pneg %p145
      %p365 = pneg %p142
      %p366 = pneg %p166
      %p367 = pneg %p163
      %p368 = pneg %p187
      %p369 = pneg %p184
      %p370 = pneg %p208
      %p371 = pneg %p205
      %p372 = pneg %p229
      %p373 = pneg %p226
      %p374 = pneg %p250
      %p375 = pneg %p247
      %p376 = pneg %p278
      %p377 = pneg %p275
      %p378 = scmp.lt.s32.totalorder %s25, 1
      %s379 = scalar_select %p378, %s25, 1
      %p380 = scmp.lt.s32.totalorder %s26, 0
      %s381 = scalar_select %p380, %s26, 0
      %s382 = sadd.s32 %s381, %s379
      %s383 = smul.addr %s382, 4
      %s384 = scalar_lea.vmem %s10, %s383
      %p385 = scmp.lt.s32.totalorder %s25, 1
      %s386 = scalar_select %p385, %s25, 1
      %p387 = scmp.lt.s32.totalorder %s26, 0
      %s388 = scalar_select %p387, %s26, 0
      %s389 = sadd.s32 %s388, %s386
      %s390 = smul.addr %s389, 4
      %s391 = scalar_lea.vmem %s0, %s390
      %p392 = scmp.lt.s32.totalorder %s25, 1
      %s393 = scalar_select %p392, %s25, 1
      %s394 = smul.addr %s393, 4
      %s395 = scalar_lea.vmem %s1, %s394
      %p396 = scmp.lt.s32.totalorder %s25, 1
      %s397 = scalar_select %p396, %s25, 1
      %p398 = scmp.lt.s32.totalorder %s26, 0
      %s399 = scalar_select %p398, %s26, 0
      %s400 = sadd.s32 %s399, %s397
      %s401 = smul.addr %s400, 4
      %s402 = scalar_lea.vmem %s10, %s401
      %v404 = vld [vmem:[%s391] sm:$0xf]
      %p405 = scmp.eq.s32.totalorder %s26, 0
      // Predicated region
      $region61: #{transformer_forward.11} parent=59 // pred_check
        %p406 = pneg %p405
      $region62: #{transformer_forward.11} parent=59 // pred_check_branch
        %408 = sbr.rel (%p406) target = $region64
      $region63: #{transformer_forward.11} parent=59 // pred_region
        %v409 = vld [vmem:[%s395] sm:$0xf]
        %v410 = vld [vmem:[%s4] sm:$0xf]
        %v411 = vld [vmem:[%s4 + $0x4] sm:$0xf]
        %v412 = vld [vmem:[%s4 + $0x8] sm:$0xf]
        %v413 = vld [vmem:[%s4 + $0xc] sm:$0xf]
        %v414 = vld [vmem:[%s5] sm:$0x1]
        %v416 = vperm.slane %v414, 0
        %v422 = vunpack.c.l.b16 %v410
        %v423 = vunpack.c.l.b16 %v411
        %v424 = vunpack.c.l.b16 %v412
        %v425 = vunpack.c.l.b16 %v413
        %v426 = vpack.c.b16 %v423, %v422
        %v427 = vpack.c.b16 %v425, %v424
        %vm430 = vcmask 261120
        %v432 = vsel %vm430, %v409, 0
        %434 = vmatpush.bf16.msra.mxu0 0
        %435 = vmatpush.bf16.msra.mxu0 0
        %436 = vmatpush.bf16.msra.mxu0 0
        %437 = vmatpush.bf16.msra.mxu0 0
        %438 = vmatpush.bf16.msra.mxu0 0
        %439 = vmatpush.bf16.msra.mxu0 0
        %440 = vmatpush.bf16.msra.mxu0 %v427
        %441 = vmatpush.bf16.msra.mxu0 %v426
        %442 = vmatmul.bf16.gmra.mxu0 %v432
        %v443 = vpop.f32.mrf.mxu0
        %v444 = vadd.f32 %v416, %v443
        %v445 = vpop.f32.mrf.mxu0
        %446 = vdwg.mxu0
        %v447 = vpack.c.bf16 %v444, %v444
        %vm448 = vcmask 519168
        %449 = vst.msk [vmem:[#allocation2] sm:$0xf] %vm448, %v447
      $region64: #{transformer_forward.11} parent=59 // pred_fallthru
        _
      %v450 = vld [vmem:[%s2] sm:$0xf]
      %v451 = vld [vmem:[%s2 + $0x4] sm:$0xf]
      %v452 = vld [vmem:[%s2 + $0x8] sm:$0xf]
      %v453 = vld [vmem:[%s2 + $0xc] sm:$0xf]
      %v454 = vld [vmem:[%s3] sm:$0x1]
      %v456 = vperm.slane %v454, 0
      %v462 = vunpack.c.l.b16 %v450
      %v463 = vunpack.c.l.b16 %v451
      %v464 = vunpack.c.l.b16 %v452
      %v465 = vunpack.c.l.b16 %v453
      %v466 = vpack.c.b16 %v463, %v462
      %v467 = vpack.c.b16 %v465, %v464
      %vm470 = vcmask 261120
      %v472 = vsel %vm470, %v404, 0
      %474 = vmatpush.bf16.msra.mxu0 0
      %475 = vmatpush.bf16.msra.mxu0 0
      %476 = vmatpush.bf16.msra.mxu0 0
      %477 = vmatpush.bf16.msra.mxu0 0
      %478 = vmatpush.bf16.msra.mxu0 0
      %479 = vmatpush.bf16.msra.mxu0 0
      %480 = vmatpush.bf16.msra.mxu0 %v467
      %481 = vmatpush.bf16.msra.mxu0 %v466
      %482 = vmatmul.bf16.gmra.mxu0 %v472
      %v483 = vpop.f32.mrf.mxu0
      %v484 = vadd.f32 %v456, %v483
      %v485 = vpop.f32.mrf.mxu0
      %486 = vdwg.mxu0
      %v487 = vmul.f32 %v484, 0.35355338
      %v488 = vpack.c.bf16 %v487, %v487
      %v489 = vld [vmem:[#allocation2] sm:$0xf]
      %vm490 = vcmask 64512
      %v492 = vsel %vm490, %v488, 0
      %v495 = vsel %vm490, %v489, 0
      %497 = vmatpush.bf16.xpose.msra.mxu0 0
      %498 = vmatpush.bf16.xpose.msra.mxu0 0
      %499 = vmatpush.bf16.xpose.msra.mxu0 0
      %500 = vmatpush.bf16.xpose.msra.mxu0 0
      %501 = vmatpush.bf16.xpose.msra.mxu0 0
      %502 = vmatpush.bf16.xpose.msra.mxu0 0
      %503 = vmatpush.bf16.xpose.msra.mxu0 0
      %504 = vmatpush.bf16.xpose.msra.mxu0 %v495
      %505 = vmatmul.bf16.gmra.mxu0 %v492
      %v506 = vpop.f32.mrf.mxu0
      %v507 = vadd.f32 0.0, %v506
      %v508 = vpop.f32.mrf.mxu0
      %509 = vdwg.mxu0
      %v510 = vsel %vm490, %v507, -inf
      %511 = vmax.xlane.f32.xlu0 %v510
      %v512 = vpop.xlane.xlu0 %511
      %v513 = vsub.f32 %v507, %v512
      %v514 = vmul.f32 %v513, 1.442695
      %v515 = vpow.pop %v514
      %v516 = vsel %vm490, %v515, 0.0
      %517 = vadd.xlane.f32.xlu0 %v516
      %v518 = vpop.xlane.xlu0 %517
      %v519 = vrcp.pop %v518
      %v520 = vmul.f32 %v515, %v519
      %v521 = vpack.c.bf16 %v520, %v520
      %v523 = vunpack.c.l.b16 %v489
      %v524 = vpack.c.b16 %v523, %v523
      %525 = vrot.lane.b32.xlu0 %v524, 96
      %v526 = vpop.permute.xlu0 %525
      %v528 = vsel %vm490, %v521, 0
      %vm530 = vcmask 1043456
      %v532 = vsel %vm530, %v526, 0
      %534 = vmatpush.bf16.msra.mxu0 0
      %535 = vmatpush.bf16.msra.mxu0 0
      %536 = vmatpush.bf16.msra.mxu0 0
      %537 = vmatpush.bf16.msra.mxu0 0
      %538 = vmatpush.bf16.msra.mxu0 0
      %539 = vmatpush.bf16.msra.mxu0 0
      %540 = vmatpush.bf16.msra.mxu0 0
      %541 = vmatpush.bf16.msra.mxu0 %v532
      %542 = vmatmul.bf16.gmra.mxu0 %v528
      %v543 = vpop.f32.mrf.mxu0
      %v544 = vadd.f32 0.0, %v543
      %v545 = vpop.f32.mrf.mxu0
      %546 = vdwg.mxu0
      %v548 = vunpack.c.l.b16 %v488
      %v549 = vpack.c.b16 %v548, %v548
      %550 = vrot.lane.b32.xlu0 %v549, 120
      %v551 = vpop.permute.xlu0 %550
      %552 = vrot.lane.b32.xlu0 %v524, 120
      %v553 = vpop.permute.xlu0 %552
      %v555 = vsel %vm490, %v551, 0
      %v558 = vsel %vm490, %v553, 0
      %560 = vmatpush.bf16.xpose.msra.mxu0 0
      %561 = vmatpush.bf16.xpose.msra.mxu0 0
      %562 = vmatpush.bf16.xpose.msra.mxu0 0
      %563 = vmatpush.bf16.xpose.msra.mxu0 0
      %564 = vmatpush.bf16.xpose.msra.mxu0 0
      %565 = vmatpush.bf16.xpose.msra.mxu0 0
      %566 = vmatpush.bf16.xpose.msra.mxu0 0
      %567 = vmatpush.bf16.xpose.msra.mxu0 %v558
      %568 = vmatmul.bf16.gmra.mxu0 %v555
      %v569 = vpop.f32.mrf.mxu0
      %v570 = vadd.f32 0.0, %v569
      %v571 = vpop.f32.mrf.mxu0
      %572 = vdwg.mxu0
      %v573 = vsel %vm490, %v570, -inf
      %574 = vmax.xlane.f32.xlu0 %v573
      %v575 = vpop.xlane.xlu0 %574
      %v576 = vsub.f32 %v570, %v575
      %v577 = vmul.f32 %v576, 1.442695
      %v578 = vpow.pop %v577
      %v579 = vsel %vm490, %v578, 0.0
      %580 = vadd.xlane.f32.xlu0 %v579
      %v581 = vpop.xlane.xlu0 %580
      %v582 = vrcp.pop %v581
      %v583 = vmul.f32 %v578, %v582
      %v584 = vpack.c.bf16 %v583, %v583
      %585 = vrot.lane.b32.xlu0 %v524, 88
      %v586 = vpop.permute.xlu0 %585
      %v588 = vsel %vm490, %v584, 0
      %v591 = vsel %vm530, %v586, 0
      %593 = vmatpush.bf16.msra.mxu0 0
      %594 = vmatpush.bf16.msra.mxu0 0
      %595 = vmatpush.bf16.msra.mxu0 0
      %596 = vmatpush.bf16.msra.mxu0 0
      %597 = vmatpush.bf16.msra.mxu0 0
      %598 = vmatpush.bf16.msra.mxu0 0
      %599 = vmatpush.bf16.msra.mxu0 0
      %600 = vmatpush.bf16.msra.mxu0 %v591
      %601 = vmatmul.bf16.gmra.mxu0 %v588
      %v602 = vpop.f32.mrf.mxu0
      %v603 = vadd.f32 0.0, %v602
      %v604 = vpop.f32.mrf.mxu0
      %605 = vdwg.mxu0
      %606 = vrot.lane.b32.xlu0 %v549, 112
      %v607 = vpop.permute.xlu0 %606
      %608 = vrot.lane.b32.xlu0 %v524, 112
      %v609 = vpop.permute.xlu0 %608
      %v611 = vsel %vm490, %v607, 0
      %v614 = vsel %vm490, %v609, 0
      %616 = vmatpush.bf16.xpose.msra.mxu0 0
      %617 = vmatpush.bf16.xpose.msra.mxu0 0
      %618 = vmatpush.bf16.xpose.msra.mxu0 0
      %619 = vmatpush.bf16.xpose.msra.mxu0 0
      %620 = vmatpush.bf16.xpose.msra.mxu0 0
      %621 = vmatpush.bf16.xpose.msra.mxu0 0
      %622 = vmatpush.bf16.xpose.msra.mxu0 0
      %623 = vmatpush.bf16.xpose.msra.mxu0 %v614
      %624 = vmatmul.bf16.gmra.mxu0 %v611
      %v625 = vpop.f32.mrf.mxu0
      %v626 = vadd.f32 0.0, %v625
      %v627 = vpop.f32.mrf.mxu0
      %628 = vdwg.mxu0
      %v629 = vsel %vm490, %v626, -inf
      %630 = vmax.xlane.f32.xlu0 %v629
      %v631 = vpop.xlane.xlu0 %630
      %v632 = vsub.f32 %v626, %v631
      %v633 = vmul.f32 %v632, 1.442695
      %v634 = vpow.pop %v633
      %v635 = vsel %vm490, %v634, 0.0
      %636 = vadd.xlane.f32.xlu0 %v635
      %v637 = vpop.xlane.xlu0 %636
      %v638 = vrcp.pop %v637
      %v639 = vmul.f32 %v634, %v638
      %v640 = vpack.c.bf16 %v639, %v639
      %641 = vrot.lane.b32.xlu0 %v524, 80
      %v642 = vpop.permute.xlu0 %641
      %v644 = vsel %vm490, %v640, 0
      %v647 = vsel %vm530, %v642, 0
      %649 = vmatpush.bf16.msra.mxu0 0
      %650 = vmatpush.bf16.msra.mxu0 0
      %651 = vmatpush.bf16.msra.mxu0 0
      %652 = vmatpush.bf16.msra.mxu0 0
      %653 = vmatpush.bf16.msra.mxu0 0
      %654 = vmatpush.bf16.msra.mxu0 0
      %655 = vmatpush.bf16.msra.mxu0 0
      %656 = vmatpush.bf16.msra.mxu0 %v647
      %657 = vmatmul.bf16.gmra.mxu0 %v644
      %v658 = vpop.f32.mrf.mxu0
      %v659 = vadd.f32 0.0, %v658
      %v660 = vpop.f32.mrf.mxu0
      %661 = vdwg.mxu0
      %662 = vrot.lane.b32.xlu0 %v549, 104
      %v663 = vpop.permute.xlu0 %662
      %664 = vrot.lane.b32.xlu0 %v524, 104
      %v665 = vpop.permute.xlu0 %664
      %v667 = vsel %vm490, %v663, 0
      %v670 = vsel %vm490, %v665, 0
      %672 = vmatpush.bf16.xpose.msra.mxu0 0
      %673 = vmatpush.bf16.xpose.msra.mxu0 0
      %674 = vmatpush.bf16.xpose.msra.mxu0 0
      %675 = vmatpush.bf16.xpose.msra.mxu0 0
      %676 = vmatpush.bf16.xpose.msra.mxu0 0
      %677 = vmatpush.bf16.xpose.msra.mxu0 0
      %678 = vmatpush.bf16.xpose.msra.mxu0 0
      %679 = vmatpush.bf16.xpose.msra.mxu0 %v670
      %680 = vmatmul.bf16.gmra.mxu0 %v667
      %v681 = vpop.f32.mrf.mxu0
      %v682 = vadd.f32 0.0, %v681
      %v683 = vpop.f32.mrf.mxu0
      %684 = vdwg.mxu0
      %v685 = vsel %vm490, %v682, -inf
      %686 = vmax.xlane.f32.xlu0 %v685
      %v687 = vpop.xlane.xlu0 %686
      %v688 = vsub.f32 %v682, %v687
      %v689 = vmul.f32 %v688, 1.442695
      %v690 = vpow.pop %v689
      %v691 = vsel %vm490, %v690, 0.0
      %692 = vadd.xlane.f32.xlu0 %v691
      %v693 = vpop.xlane.xlu0 %692
      %v694 = vrcp.pop %v693
      %v695 = vmul.f32 %v690, %v694
      %v696 = vpack.c.bf16 %v695, %v695
      %697 = vrot.lane.b32.xlu0 %v524, 72
      %v698 = vpop.permute.xlu0 %697
      %v700 = vsel %vm490, %v696, 0
      %v703 = vsel %vm530, %v698, 0
      %705 = vmatpush.bf16.msra.mxu0 0
      %706 = vmatpush.bf16.msra.mxu0 0
      %707 = vmatpush.bf16.msra.mxu0 0
      %708 = vmatpush.bf16.msra.mxu0 0
      %709 = vmatpush.bf16.msra.mxu0 0
      %710 = vmatpush.bf16.msra.mxu0 0
      %711 = vmatpush.bf16.msra.mxu0 0
      %712 = vmatpush.bf16.msra.mxu0 %v703
      %713 = vmatmul.bf16.gmra.mxu0 %v700
      %v714 = vpop.f32.mrf.mxu0
      %v715 = vadd.f32 0.0, %v714
      %v716 = vpop.f32.mrf.mxu0
      %717 = vdwg.mxu0
      %719 = vrot.lane.b32.xlu0 %v603, 8
      %v720 = vpop.permute.xlu0 %719
      %723 = vrot.lane.b32.xlu0 %v659, 16
      %v724 = vpop.permute.xlu0 %723
      %727 = vrot.lane.b32.xlu0 %v715, 24
      %v728 = vpop.permute.xlu0 %727
      %v730 = vsel %vm490, %v544, %v720
      %vm731 = vcmask 130048
      %v732 = vsel %vm731, %v730, %v724
      %vm733 = vcmask 195584
      %v734 = vsel %vm733, %v732, %v728
      %v735 = vpack.c.bf16 %v734, %v734
      %v736 = vld [vmem:[%s6] sm:$0xf]
      %v737 = vld [vmem:[%s6 + $0x4] sm:$0xf]
      %v738 = vld [vmem:[%s6 + $0x8] sm:$0xf]
      %v739 = vld [vmem:[%s6 + $0xc] sm:$0xf]
      %v740 = vld [vmem:[%s7] sm:$0x1]
      %v742 = vperm.slane %v740, 0
      %v748 = vunpack.c.l.b16 %v736
      %v749 = vunpack.c.l.b16 %v737
      %v750 = vunpack.c.l.b16 %v738
      %v751 = vunpack.c.l.b16 %v739
      %v752 = vpack.c.b16 %v749, %v748
      %v753 = vpack.c.b16 %v751, %v750
      %v757 = vsel %vm470, %v735, 0
      %759 = vmatpush.bf16.msra.mxu0 0
      %760 = vmatpush.bf16.msra.mxu0 0
      %761 = vmatpush.bf16.msra.mxu0 0
      %762 = vmatpush.bf16.msra.mxu0 0
      %763 = vmatpush.bf16.msra.mxu0 0
      %764 = vmatpush.bf16.msra.mxu0 0
      %765 = vmatpush.bf16.msra.mxu0 %v753
      %766 = vmatpush.bf16.msra.mxu0 %v752
      %767 = vmatmul.bf16.gmra.mxu0 %v757
      %v768 = vpop.f32.mrf.mxu0
      %v769 = vadd.f32 %v742, %v768
      %v770 = vpop.f32.mrf.mxu0
      %771 = vdwg.mxu0
      %v772 = vunpack.c.l.bf16 %v404
      %v773 = vadd.f32 %v772, %v769
      %v774 = vld [vmem:[%s8] sm:$0x1]
      %v775 = vld [vmem:[%s9] sm:$0x1]
      %v776 = vsel %vm470, %v773, 0.0
      %777 = vadd.xlane.f32.xlu0 %v776
      %v778 = vpop.xlane.xlu0 %777
      %v779 = vrcp.pop 32.0
      %v780 = vmul.f32 32.0, %v779
      %v781 = vsub.f32 1.0, %v780
      %v782 = vmul.f32 %v779, %v781
      %v783 = vadd.f32 %v779, %v782
      %vm784 = vweird.f32 %v779
      %v785 = vsel %vm784, %v779, %v783
      %v786 = vmul.f32 %v778, %v785
      %v787 = vsub.f32 %v773, %v786
      %v788 = vmul.f32 %v787, %v787
      %v789 = vsel %vm470, %v788, 0.0
      %790 = vadd.xlane.f32.xlu0 %v789
      %v791 = vpop.xlane.xlu0 %790
      %v792 = vmul.f32 %v791, %v785
      %v793 = vadd.f32 %v792, 1e-05
      %v794 = vrsqrt.pop %v793
      %v795 = vmul.f32 %v794, %v793
      %v796 = vmul.f32 %v795, %v794
      %v797 = vmul.f32 0.5, %v796
      %v798 = vsub.f32 1.5, %v797
      %v799 = vmul.f32 %v794, %v798
      %vm800 = vweird.f32 %v793
      %vm801 = vweird.f32 %v794
      %vm802 = vmor %vm800, %vm801
      %v803 = vsel %vm802, %v794, %v799
      %v804 = vmul.f32 %v787, %v803
      %v806 = vperm.slane %v774, 0
      %v808 = vmul.f32 %v804, %v806
      %v810 = vperm.slane %v775, 0
      %v812 = vadd.f32 %v808, %v810
      %v813 = vpack.c.bf16 %v812, %v812
      %vm814 = vcmask 257024
      %815 = vst.msk [vmem:[%s402] sm:$0xf] %vm814, %v813
      %p816 = scmp.lt.s32.totalorder %s25, 1
      %s817 = scalar_select %p816, %s25, 1
      %p818 = scmp.lt.s32.totalorder %s26, 0
      %s819 = scalar_select %p818, %s26, 0
      %s820 = sadd.s32 %s819, %s817
      %s821 = smul.addr %s820, 4
      %s822 = scalar_lea.vmem %s10, %s821
      // Predicated region
      $region65: #{transformer_forward.11} parent=59 // pred_check
        %p823 = pneg %p275
      $region66: #{transformer_forward.11} parent=59 // pred_check_branch
        %825 = sbr.rel (%p823) target = $region68
      $region67: #{transformer_forward.11} parent=59 // pred_region
        _
      $region68: #{transformer_forward.11} parent=59 // pred_fallthru
        _
    $region60: #{transformer_forward.11} parent=5 // pred_fallthru
      _
    %p826 = scmp.le.s32.totalorder 2, %s16
    // Predicated region
    $region69: #{transformer_forward.11} parent=5 // pred_check
      %p827 = pneg %p826
    $region70: #{transformer_forward.11} parent=5 // pred_check_branch
      %829 = sbr.rel (%p827) target = $region72
    $region71: #{transformer_forward.11} parent=5 // pred_region
      %s830 = ssub.s32 %s16, 2
      // Predicated region
      $region73: #{transformer_forward.11} parent=71 // pred_check
        %p831 = pneg %p281
      $region74: #{transformer_forward.11} parent=71 // pred_check_branch
        %833 = sbr.rel (%p831) target = $region76
      $region75: #{transformer_forward.11} parent=71 // pred_region
        %p834 = scmp.lt.s32.totalorder %s27, 1
        %s835 = scalar_select %p834, %s27, 1
        %p836 = scmp.lt.s32.totalorder %s28, 0
        %s837 = scalar_select %p836, %s28, 0
        %s838 = sadd.s32 %s837, %s835
        %s839 = smul.addr %s838, 4
        %s840 = scalar_lea.vmem %s10, %s839
      $region76: #{transformer_forward.11} parent=71 // pred_fallthru
        _
    $region72: #{transformer_forward.11} parent=5 // pred_fallthru
      _
  $region6: #{transformer_forward.11} parent=0 // loop_footer
    %s20 = sadd.s32 1, %s16
  $region7: #{transformer_forward.11} parent=0 // loop_footer_branch
    %15 = sbr.rel target = $region3
  $region8: #{transformer_forward.11} parent=0 // loop_exit
    _

// kernel: transformer_forward.15
$region0: #{transformer_forward.15}
  #allocation0 [shape = 'u32[]', space=smem, size = 0x4, offset = 0x4, fixed_abs, tag = 'smem constant byte address 0x4 - core index']
  #allocation1 [shape = 'u32[72,128]{1,0:T(1,128)}', space=vmem, size = 0x9000, scoped, tag = 'internal scratch']
  #allocation2 [shape = 'bf16[8,64]{1,0:T(8,128)(2,1)}', space=vmem, size = 0x800, scoped, tag = 'scratch operand']
  %s0 = inlined_call_operand.vmem [shape: bf16[2,8,32], index: 0, kind: input, shape index: {}, may-alias: {0,1}]
  %s1 = inlined_call_operand.vmem [shape: bf16[2,8,32], index: 1, kind: input, shape index: {}, may-alias: {0,1}]
  %s2 = inlined_call_operand.vmem [shape: bf16[32,32], index: 2, kind: input, shape index: {}]
  %s3 = inlined_call_operand.vmem [shape: f32[1,32], index: 3, kind: input, shape index: {}]
  %s4 = inlined_call_operand.vmem [shape: bf16[32,64], index: 4, kind: input, shape index: {}]
  %s5 = inlined_call_operand.vmem [shape: f32[1,64], index: 5, kind: input, shape index: {}]
  %s6 = inlined_call_operand.vmem [shape: bf16[32,32], index: 6, kind: input, shape index: {}]
  %s7 = inlined_call_operand.hbm [shape: f32[1,32], index: 7, kind: input, shape index: {}]
  %s8 = inlined_call_operand.hbm [shape: f32[1,32], index: 8, kind: input, shape index: {}]
  %s9 = inlined_call_operand.hbm [shape: f32[1,32], index: 9, kind: input, shape index: {}]
  %s10 = inlined_call_operand.vmem [shape: bf16[2,8,32], index: 10, kind: output, shape index: {}]
  %s11 = sld [smem:[#allocation0]]
  $region89: #{transformer_forward.15} parent=0
    _
  %s13 = ssub.s32 1, %s11
  %s14 = scalar_select 0, %s13, %s11
  $region1: #{transformer_forward.15} parent=0
    #allocation3 [shape = 'u8[512]{0}', space=vmem, size = 0x400, scoped, tag = 'input window, operand 7, single buffered']
    #allocation4 [shape = 's32[2]{0}', space=sflag, size = 0x8, scoped, tag = 'scoped memory for transformer_forward.15']
    #allocation5 [shape = 'u8[512]{0}', space=vmem, size = 0x400, scoped, tag = 'input window, operand 8, single buffered']
    #allocation6 [shape = 's32[1]{0}', space=sflag, size = 0x4, scoped, tag = 'scoped memory for transformer_forward.15']
    #allocation7 [shape = 'u8[512]{0}', space=vmem, size = 0x400, scoped, tag = 'input window, operand 9, single buffered']
    %15 = vsyncpa [#allocation4], 0
    %16 = vsyncpa [#allocation6], 0
    loop: start=0, step=1, limit=4
    $region2: #{transformer_forward.15} parent=1 // loop_pre_header
      _
    $region3: #{transformer_forward.15} parent=1 // loop_header
      %s18 = sphi 0, %s22
      %p19 = scmp.ge.s32.totalorder %s18, 4
      %s25 = sphi 0, %s37
      %s26 = sphi 0, %s33
      %s27 = sphi 0, %s25
      %s28 = sphi 0, %s26
      %s29 = sphi 0, %s27
      %s30 = sphi 0, %s28
      %s42 = sphi 0, %s44
      %s45 = sphi 0, %s42
      %s46 = sphi 0, %s45
      %s62 = sphi 0, %s46
      %s68 = sphi 0, %s70
      %s71 = sphi 0, %s68
      %s72 = sphi 0, %s71
      %s88 = sphi 0, %s72
      %s92 = sphi 0, %s92
      %s94 = sphi 0, %s92
      %s95 = sphi 0, %s94
      %s109 = sphi 0, %s95
      %s113 = sphi 0, %s113
      %s115 = sphi 0, %s113
      %s116 = sphi 0, %s115
      %s130 = sphi 0, %s116
      %s134 = sphi 0, %s134
      %s136 = sphi 0, %s134
      %s137 = sphi 0, %s136
      %s151 = sphi 0, %s137
      %s155 = sphi 0, %s155
      %s157 = sphi 0, %s155
      %s158 = sphi 0, %s157
      %s172 = sphi 0, %s158
      %s176 = sphi 0, %s176
      %s178 = sphi 0, %s176
      %s179 = sphi 0, %s178
      %s193 = sphi 0, %s179
      %s197 = sphi 0, %s197
      %s199 = sphi 0, %s197
      %s200 = sphi 0, %s199
      %s214 = sphi 0, %s200
      %s218 = sphi 0, %s218
      %s220 = sphi 0, %s218
      %s221 = sphi 0, %s220
      %s235 = sphi 0, %s221
      %s239 = sphi 0, %s239
      %s241 = sphi 0, %s239
      %s242 = sphi 0, %s241
      %s256 = sphi 0, %s242
      %s264 = sphi 0, %s266
      %s267 = sphi 0, %s264
      %s268 = sphi 0, %s267
      %s284 = sphi 0, %s268
    $region4: #{transformer_forward.15} parent=1 // loop_header_branch
      %21 = sbr.rel (%p19) target = $region8
    $region5: #{transformer_forward.15} parent=1 // loop_body
      %s23 = ssub.s32 %s18, 1
      %s24 = ssub.s32 %s18, 2
      %s31 = sadd.s32 1, %s26
      %p32 = scmp.ge.s32.totalorder %s31, 1
      %s33 = scalar_select %p32, 0, %s31
      %s34 = sadd.s32 1, %s25
      %s35 = scalar_select %p32, %s34, %s25
      %p36 = scmp.ge.s32.totalorder %s35, 2
      %s37 = scalar_select %p36, 0, %s35
      %s38 = ssub.s32 %s25, %s37
      %s39 = ssub.s32 %s26, %s33
      %s40 = sor.u32 %s38, %s39
      %p41 = scmp.eq.s32.totalorder %s40, 0
      %s43 = sadd.s32 %s42, 1
      %s44 = scalar_select %p41, %s42, %s43
      %p47 = pneg %p41
      %p48 = scmp.eq.s32.totalorder %s18, 1
      %p49 = por %p47, %p48
      %p50 = scmp.ne.s32.totalorder %s42, %s45
      %p51 = scmp.eq.s32.totalorder %s18, 0
      %p52 = por %p50, %p51
      %p53 = scmp.ne.s32.totalorder %s42, %s45
      %p54 = scmp.eq.s32.totalorder %s23, 1
      %p55 = por %p53, %p54
      %p56 = scmp.ne.s32.totalorder %s45, %s46
      %p57 = scmp.eq.s32.totalorder %s23, 0
      %p58 = por %p56, %p57
      %p59 = scmp.ne.s32.totalorder %s45, %s46
      %p60 = scmp.eq.s32.totalorder %s24, 1
      %p61 = por %p59, %p60
      %p63 = scmp.ne.s32.totalorder %s46, %s62
      %p64 = scmp.eq.s32.totalorder %s24, 0
      %p65 = por %p63, %p64
      %s66 = ssub.s32 %s25, %s37
      %p67 = scmp.eq.s32.totalorder %s66, 0
      %s69 = sadd.s32 %s68, 1
      %s70 = scalar_select %p67, %s68, %s69
      %p73 = pneg %p67
      %p74 = scmp.eq.s32.totalorder %s18, 1
      %p75 = por %p73, %p74
      %p76 = scmp.ne.s32.totalorder %s68, %s71
      %p77 = scmp.eq.s32.totalorder %s18, 0
      %p78 = por %p76, %p77
      %p79 = scmp.ne.s32.totalorder %s68, %s71
      %p80 = scmp.eq.s32.totalorder %s23, 1
      %p81 = por %p79, %p80
      %p82 = scmp.ne.s32.totalorder %s71, %s72
      %p83 = scmp.eq.s32.totalorder %s23, 0
      %p84 = por %p82, %p83
      %p85 = scmp.ne.s32.totalorder %s71, %s72
      %p86 = scmp.eq.s32.totalorder %s24, 1
      %p87 = por %p85, %p86
      %p89 = scmp.ne.s32.totalorder %s72, %s88
      %p90 = scmp.eq.s32.totalorder %s24, 0
      %p91 = por %p89, %p90
      %s93 = sadd.s32 %s92, 1
      %p96 = scmp.eq.s32.totalorder %s18, 1
      %p97 = scmp.ne.s32.totalorder %s92, %s94
      %p98 = scmp.eq.s32.totalorder %s18, 0
      %p99 = por %p97, %p98
      %p100 = scmp.ne.s32.totalorder %s92, %s94
      %p101 = scmp.eq.s32.totalorder %s23, 1
      %p102 = por %p100, %p101
      %p103 = scmp.ne.s32.totalorder %s94, %s95
      %p104 = scmp.eq.s32.totalorder %s23, 0
      %p105 = por %p103, %p104
      %p106 = scmp.ne.s32.totalorder %s94, %s95
      %p107 = scmp.eq.s32.totalorder %s24, 1
      %p108 = por %p106, %p107
      %p110 = scmp.ne.s32.totalorder %s95, %s109
      %p111 = scmp.eq.s32.totalorder %s24, 0
      %p112 = por %p110, %p111
      %s114 = sadd.s32 %s113, 1
      %p117 = scmp.eq.s32.totalorder %s18, 1
      %p118 = scmp.ne.s32.totalorder %s113, %s115
      %p119 = scmp.eq.s32.totalorder %s18, 0
      %p120 = por %p118, %p119
      %p121 = scmp.ne.s32.totalorder %s113, %s115
      %p122 = scmp.eq.s32.totalorder %s23, 1
      %p123 = por %p121, %p122
      %p124 = scmp.ne.s32.totalorder %s115, %s116
      %p125 = scmp.eq.s32.totalorder %s23, 0
      %p126 = por %p124, %p125
      %p127 = scmp.ne.s32.totalorder %s115, %s116
      %p128 = scmp.eq.s32.totalorder %s24, 1
      %p129 = por %p127, %p128
      %p131 = scmp.ne.s32.totalorder %s116, %s130
      %p132 = scmp.eq.s32.totalorder %s24, 0
      %p133 = por %p131, %p132
      %s135 = sadd.s32 %s134, 1
      %p138 = scmp.eq.s32.totalorder %s18, 1
      %p139 = scmp.ne.s32.totalorder %s134, %s136
      %p140 = scmp.eq.s32.totalorder %s18, 0
      %p141 = por %p139, %p140
      %p142 = scmp.ne.s32.totalorder %s134, %s136
      %p143 = scmp.eq.s32.totalorder %s23, 1
      %p144 = por %p142, %p143
      %p145 = scmp.ne.s32.totalorder %s136, %s137
      %p146 = scmp.eq.s32.totalorder %s23, 0
      %p147 = por %p145, %p146
      %p148 = scmp.ne.s32.totalorder %s136, %s137
      %p149 = scmp.eq.s32.totalorder %s24, 1
      %p150 = por %p148, %p149
      %p152 = scmp.ne.s32.totalorder %s137, %s151
      %p153 = scmp.eq.s32.totalorder %s24, 0
      %p154 = por %p152, %p153
      %s156 = sadd.s32 %s155, 1
      %p159 = scmp.eq.s32.totalorder %s18, 1
      %p160 = scmp.ne.s32.totalorder %s155, %s157
      %p161 = scmp.eq.s32.totalorder %s18, 0
      %p162 = por %p160, %p161
      %p163 = scmp.ne.s32.totalorder %s155, %s157
      %p164 = scmp.eq.s32.totalorder %s23, 1
      %p165 = por %p163, %p164
      %p166 = scmp.ne.s32.totalorder %s157, %s158
      %p167 = scmp.eq.s32.totalorder %s23, 0
      %p168 = por %p166, %p167
      %p169 = scmp.ne.s32.totalorder %s157, %s158
      %p170 = scmp.eq.s32.totalorder %s24, 1
      %p171 = por %p169, %p170
      %p173 = scmp.ne.s32.totalorder %s158, %s172
      %p174 = scmp.eq.s32.totalorder %s24, 0
      %p175 = por %p173, %p174
      %s177 = sadd.s32 %s176, 1
      %p180 = scmp.eq.s32.totalorder %s18, 1
      %p181 = scmp.ne.s32.totalorder %s176, %s178
      %p182 = scmp.eq.s32.totalorder %s18, 0
      %p183 = por %p181, %p182
      %p184 = scmp.ne.s32.totalorder %s176, %s178
      %p185 = scmp.eq.s32.totalorder %s23, 1
      %p186 = por %p184, %p185
      %p187 = scmp.ne.s32.totalorder %s178, %s179
      %p188 = scmp.eq.s32.totalorder %s23, 0
      %p189 = por %p187, %p188
      %p190 = scmp.ne.s32.totalorder %s178, %s179
      %p191 = scmp.eq.s32.totalorder %s24, 1
      %p192 = por %p190, %p191
      %p194 = scmp.ne.s32.totalorder %s179, %s193
      %p195 = scmp.eq.s32.totalorder %s24, 0
      %p196 = por %p194, %p195
      %s198 = sadd.s32 %s197, 1
      %p201 = scmp.eq.s32.totalorder %s18, 1
      %p202 = scmp.ne.s32.totalorder %s197, %s199
      %p203 = scmp.eq.s32.totalorder %s18, 0
      %p204 = por %p202, %p203
      %p205 = scmp.ne.s32.totalorder %s197, %s199
      %p206 = scmp.eq.s32.totalorder %s23, 1
      %p207 = por %p205, %p206
      %p208 = scmp.ne.s32.totalorder %s199, %s200
      %p209 = scmp.eq.s32.totalorder %s23, 0
      %p210 = por %p208, %p209
      %p211 = scmp.ne.s32.totalorder %s199, %s200
      %p212 = scmp.eq.s32.totalorder %s24, 1
      %p213 = por %p211, %p212
      %p215 = scmp.ne.s32.totalorder %s200, %s214
      %p216 = scmp.eq.s32.totalorder %s24, 0
      %p217 = por %p215, %p216
      %s219 = sadd.s32 %s218, 1
      %p222 = scmp.eq.s32.totalorder %s18, 1
      %p223 = scmp.ne.s32.totalorder %s218, %s220
      %p224 = scmp.eq.s32.totalorder %s18, 0
      %p225 = por %p223, %p224
      %p226 = scmp.ne.s32.totalorder %s218, %s220
      %p227 = scmp.eq.s32.totalorder %s23, 1
      %p228 = por %p226, %p227
      %p229 = scmp.ne.s32.totalorder %s220, %s221
      %p230 = scmp.eq.s32.totalorder %s23, 0
      %p231 = por %p229, %p230
      %p232 = scmp.ne.s32.totalorder %s220, %s221
      %p233 = scmp.eq.s32.totalorder %s24, 1
      %p234 = por %p232, %p233
      %p236 = scmp.ne.s32.totalorder %s221, %s235
      %p237 = scmp.eq.s32.totalorder %s24, 0
      %p238 = por %p236, %p237
      %s240 = sadd.s32 %s239, 1
      %p243 = scmp.eq.s32.totalorder %s18, 1
      %p244 = scmp.ne.s32.totalorder %s239, %s241
      %p245 = scmp.eq.s32.totalorder %s18, 0
      %p246 = por %p244, %p245
      %p247 = scmp.ne.s32.totalorder %s239, %s241
      %p248 = scmp.eq.s32.totalorder %s23, 1
      %p249 = por %p247, %p248
      %p250 = scmp.ne.s32.totalorder %s241, %s242
      %p251 = scmp.eq.s32.totalorder %s23, 0
      %p252 = por %p250, %p251
      %p253 = scmp.ne.s32.totalorder %s241, %s242
      %p254 = scmp.eq.s32.totalorder %s24, 1
      %p255 = por %p253, %p254
      %p257 = scmp.ne.s32.totalorder %s242, %s256
      %p258 = scmp.eq.s32.totalorder %s24, 0
      %p259 = por %p257, %p258
      %s260 = ssub.s32 %s25, %s37
      %s261 = ssub.s32 %s26, %s33
      %s262 = sor.u32 %s260, %s261
      %p263 = scmp.eq.s32.totalorder %s262, 0
      %s265 = sadd.s32 %s264, 1
      %s266 = scalar_select %p263, %s264, %s265
      %p269 = pneg %p263
      %p270 = scmp.eq.s32.totalorder %s18, 1
      %p271 = por %p269, %p270
      %p272 = scmp.ne.s32.totalorder %s264, %s267
      %p273 = scmp.eq.s32.totalorder %s18, 0
      %p274 = por %p272, %p273
      %p275 = scmp.ne.s32.totalorder %s264, %s267
      %p276 = scmp.eq.s32.totalorder %s23, 1
      %p277 = por %p275, %p276
      %p278 = scmp.ne.s32.totalorder %s267, %s268
      %p279 = scmp.eq.s32.totalorder %s23, 0
      %p280 = por %p278, %p279
      %p281 = scmp.ne.s32.totalorder %s267, %s268
      %p282 = scmp.eq.s32.totalorder %s24, 1
      %p283 = por %p281, %p282
      %p285 = scmp.ne.s32.totalorder %s268, %s284
      %p286 = scmp.eq.s32.totalorder %s24, 0
      %p287 = por %p285, %p286
      %p288 = scmp.le.s32.totalorder 1, %s18
      %p289 = scmp.lt.s32.totalorder %s18, 3
      %p290 = pnand %p288, %p289
      %p291 = pneg %p290
      // Predicated region
      $region9: #{transformer_forward.15} parent=5 // pred_check
        _
      $region10: #{transformer_forward.15} parent=5 // pred_check_branch
        %293 = sbr.rel (%p290) target = $region12
      $region11: #{transformer_forward.15} parent=5 // pred_region
        %s294 = ssub.s32 %s18, 1
        // Predicated region
        $region13: #{transformer_forward.15} parent=11 // pred_check
          %p295 = pneg %p105
        $region14: #{transformer_forward.15} parent=11 // pred_check_branch
          %297 = sbr.rel (%p295) target = $region16
        $region15: #{transformer_forward.15} parent=11 // pred_region
          _
        $region16: #{transformer_forward.15} parent=11 // pred_fallthru
          _
        // Predicated region
        $region17: #{transformer_forward.15} parent=11 // pred_check
          %p298 = pneg %p126
        $region18: #{transformer_forward.15} parent=11 // pred_check_branch
          %300 = sbr.rel (%p298) target = $region20
        $region19: #{transformer_forward.15} parent=11 // pred_region
          _
        $region20: #{transformer_forward.15} parent=11 // pred_fallthru
          _
        // Predicated region
        $region21: #{transformer_forward.15} parent=11 // pred_check
          %p301 = pneg %p147
        $region22: #{transformer_forward.15} parent=11 // pred_check_branch
          %303 = sbr.rel (%p301) target = $region24
        $region23: #{transformer_forward.15} parent=11 // pred_region
          _
        $region24: #{transformer_forward.15} parent=11 // pred_fallthru
          _
        // Predicated region
        $region25: #{transformer_forward.15} parent=11 // pred_check
          %p304 = pneg %p168
        $region26: #{transformer_forward.15} parent=11 // pred_check_branch
          %306 = sbr.rel (%p304) target = $region28
        $region27: #{transformer_forward.15} parent=11 // pred_region
          _
        $region28: #{transformer_forward.15} parent=11 // pred_fallthru
          _
        // Predicated region
        $region29: #{transformer_forward.15} parent=11 // pred_check
          %p307 = pneg %p189
        $region30: #{transformer_forward.15} parent=11 // pred_check_branch
          %309 = sbr.rel (%p307) target = $region32
        $region31: #{transformer_forward.15} parent=11 // pred_region
          _
        $region32: #{transformer_forward.15} parent=11 // pred_fallthru
          _
        // Predicated region
        $region33: #{transformer_forward.15} parent=11 // pred_check
          %p310 = pneg %p210
        $region34: #{transformer_forward.15} parent=11 // pred_check_branch
          %312 = sbr.rel (%p310) target = $region36
        $region35: #{transformer_forward.15} parent=11 // pred_region
          %314 = vsyncadd [#allocation4], 0
          %s316 = sshll.u32 %s7, 4
          %s317 = int_to_ptr.hbm [resolvable:$true] %s316
          %s318 = sshll.u32 [#allocation3], 4
          %s319 = int_to_ptr.vmem [resolvable:$true] %s318
          %321 = dma.hbm_to_vmem [thread:$0]  %s317, 16, %s319, [#allocation4]
        $region36: #{transformer_forward.15} parent=11 // pred_fallthru
          _
        // Predicated region
        $region37: #{transformer_forward.15} parent=11 // pred_check
          %p322 = pneg %p231
        $region38: #{transformer_forward.15} parent=11 // pred_check_branch
          %324 = sbr.rel (%p322) target = $region40
        $region39: #{transformer_forward.15} parent=11 // pred_region
          %326 = vsyncadd [#allocation6], 0
          %s328 = sshll.u32 %s8, 4
          %s329 = int_to_ptr.hbm [resolvable:$true] %s328
          %s330 = sshll.u32 [#allocation5], 4
          %s331 = int_to_ptr.vmem [resolvable:$true] %s330
          %333 = dma.hbm_to_vmem [thread:$0]  %s329, 16, %s331, [#allocation6]
        $region40: #{transformer_forward.15} parent=11 // pred_fallthru
          _
        // Predicated region
        $region41: #{transformer_forward.15} parent=11 // pred_check
          %p334 = pneg %p252
        $region42: #{transformer_forward.15} parent=11 // pred_check_branch
          %336 = sbr.rel (%p334) target = $region44
        $region43: #{transformer_forward.15} parent=11 // pred_region
          %338 = vsyncadd [#allocation6], 0
          %s340 = sshll.u32 %s9, 4
          %s341 = int_to_ptr.hbm [resolvable:$true] %s340
          %s342 = sshll.u32 [#allocation7], 4
          %s343 = int_to_ptr.vmem [resolvable:$true] %s342
          %345 = dma.hbm_to_vmem [thread:$0]  %s341, 16, %s343, [#allocation6]
        $region44: #{transformer_forward.15} parent=11 // pred_fallthru
          _
      $region12: #{transformer_forward.15} parent=5 // pred_fallthru
        _
      %p346 = scmp.lt.s32.totalorder %s18, 2
      // Predicated region
      $region45: #{transformer_forward.15} parent=5 // pred_check
        %p347 = pneg %p346
      $region46: #{transformer_forward.15} parent=5 // pred_check_branch
        %349 = sbr.rel (%p347) target = $region48
      $region47: #{transformer_forward.15} parent=5 // pred_region
        // Predicated region
        $region49: #{transformer_forward.15} parent=47 // pred_check
          %p350 = pneg %p52
        $region50: #{transformer_forward.15} parent=47 // pred_check_branch
          %352 = sbr.rel (%p350) target = $region52
        $region51: #{transformer_forward.15} parent=47 // pred_region
          %p353 = scmp.lt.s32.totalorder %s25, 1
          %s354 = scalar_select %p353, %s25, 1
          %p355 = scmp.lt.s32.totalorder %s26, 0
          %s356 = scalar_select %p355, %s26, 0
          %s357 = sadd.s32 %s356, %s354
          %s358 = smul.addr %s357, 4
          %s359 = scalar_lea.vmem %s0, %s358
        $region52: #{transformer_forward.15} parent=47 // pred_fallthru
          _
        // Predicated region
        $region53: #{transformer_forward.15} parent=47 // pred_check
          %p360 = pneg %p78
        $region54: #{transformer_forward.15} parent=47 // pred_check_branch
          %362 = sbr.rel (%p360) target = $region56
        $region55: #{transformer_forward.15} parent=47 // pred_region
          %p363 = scmp.lt.s32.totalorder %s25, 1
          %s364 = scalar_select %p363, %s25, 1
          %s365 = smul.addr %s364, 4
          %s366 = scalar_lea.vmem %s1, %s365
        $region56: #{transformer_forward.15} parent=47 // pred_fallthru
          _
      $region48: #{transformer_forward.15} parent=5 // pred_fallthru
        _
      %p367 = scmp.le.s32.totalorder 1, %s18
      %p368 = scmp.lt.s32.totalorder %s18, 3
      %p369 = pnand %p367, %p368
      %p370 = pneg %p369
      // Predicated region
      $region57: #{transformer_forward.15} parent=5 // pred_check
        _
      $region58: #{transformer_forward.15} parent=5 // pred_check_branch
        %372 = sbr.rel (%p369) target = $region60
      $region59: #{transformer_forward.15} parent=5 // pred_region
        %s373 = ssub.s32 %s18, 1
        // Predicated region
        $region61: #{transformer_forward.15} parent=59 // pred_check
          %p374 = pneg %p210
        $region62: #{transformer_forward.15} parent=59 // pred_check_branch
          %376 = sbr.rel (%p374) target = $region64
        $region63: #{transformer_forward.15} parent=59 // pred_region
          %378 = dma.done [#allocation4], 16
        $region64: #{transformer_forward.15} parent=59 // pred_fallthru
          _
        // Predicated region
        $region65: #{transformer_forward.15} parent=59 // pred_check
          %p379 = pneg %p231
        $region66: #{transformer_forward.15} parent=59 // pred_check_branch
          %381 = sbr.rel (%p379) target = $region68
        $region67: #{transformer_forward.15} parent=59 // pred_region
          %383 = dma.done [#allocation6], 16
        $region68: #{transformer_forward.15} parent=59 // pred_fallthru
          _
        // Predicated region
        $region69: #{transformer_forward.15} parent=59 // pred_check
          %p384 = pneg %p252
        $region70: #{transformer_forward.15} parent=59 // pred_check_branch
          %386 = sbr.rel (%p384) target = $region72
        $region71: #{transformer_forward.15} parent=59 // pred_region
          %388 = dma.done [#allocation6], 16
        $region72: #{transformer_forward.15} parent=59 // pred_fallthru
          _
        %p389 = scmp.lt.s32.totalorder %s27, 1
        %s390 = scalar_select %p389, %s27, 1
        %p391 = scmp.lt.s32.totalorder %s28, 0
        %s392 = scalar_select %p391, %s28, 0
        %s393 = sadd.s32 %s392, %s390
        %s394 = smul.addr %s393, 4
        %s395 = scalar_lea.vmem %s0, %s394
        %p396 = pneg %p58
        %p397 = pneg %p55
        %p398 = scmp.lt.s32.totalorder %s27, 1
        %s399 = scalar_select %p398, %s27, 1
        %s400 = smul.addr %s399, 4
        %s401 = scalar_lea.vmem %s1, %s400
        %p402 = pneg %p84
        %p403 = pneg %p81
        %p404 = pneg %p105
        %p405 = pneg %p102
        %p406 = pneg %p126
        %p407 = pneg %p123
        %p408 = pneg %p147
        %p409 = pneg %p144
        %p410 = pneg %p168
        %p411 = pneg %p165
        %p412 = pneg %p189
        %p413 = pneg %p186
        %p414 = pneg %p210
        %p415 = pneg %p207
        %p416 = pneg %p231
        %p417 = pneg %p228
        %p418 = pneg %p252
        %p419 = pneg %p249
        %p420 = pneg %p280
        %p421 = pneg %p277
        %p422 = scmp.lt.s32.totalorder %s27, 1
        %s423 = scalar_select %p422, %s27, 1
        %p424 = scmp.lt.s32.totalorder %s28, 0
        %s425 = scalar_select %p424, %s28, 0
        %s426 = sadd.s32 %s425, %s423
        %s427 = smul.addr %s426, 4
        %s428 = scalar_lea.vmem %s10, %s427
        %p429 = scmp.lt.s32.totalorder %s27, 1
        %s430 = scalar_select %p429, %s27, 1
        %p431 = scmp.lt.s32.totalorder %s28, 0
        %s432 = scalar_select %p431, %s28, 0
        %s433 = sadd.s32 %s432, %s430
        %s434 = smul.addr %s433, 4
        %s435 = scalar_lea.vmem %s0, %s434
        %p436 = scmp.lt.s32.totalorder %s27, 1
        %s437 = scalar_select %p436, %s27, 1
        %s438 = smul.addr %s437, 4
        %s439 = scalar_lea.vmem %s1, %s438
        %p440 = scmp.lt.s32.totalorder %s27, 1
        %s441 = scalar_select %p440, %s27, 1
        %p442 = scmp.lt.s32.totalorder %s28, 0
        %s443 = scalar_select %p442, %s28, 0
        %s444 = sadd.s32 %s443, %s441
        %s445 = smul.addr %s444, 4
        %s446 = scalar_lea.vmem %s10, %s445
        %v448 = vld [vmem:[%s435] sm:$0xf]
        %p449 = scmp.eq.s32.totalorder %s28, 0
        // Predicated region
        $region73: #{transformer_forward.15} parent=59 // pred_check
          %p450 = pneg %p449
        $region74: #{transformer_forward.15} parent=59 // pred_check_branch
          %452 = sbr.rel (%p450) target = $region76
        $region75: #{transformer_forward.15} parent=59 // pred_region
          %v453 = vld [vmem:[%s439] sm:$0xf]
          %v454 = vld [vmem:[%s4] sm:$0xf]
          %v455 = vld [vmem:[%s4 + $0x4] sm:$0xf]
          %v456 = vld [vmem:[%s4 + $0x8] sm:$0xf]
          %v457 = vld [vmem:[%s4 + $0xc] sm:$0xf]
          %v458 = vld [vmem:[%s5] sm:$0x1]
          %v460 = vperm.slane %v458, 0
          %v466 = vunpack.c.l.b16 %v454
          %v467 = vunpack.c.l.b16 %v455
          %v468 = vunpack.c.l.b16 %v456
          %v469 = vunpack.c.l.b16 %v457
          %v470 = vpack.c.b16 %v467, %v466
          %v471 = vpack.c.b16 %v469, %v468
          %vm474 = vcmask 261120
          %v476 = vsel %vm474, %v453, 0
          %478 = vmatpush.bf16.msra.mxu0 0
          %479 = vmatpush.bf16.msra.mxu0 0
          %480 = vmatpush.bf16.msra.mxu0 0
          %481 = vmatpush.bf16.msra.mxu0 0
          %482 = vmatpush.bf16.msra.mxu0 0
          %483 = vmatpush.bf16.msra.mxu0 0
          %484 = vmatpush.bf16.msra.mxu0 %v471
          %485 = vmatpush.bf16.msra.mxu0 %v470
          %486 = vmatmul.bf16.gmra.mxu0 %v476
          %v487 = vpop.f32.mrf.mxu0
          %v488 = vadd.f32 %v460, %v487
          %v489 = vpop.f32.mrf.mxu0
          %490 = vdwg.mxu0
          %v491 = vpack.c.bf16 %v488, %v488
          %vm492 = vcmask 519168
          %493 = vst.msk [vmem:[#allocation2] sm:$0xf] %vm492, %v491
        $region76: #{transformer_forward.15} parent=59 // pred_fallthru
          _
        %v494 = vld [vmem:[%s2] sm:$0xf]
        %v495 = vld [vmem:[%s2 + $0x4] sm:$0xf]
        %v496 = vld [vmem:[%s2 + $0x8] sm:$0xf]
        %v497 = vld [vmem:[%s2 + $0xc] sm:$0xf]
        %v498 = vld [vmem:[%s3] sm:$0x1]
        %v500 = vperm.slane %v498, 0
        %v506 = vunpack.c.l.b16 %v494
        %v507 = vunpack.c.l.b16 %v495
        %v508 = vunpack.c.l.b16 %v496
        %v509 = vunpack.c.l.b16 %v497
        %v510 = vpack.c.b16 %v507, %v506
        %v511 = vpack.c.b16 %v509, %v508
        %vm514 = vcmask 261120
        %v516 = vsel %vm514, %v448, 0
        %518 = vmatpush.bf16.msra.mxu0 0
        %519 = vmatpush.bf16.msra.mxu0 0
        %520 = vmatpush.bf16.msra.mxu0 0
        %521 = vmatpush.bf16.msra.mxu0 0
        %522 = vmatpush.bf16.msra.mxu0 0
        %523 = vmatpush.bf16.msra.mxu0 0
        %524 = vmatpush.bf16.msra.mxu0 %v511
        %525 = vmatpush.bf16.msra.mxu0 %v510
        %526 = vmatmul.bf16.gmra.mxu0 %v516
        %v527 = vpop.f32.mrf.mxu0
        %v528 = vadd.f32 %v500, %v527
        %v529 = vpop.f32.mrf.mxu0
        %530 = vdwg.mxu0
        %v531 = vmul.f32 %v528, 0.35355338
        %v532 = vpack.c.bf16 %v531, %v531
        %v533 = vld [vmem:[#allocation2] sm:$0xf]
        %vm534 = vcmask 64512
        %v536 = vsel %vm534, %v532, 0
        %v539 = vsel %vm534, %v533, 0
        %541 = vmatpush.bf16.xpose.msra.mxu0 0
        %542 = vmatpush.bf16.xpose.msra.mxu0 0
        %543 = vmatpush.bf16.xpose.msra.mxu0 0
        %544 = vmatpush.bf16.xpose.msra.mxu0 0
        %545 = vmatpush.bf16.xpose.msra.mxu0 0
        %546 = vmatpush.bf16.xpose.msra.mxu0 0
        %547 = vmatpush.bf16.xpose.msra.mxu0 0
        %548 = vmatpush.bf16.xpose.msra.mxu0 %v539
        %549 = vmatmul.bf16.gmra.mxu0 %v536
        %v550 = vpop.f32.mrf.mxu0
        %v551 = vadd.f32 0.0, %v550
        %v552 = vpop.f32.mrf.mxu0
        %553 = vdwg.mxu0
        %v554 = vsel %vm534, %v551, -inf
        %555 = vmax.xlane.f32.xlu0 %v554
        %v556 = vpop.xlane.xlu0 %555
        %v557 = vsub.f32 %v551, %v556
        %v558 = vmul.f32 %v557, 1.442695
        %v559 = vpow.pop %v558
        %v560 = vsel %vm534, %v559, 0.0
        %561 = vadd.xlane.f32.xlu0 %v560
        %v562 = vpop.xlane.xlu0 %561
        %v563 = vrcp.pop %v562
        %v564 = vmul.f32 %v559, %v563
        %v565 = vpack.c.bf16 %v564, %v564
        %v567 = vunpack.c.l.b16 %v533
        %v568 = vpack.c.b16 %v567, %v567
        %569 = vrot.lane.b32.xlu0 %v568, 96
        %v570 = vpop.permute.xlu0 %569
        %v572 = vsel %vm534, %v565, 0
        %vm574 = vcmask 1043456
        %v576 = vsel %vm574, %v570, 0
        %578 = vmatpush.bf16.msra.mxu0 0
        %579 = vmatpush.bf16.msra.mxu0 0
        %580 = vmatpush.bf16.msra.mxu0 0
        %581 = vmatpush.bf16.msra.mxu0 0
        %582 = vmatpush.bf16.msra.mxu0 0
        %583 = vmatpush.bf16.msra.mxu0 0
        %584 = vmatpush.bf16.msra.mxu0 0
        %585 = vmatpush.bf16.msra.mxu0 %v576
        %586 = vmatmul.bf16.gmra.mxu0 %v572
        %v587 = vpop.f32.mrf.mxu0
        %v588 = vadd.f32 0.0, %v587
        %v589 = vpop.f32.mrf.mxu0
        %590 = vdwg.mxu0
        %v592 = vunpack.c.l.b16 %v532
        %v593 = vpack.c.b16 %v592, %v592
        %594 = vrot.lane.b32.xlu0 %v593, 120
        %v595 = vpop.permute.xlu0 %594
        %596 = vrot.lane.b32.xlu0 %v568, 120
        %v597 = vpop.permute.xlu0 %596
        %v599 = vsel %vm534, %v595, 0
        %v602 = vsel %vm534, %v597, 0
        %604 = vmatpush.bf16.xpose.msra.mxu0 0
        %605 = vmatpush.bf16.xpose.msra.mxu0 0
        %606 = vmatpush.bf16.xpose.msra.mxu0 0
        %607 = vmatpush.bf16.xpose.msra.mxu0 0
        %608 = vmatpush.bf16.xpose.msra.mxu0 0
        %609 = vmatpush.bf16.xpose.msra.mxu0 0
        %610 = vmatpush.bf16.xpose.msra.mxu0 0
        %611 = vmatpush.bf16.xpose.msra.mxu0 %v602
        %612 = vmatmul.bf16.gmra.mxu0 %v599
        %v613 = vpop.f32.mrf.mxu0
        %v614 = vadd.f32 0.0, %v613
        %v615 = vpop.f32.mrf.mxu0
        %616 = vdwg.mxu0
        %v617 = vsel %vm534, %v614, -inf
        %618 = vmax.xlane.f32.xlu0 %v617
        %v619 = vpop.xlane.xlu0 %618
        %v620 = vsub.f32 %v614, %v619
        %v621 = vmul.f32 %v620, 1.442695
        %v622 = vpow.pop %v621
        %v623 = vsel %vm534, %v622, 0.0
        %624 = vadd.xlane.f32.xlu0 %v623
        %v625 = vpop.xlane.xlu0 %624
        %v626 = vrcp.pop %v625
        %v627 = vmul.f32 %v622, %v626
        %v628 = vpack.c.bf16 %v627, %v627
        %629 = vrot.lane.b32.xlu0 %v568, 88
        %v630 = vpop.permute.xlu0 %629
        %v632 = vsel %vm534, %v628, 0
        %v635 = vsel %vm574, %v630, 0
        %637 = vmatpush.bf16.msra.mxu0 0
        %638 = vmatpush.bf16.msra.mxu0 0
        %639 = vmatpush.bf16.msra.mxu0 0
        %640 = vmatpush.bf16.msra.mxu0 0
        %641 = vmatpush.bf16.msra.mxu0 0
        %642 = vmatpush.bf16.msra.mxu0 0
        %643 = vmatpush.bf16.msra.mxu0 0
        %644 = vmatpush.bf16.msra.mxu0 %v635
        %645 = vmatmul.bf16.gmra.mxu0 %v632
        %v646 = vpop.f32.mrf.mxu0
        %v647 = vadd.f32 0.0, %v646
        %v648 = vpop.f32.mrf.mxu0
        %649 = vdwg.mxu0
        %650 = vrot.lane.b32.xlu0 %v593, 112
        %v651 = vpop.permute.xlu0 %650
        %652 = vrot.lane.b32.xlu0 %v568, 112
        %v653 = vpop.permute.xlu0 %652
        %v655 = vsel %vm534, %v651, 0
        %v658 = vsel %vm534, %v653, 0
        %660 = vmatpush.bf16.xpose.msra.mxu0 0
        %661 = vmatpush.bf16.xpose.msra.mxu0 0
        %662 = vmatpush.bf16.xpose.msra.mxu0 0
        %663 = vmatpush.bf16.xpose.msra.mxu0 0
        %664 = vmatpush.bf16.xpose.msra.mxu0 0
        %665 = vmatpush.bf16.xpose.msra.mxu0 0
        %666 = vmatpush.bf16.xpose.msra.mxu0 0
        %667 = vmatpush.bf16.xpose.msra.mxu0 %v658
        %668 = vmatmul.bf16.gmra.mxu0 %v655
        %v669 = vpop.f32.mrf.mxu0
        %v670 = vadd.f32 0.0, %v669
        %v671 = vpop.f32.mrf.mxu0
        %672 = vdwg.mxu0
        %v673 = vsel %vm534, %v670, -inf
        %674 = vmax.xlane.f32.xlu0 %v673
        %v675 = vpop.xlane.xlu0 %674
        %v676 = vsub.f32 %v670, %v675
        %v677 = vmul.f32 %v676, 1.442695
        %v678 = vpow.pop %v677
        %v679 = vsel %vm534, %v678, 0.0
        %680 = vadd.xlane.f32.xlu0 %v679
        %v681 = vpop.xlane.xlu0 %680
        %v682 = vrcp.pop %v681
        %v683 = vmul.f32 %v678, %v682
        %v684 = vpack.c.bf16 %v683, %v683
        %685 = vrot.lane.b32.xlu0 %v568, 80
        %v686 = vpop.permute.xlu0 %685
        %v688 = vsel %vm534, %v684, 0
        %v691 = vsel %vm574, %v686, 0
        %693 = vmatpush.bf16.msra.mxu0 0
        %694 = vmatpush.bf16.msra.mxu0 0
        %695 = vmatpush.bf16.msra.mxu0 0
        %696 = vmatpush.bf16.msra.mxu0 0
        %697 = vmatpush.bf16.msra.mxu0 0
        %698 = vmatpush.bf16.msra.mxu0 0
        %699 = vmatpush.bf16.msra.mxu0 0
        %700 = vmatpush.bf16.msra.mxu0 %v691
        %701 = vmatmul.bf16.gmra.mxu0 %v688
        %v702 = vpop.f32.mrf.mxu0
        %v703 = vadd.f32 0.0, %v702
        %v704 = vpop.f32.mrf.mxu0
        %705 = vdwg.mxu0
        %706 = vrot.lane.b32.xlu0 %v593, 104
        %v707 = vpop.permute.xlu0 %706
        %708 = vrot.lane.b32.xlu0 %v568, 104
        %v709 = vpop.permute.xlu0 %708
        %v711 = vsel %vm534, %v707, 0
        %v714 = vsel %vm534, %v709, 0
        %716 = vmatpush.bf16.xpose.msra.mxu0 0
        %717 = vmatpush.bf16.xpose.msra.mxu0 0
        %718 = vmatpush.bf16.xpose.msra.mxu0 0
        %719 = vmatpush.bf16.xpose.msra.mxu0 0
        %720 = vmatpush.bf16.xpose.msra.mxu0 0
        %721 = vmatpush.bf16.xpose.msra.mxu0 0
        %722 = vmatpush.bf16.xpose.msra.mxu0 0
        %723 = vmatpush.bf16.xpose.msra.mxu0 %v714
        %724 = vmatmul.bf16.gmra.mxu0 %v711
        %v725 = vpop.f32.mrf.mxu0
        %v726 = vadd.f32 0.0, %v725
        %v727 = vpop.f32.mrf.mxu0
        %728 = vdwg.mxu0
        %v729 = vsel %vm534, %v726, -inf
        %730 = vmax.xlane.f32.xlu0 %v729
        %v731 = vpop.xlane.xlu0 %730
        %v732 = vsub.f32 %v726, %v731
        %v733 = vmul.f32 %v732, 1.442695
        %v734 = vpow.pop %v733
        %v735 = vsel %vm534, %v734, 0.0
        %736 = vadd.xlane.f32.xlu0 %v735
        %v737 = vpop.xlane.xlu0 %736
        %v738 = vrcp.pop %v737
        %v739 = vmul.f32 %v734, %v738
        %v740 = vpack.c.bf16 %v739, %v739
        %741 = vrot.lane.b32.xlu0 %v568, 72
        %v742 = vpop.permute.xlu0 %741
        %v744 = vsel %vm534, %v740, 0
        %v747 = vsel %vm574, %v742, 0
        %749 = vmatpush.bf16.msra.mxu0 0
        %750 = vmatpush.bf16.msra.mxu0 0
        %751 = vmatpush.bf16.msra.mxu0 0
        %752 = vmatpush.bf16.msra.mxu0 0
        %753 = vmatpush.bf16.msra.mxu0 0
        %754 = vmatpush.bf16.msra.mxu0 0
        %755 = vmatpush.bf16.msra.mxu0 0
        %756 = vmatpush.bf16.msra.mxu0 %v747
        %757 = vmatmul.bf16.gmra.mxu0 %v744
        %v758 = vpop.f32.mrf.mxu0
        %v759 = vadd.f32 0.0, %v758
        %v760 = vpop.f32.mrf.mxu0
        %761 = vdwg.mxu0
        %763 = vrot.lane.b32.xlu0 %v647, 8
        %v764 = vpop.permute.xlu0 %763
        %767 = vrot.lane.b32.xlu0 %v703, 16
        %v768 = vpop.permute.xlu0 %767
        %771 = vrot.lane.b32.xlu0 %v759, 24
        %v772 = vpop.permute.xlu0 %771
        %v774 = vsel %vm534, %v588, %v764
        %vm775 = vcmask 130048
        %v776 = vsel %vm775, %v774, %v768
        %vm777 = vcmask 195584
        %v778 = vsel %vm777, %v776, %v772
        %v779 = vpack.c.bf16 %v778, %v778
        %v780 = vld [vmem:[%s6] sm:$0xf]
        %v781 = vld [vmem:[%s6 + $0x4] sm:$0xf]
        %v782 = vld [vmem:[%s6 + $0x8] sm:$0xf]
        %v783 = vld [vmem:[%s6 + $0xc] sm:$0xf]
        %v784 = vld [vmem:[#allocation3] sm:$0x1]
        %v786 = vperm.slane %v784, 0
        %v792 = vunpack.c.l.b16 %v780
        %v793 = vunpack.c.l.b16 %v781
        %v794 = vunpack.c.l.b16 %v782
        %v795 = vunpack.c.l.b16 %v783
        %v796 = vpack.c.b16 %v793, %v792
        %v797 = vpack.c.b16 %v795, %v794
        %v801 = vsel %vm514, %v779, 0
        %803 = vmatpush.bf16.msra.mxu0 0
        %804 = vmatpush.bf16.msra.mxu0 0
        %805 = vmatpush.bf16.msra.mxu0 0
        %806 = vmatpush.bf16.msra.mxu0 0
        %807 = vmatpush.bf16.msra.mxu0 0
        %808 = vmatpush.bf16.msra.mxu0 0
        %809 = vmatpush.bf16.msra.mxu0 %v797
        %810 = vmatpush.bf16.msra.mxu0 %v796
        %811 = vmatmul.bf16.gmra.mxu0 %v801
        %v812 = vpop.f32.mrf.mxu0
        %v813 = vadd.f32 %v786, %v812
        %v814 = vpop.f32.mrf.mxu0
        %815 = vdwg.mxu0
        %v816 = vunpack.c.l.bf16 %v448
        %v817 = vadd.f32 %v816, %v813
        %v818 = vld [vmem:[#allocation5] sm:$0x1]
        %v819 = vld [vmem:[#allocation7] sm:$0x1]
        %v820 = vsel %vm514, %v817, 0.0
        %821 = vadd.xlane.f32.xlu0 %v820
        %v822 = vpop.xlane.xlu0 %821
        %v823 = vrcp.pop 32.0
        %v824 = vmul.f32 32.0, %v823
        %v825 = vsub.f32 1.0, %v824
        %v826 = vmul.f32 %v823, %v825
        %v827 = vadd.f32 %v823, %v826
        %vm828 = vweird.f32 %v823
        %v829 = vsel %vm828, %v823, %v827
        %v830 = vmul.f32 %v822, %v829
        %v831 = vsub.f32 %v817, %v830
        %v832 = vmul.f32 %v831, %v831
        %v833 = vsel %vm514, %v832, 0.0
        %834 = vadd.xlane.f32.xlu0 %v833
        %v835 = vpop.xlane.xlu0 %834
        %v836 = vmul.f32 %v835, %v829
        %v837 = vadd.f32 %v836, 1e-05
        %v838 = vrsqrt.pop %v837
        %v839 = vmul.f32 %v838, %v837
        %v840 = vmul.f32 %v839, %v838
        %v841 = vmul.f32 0.5, %v840
        %v842 = vsub.f32 1.5, %v841
        %v843 = vmul.f32 %v838, %v842
        %vm844 = vweird.f32 %v837
        %vm845 = vweird.f32 %v838
        %vm846 = vmor %vm844, %vm845
        %v847 = vsel %vm846, %v838, %v843
        %v848 = vmul.f32 %v831, %v847
        %v850 = vperm.slane %v818, 0
        %v852 = vmul.f32 %v848, %v850
        %v854 = vperm.slane %v819, 0
        %v856 = vadd.f32 %v852, %v854
        %v857 = vpack.c.bf16 %v856, %v856
        %vm858 = vcmask 257024
        %859 = vst.msk [vmem:[%s446] sm:$0xf] %vm858, %v857
        %p860 = scmp.lt.s32.totalorder %s27, 1
        %s861 = scalar_select %p860, %s27, 1
        %p862 = scmp.lt.s32.totalorder %s28, 0
        %s863 = scalar_select %p862, %s28, 0
        %s864 = sadd.s32 %s863, %s861
        %s865 = smul.addr %s864, 4
        %s866 = scalar_lea.vmem %s10, %s865
        // Predicated region
        $region77: #{transformer_forward.15} parent=59 // pred_check
          %p867 = pneg %p277
        $region78: #{transformer_forward.15} parent=59 // pred_check_branch
          %869 = sbr.rel (%p867) target = $region80
        $region79: #{transformer_forward.15} parent=59 // pred_region
          _
        $region80: #{transformer_forward.15} parent=59 // pred_fallthru
          _
      $region60: #{transformer_forward.15} parent=5 // pred_fallthru
        _
      %p870 = scmp.le.s32.totalorder 2, %s18
      // Predicated region
      $region81: #{transformer_forward.15} parent=5 // pred_check
        %p871 = pneg %p870
      $region82: #{transformer_forward.15} parent=5 // pred_check_branch
        %873 = sbr.rel (%p871) target = $region84
      $region83: #{transformer_forward.15} parent=5 // pred_region
        %s874 = ssub.s32 %s18, 2
        // Predicated region
        $region85: #{transformer_forward.15} parent=83 // pred_check
          %p875 = pneg %p283
        $region86: #{transformer_forward.15} parent=83 // pred_check_branch
          %877 = sbr.rel (%p875) target = $region88
        $region87: #{transformer_forward.15} parent=83 // pred_region
          %p878 = scmp.lt.s32.totalorder %s29, 1
          %s879 = scalar_select %p878, %s29, 1
          %p880 = scmp.lt.s32.totalorder %s30, 0
          %s881 = scalar_select %p880, %s30, 0
          %s882 = sadd.s32 %s881, %s879
          %s883 = smul.addr %s882, 4
          %s884 = scalar_lea.vmem %s10, %s883
        $region88: #{transformer_forward.15} parent=83 // pred_fallthru
          _
      $region84: #{transformer_forward.15} parent=5 // pred_fallthru
        _
    $region6: #{transformer_forward.15} parent=1 // loop_footer
      %s22 = sadd.s32 1, %s18
    $region7: #{transformer_forward.15} parent=1 // loop_footer_branch
      %17 = sbr.rel target = $region3
    $region8: #{transformer_forward.15} parent=1 // loop_exit
      _
    %885 = vsyncpa [#allocation4], 1
    %s886 = scalar_lea.sflag [#allocation4], 1
    %887 = vsyncpa %s886, 1
    %888 = vsyncpa [#allocation6], 1

// kernel: transformer_forward.17
$region0: #{transformer_forward.17}
  #allocation0 [shape = 'u32[]', space=smem, size = 0x4, offset = 0x4, fixed_abs, tag = 'smem constant byte address 0x4 - core index']
  #allocation1 [shape = 'u32[72,128]{1,0:T(1,128)}', space=vmem, size = 0x9000, scoped, tag = 'internal scratch']
  #allocation2 [shape = 'f32[16,32]{1,0:T(8,128)}', space=vmem, size = 0x2000, scoped, tag = 'scratch operand']
  %s0 = inlined_call_operand.vmem [shape: bf16[16,32], index: 0, kind: input, shape index: {}]
  %s1 = inlined_call_operand.vmem [shape: bf16[32,64], index: 1, kind: input, shape index: {}]
  %s2 = inlined_call_operand.hbm [shape: f32[1,64], index: 2, kind: input, shape index: {}]
  %s3 = inlined_call_operand.vmem [shape: bf16[64,32], index: 3, kind: input, shape index: {}]
  %s4 = inlined_call_operand.hbm [shape: f32[1,32], index: 4, kind: input, shape index: {}]
  %s5 = inlined_call_operand.hbm [shape: f32[1,32], index: 5, kind: input, shape index: {}, may-alias: {5,7}]
  %s6 = inlined_call_operand.hbm [shape: f32[1,32], index: 6, kind: input, shape index: {}, may-alias: {6,8}]
  %s7 = inlined_call_operand.hbm [shape: f32[1,32], index: 7, kind: input, shape index: {}, may-alias: {5,7}]
  %s8 = inlined_call_operand.hbm [shape: f32[1,32], index: 8, kind: input, shape index: {}, may-alias: {6,8}]
  %s9 = inlined_call_operand.vmem [shape: bf16[16,32], index: 9, kind: output, shape index: {}]
  %s10 = sld [smem:[#allocation0]]
  $region78: #{transformer_forward.17} parent=0
    _
  %s12 = ssub.s32 1, %s10
  %s13 = scalar_select 0, %s12, %s10
  $region1: #{transformer_forward.17} parent=0
    #allocation3 [shape = 'u8[512]{0}', space=vmem, size = 0x400, scoped, tag = 'input window, operand 2, single buffered']
    #allocation4 [shape = 's32[1]{0}', space=sflag, size = 0x4, scoped, tag = 'scoped memory for transformer_forward.17']
    #allocation5 [shape = 'u8[512]{0}', space=vmem, size = 0x400, scoped, tag = 'input window, operand 4, single buffered']
    #allocation6 [shape = 's32[1]{0}', space=sflag, size = 0x4, scoped, tag = 'scoped memory for transformer_forward.17']
    #allocation7 [shape = 'u8[512]{0}', space=vmem, size = 0x400, scoped, tag = 'input window, operand 5, single buffered']
    #allocation8 [shape = 'u8[512]{0}', space=vmem, size = 0x400, scoped, tag = 'input window, operand 6, single buffered']
    #allocation9 [shape = 's32[1]{0}', space=sflag, size = 0x4, scoped, tag = 'scoped memory for transformer_forward.17']
    #allocation10 [shape = 'u8[512]{0}', space=vmem, size = 0x400, scoped, tag = 'input window, operand 7, single buffered']
    #allocation11 [shape = 'u8[512]{0}', space=vmem, size = 0x400, scoped, tag = 'input window, operand 8, single buffered']
    #allocation12 [shape = 's32[1]{0}', space=sflag, size = 0x4, scoped, tag = 'scoped memory for transformer_forward.17']
    %14 = vsyncpa [#allocation4], 0
    %15 = vsyncpa [#allocation6], 0
    %16 = vsyncpa [#allocation9], 0
    %17 = vsyncpa [#allocation12], 0
    // Predicated region
    $region2: #{transformer_forward.17} parent=1 // pred_check
      _
    $region3: #{transformer_forward.17} parent=1 // pred_check_branch
      %19 = sbr.rel (0) target = $region5
    $region4: #{transformer_forward.17} parent=1 // pred_region
      _
    $region5: #{transformer_forward.17} parent=1 // pred_fallthru
      _
    // Predicated region
    $region6: #{transformer_forward.17} parent=1 // pred_check
      _
    $region7: #{transformer_forward.17} parent=1 // pred_check_branch
      %21 = sbr.rel (0) target = $region9
    $region8: #{transformer_forward.17} parent=1 // pred_region
      _
    $region9: #{transformer_forward.17} parent=1 // pred_fallthru
      _
    // Predicated region
    $region10: #{transformer_forward.17} parent=1 // pred_check
      _
    $region11: #{transformer_forward.17} parent=1 // pred_check_branch
      %23 = sbr.rel (0) target = $region13
    $region12: #{transformer_forward.17} parent=1 // pred_region
      %25 = vsyncadd [#allocation4], 0
      %s27 = sshll.u32 %s2, 4
      %s28 = int_to_ptr.hbm [resolvable:$true] %s27
      %s29 = sshll.u32 [#allocation3], 4
      %s30 = int_to_ptr.vmem [resolvable:$true] %s29
      %32 = dma.hbm_to_vmem [thread:$0]  %s28, 16, %s30, [#allocation4]
    $region13: #{transformer_forward.17} parent=1 // pred_fallthru
      _
    // Predicated region
    $region14: #{transformer_forward.17} parent=1 // pred_check
      _
    $region15: #{transformer_forward.17} parent=1 // pred_check_branch
      %34 = sbr.rel (0) target = $region17
    $region16: #{transformer_forward.17} parent=1 // pred_region
      _
    $region17: #{transformer_forward.17} parent=1 // pred_fallthru
      _
    // Predicated region
    $region18: #{transformer_forward.17} parent=1 // pred_check
      _
    $region19: #{transformer_forward.17} parent=1 // pred_check_branch
      %36 = sbr.rel (0) target = $region21
    $region20: #{transformer_forward.17} parent=1 // pred_region
      %38 = vsyncadd [#allocation6], 0
      %s40 = sshll.u32 %s4, 4
      %s41 = int_to_ptr.hbm [resolvable:$true] %s40
      %s42 = sshll.u32 [#allocation5], 4
      %s43 = int_to_ptr.vmem [resolvable:$true] %s42
      %45 = dma.hbm_to_vmem [thread:$0]  %s41, 16, %s43, [#allocation6]
    $region21: #{transformer_forward.17} parent=1 // pred_fallthru
      _
    // Predicated region
    $region22: #{transformer_forward.17} parent=1 // pred_check
      _
    $region23: #{transformer_forward.17} parent=1 // pred_check_branch
      %47 = sbr.rel (0) target = $region25
    $region24: #{transformer_forward.17} parent=1 // pred_region
      %49 = vsyncadd [#allocation6], 0
      %s51 = sshll.u32 %s5, 4
      %s52 = int_to_ptr.hbm [resolvable:$true] %s51
      %s53 = sshll.u32 [#allocation7], 4
      %s54 = int_to_ptr.vmem [resolvable:$true] %s53
      %56 = dma.hbm_to_vmem [thread:$0]  %s52, 16, %s54, [#allocation6]
    $region25: #{transformer_forward.17} parent=1 // pred_fallthru
      _
    // Predicated region
    $region26: #{transformer_forward.17} parent=1 // pred_check
      _
    $region27: #{transformer_forward.17} parent=1 // pred_check_branch
      %58 = sbr.rel (0) target = $region29
    $region28: #{transformer_forward.17} parent=1 // pred_region
      %60 = vsyncadd [#allocation9], 0
      %s62 = sshll.u32 %s6, 4
      %s63 = int_to_ptr.hbm [resolvable:$true] %s62
      %s64 = sshll.u32 [#allocation8], 4
      %s65 = int_to_ptr.vmem [resolvable:$true] %s64
      %67 = dma.hbm_to_vmem [thread:$0]  %s63, 16, %s65, [#allocation9]
    $region29: #{transformer_forward.17} parent=1 // pred_fallthru
      _
    // Predicated region
    $region30: #{transformer_forward.17} parent=1 // pred_check
      _
    $region31: #{transformer_forward.17} parent=1 // pred_check_branch
      %69 = sbr.rel (0) target = $region33
    $region32: #{transformer_forward.17} parent=1 // pred_region
      %71 = vsyncadd [#allocation9], 0
      %s73 = sshll.u32 %s7, 4
      %s74 = int_to_ptr.hbm [resolvable:$true] %s73
      %s75 = sshll.u32 [#allocation10], 4
      %s76 = int_to_ptr.vmem [resolvable:$true] %s75
      %78 = dma.hbm_to_vmem [thread:$0]  %s74, 16, %s76, [#allocation9]
    $region33: #{transformer_forward.17} parent=1 // pred_fallthru
      _
    // Predicated region
    $region34: #{transformer_forward.17} parent=1 // pred_check
      _
    $region35: #{transformer_forward.17} parent=1 // pred_check_branch
      %80 = sbr.rel (0) target = $region37
    $region36: #{transformer_forward.17} parent=1 // pred_region
      %82 = vsyncadd [#allocation12], 0
      %s84 = sshll.u32 %s8, 4
      %s85 = int_to_ptr.hbm [resolvable:$true] %s84
      %s86 = sshll.u32 [#allocation11], 4
      %s87 = int_to_ptr.vmem [resolvable:$true] %s86
      %89 = dma.hbm_to_vmem [thread:$0]  %s85, 16, %s87, [#allocation12]
    $region37: #{transformer_forward.17} parent=1 // pred_fallthru
      _
    // Predicated region
    $region38: #{transformer_forward.17} parent=1 // pred_check
      _
    $region39: #{transformer_forward.17} parent=1 // pred_check_branch
      %91 = sbr.rel (0) target = $region41
    $region40: #{transformer_forward.17} parent=1 // pred_region
      %93 = dma.done [#allocation4], 16
    $region41: #{transformer_forward.17} parent=1 // pred_fallthru
      _
    // Predicated region
    $region42: #{transformer_forward.17} parent=1 // pred_check
      _
    $region43: #{transformer_forward.17} parent=1 // pred_check_branch
      %95 = sbr.rel (0) target = $region45
    $region44: #{transformer_forward.17} parent=1 // pred_region
      %97 = dma.done [#allocation6], 16
    $region45: #{transformer_forward.17} parent=1 // pred_fallthru
      _
    // Predicated region
    $region46: #{transformer_forward.17} parent=1 // pred_check
      _
    $region47: #{transformer_forward.17} parent=1 // pred_check_branch
      %99 = sbr.rel (0) target = $region49
    $region48: #{transformer_forward.17} parent=1 // pred_region
      %101 = dma.done [#allocation6], 16
    $region49: #{transformer_forward.17} parent=1 // pred_fallthru
      _
    // Predicated region
    $region50: #{transformer_forward.17} parent=1 // pred_check
      _
    $region51: #{transformer_forward.17} parent=1 // pred_check_branch
      %103 = sbr.rel (0) target = $region53
    $region52: #{transformer_forward.17} parent=1 // pred_region
      %105 = dma.done [#allocation9], 16
    $region53: #{transformer_forward.17} parent=1 // pred_fallthru
      _
    // Predicated region
    $region54: #{transformer_forward.17} parent=1 // pred_check
      _
    $region55: #{transformer_forward.17} parent=1 // pred_check_branch
      %107 = sbr.rel (0) target = $region57
    $region56: #{transformer_forward.17} parent=1 // pred_region
      %109 = dma.done [#allocation9], 16
    $region57: #{transformer_forward.17} parent=1 // pred_fallthru
      _
    // Predicated region
    $region58: #{transformer_forward.17} parent=1 // pred_check
      _
    $region59: #{transformer_forward.17} parent=1 // pred_check_branch
      %111 = sbr.rel (0) target = $region61
    $region60: #{transformer_forward.17} parent=1 // pred_region
      %113 = dma.done [#allocation12], 16
    $region61: #{transformer_forward.17} parent=1 // pred_fallthru
      _
    %p115 = scmp.eq.s32.totalorder 0, 0
    // Predicated region
    $region62: #{transformer_forward.17} parent=1 // pred_check
      %p116 = pneg %p115
    $region63: #{transformer_forward.17} parent=1 // pred_check_branch
      %118 = sbr.rel (%p116) target = $region65
    $region64: #{transformer_forward.17} parent=1 // pred_region
      %vm119 = vcmask 261120
      %120 = vst.msk [vmem:[#allocation2] sm:$0xff] %vm119, 0.0
      %121 = vst.msk [vmem:[#allocation2 + $0x8] sm:$0xff] %vm119, 0.0
    $region65: #{transformer_forward.17} parent=1 // pred_fallthru
      _
    %v122 = vld [vmem:[%s0] sm:$0xf]
    %v123 = vld [vmem:[%s0 + $0x4] sm:$0xf]
    %v124 = vld [vmem:[%s1] sm:$0xf]
    %v125 = vld [vmem:[%s1 + $0x4] sm:$0xf]
    %v126 = vld [vmem:[%s1 + $0x8] sm:$0xf]
    %v127 = vld [vmem:[%s1 + $0xc] sm:$0xf]
    %v128 = vld [vmem:[#allocation3] sm:$0x1]
    %v130 = vperm.slane %v128, 0
    %v134 = vunpack.c.l.b16 %v122
    %v135 = vunpack.c.l.b16 %v123
    %v136 = vpack.c.b16 %v135, %v134
    %v141 = vunpack.c.l.b16 %v124
    %v142 = vunpack.c.l.b16 %v125
    %v143 = vunpack.c.l.b16 %v126
    %v144 = vunpack.c.l.b16 %v127
    %v145 = vpack.c.b16 %v142, %v141
    %v146 = vpack.c.b16 %v144, %v143
    %vm149 = vcmask 261120
    %v151 = vsel %vm149, %v136, 0
    %153 = vmatpush.bf16.msra.mxu0 0
    %154 = vmatpush.bf16.msra.mxu0 0
    %155 = vmatpush.bf16.msra.mxu0 0
    %156 = vmatpush.bf16.msra.mxu0 0
    %157 = vmatpush.bf16.msra.mxu0 0
    %158 = vmatpush.bf16.msra.mxu0 0
    %159 = vmatpush.bf16.msra.mxu0 %v146
    %160 = vmatpush.bf16.msra.mxu0 %v145
    %161 = vmatmul.bf16.gmra.mxu0 %v151
    %v162 = vpop.f32.mrf.mxu0
    %v163 = vadd.f32 %v130, %v162
    %v164 = vpop.f32.mrf.mxu0
    %v165 = vadd.f32 %v130, %v164
    %166 = vdwg.mxu0
    %v167 = vmax.f32 %v163, 0.0
    %v168 = vmax.f32 %v165, 0.0
    %v169 = vpack.c.bf16 %v168, %v167
    %v170 = vld [vmem:[#allocation2] sm:$0xff]
    %v171 = vld [vmem:[#allocation2 + $0x8] sm:$0xff]
    %v172 = vld [vmem:[%s3] sm:$0xf]
    %v173 = vld [vmem:[%s3 + $0x4] sm:$0xf]
    %v174 = vld [vmem:[%s3 + $0x8] sm:$0xf]
    %v175 = vld [vmem:[%s3 + $0xc] sm:$0xf]
    %v176 = vld [vmem:[%s3 + $0x10] sm:$0xf]
    %v177 = vld [vmem:[%s3 + $0x14] sm:$0xf]
    %v178 = vld [vmem:[%s3 + $0x18] sm:$0xf]
    %v179 = vld [vmem:[%s3 + $0x1c] sm:$0xf]
    %v188 = vunpack.c.l.b16 %v172
    %v189 = vunpack.c.l.b16 %v173
    %v190 = vunpack.c.l.b16 %v174
    %v191 = vunpack.c.l.b16 %v175
    %v192 = vunpack.c.l.b16 %v176
    %v193 = vunpack.c.l.b16 %v177
    %v194 = vunpack.c.l.b16 %v178
    %v195 = vunpack.c.l.b16 %v179
    %v196 = vpack.c.b16 %v189, %v188
    %v197 = vpack.c.b16 %v191, %v190
    %v198 = vpack.c.b16 %v193, %v192
    %v199 = vpack.c.b16 %v195, %v194
    %vm204 = vcmask 523264
    %v206 = vsel %vm204, %v169, 0
    %208 = vmatpush.bf16.msra.mxu0 0
    %209 = vmatpush.bf16.msra.mxu0 0
    %210 = vmatpush.bf16.msra.mxu0 0
    %211 = vmatpush.bf16.msra.mxu0 0
    %212 = vmatpush.bf16.msra.mxu0 %v199
    %213 = vmatpush.bf16.msra.mxu0 %v198
    %214 = vmatpush.bf16.msra.mxu0 %v197
    %215 = vmatpush.bf16.msra.mxu0 %v196
    %216 = vmatmul.bf16.gmra.mxu0 %v206
    %v217 = vpop.f32.mrf.mxu0
    %v218 = vadd.f32 0.0, %v217
    %v219 = vpop.f32.mrf.mxu0
    %v220 = vadd.f32 0.0, %v219
    %221 = vdwg.mxu0
    %v222 = vadd.f32 %v170, %v218
    %v223 = vadd.f32 %v171, %v220
    %224 = vst.msk [vmem:[#allocation2] sm:$0xff] %vm149, %v222
    %225 = vst.msk [vmem:[#allocation2 + $0x8] sm:$0xff] %vm149, %v223
    // Predicated region
    $region66: #{transformer_forward.17} parent=1 // pred_check
      %p226 = pneg %p115
    $region67: #{transformer_forward.17} parent=1 // pred_check_branch
      %228 = sbr.rel (%p226) target = $region69
    $region68: #{transformer_forward.17} parent=1 // pred_region
      %v229 = vunpack.c.l.bf16 %v122
      %v230 = vunpack.c.l.bf16 %v123
      %v231 = vld [vmem:[#allocation2] sm:$0xff]
      %v232 = vld [vmem:[#allocation2 + $0x8] sm:$0xff]
      %v233 = vadd.f32 %v229, %v231
      %v234 = vadd.f32 %v230, %v232
      %v235 = vld [vmem:[#allocation5] sm:$0x1]
      %v237 = vperm.slane %v235, 0
      %v239 = vadd.f32 %v233, %v237
      %v240 = vadd.f32 %v234, %v237
      %v241 = vld [vmem:[#allocation7] sm:$0x1]
      %v242 = vld [vmem:[#allocation8] sm:$0x1]
      %v243 = vsel %vm149, %v239, 0.0
      %244 = vadd.xlane.f32.xlu0 %v243
      %v245 = vpop.xlane.xlu0 %244
      %v246 = vsel %vm149, %v240, 0.0
      %247 = vadd.xlane.f32.xlu0 %v246
      %v248 = vpop.xlane.xlu0 %247
      %v249 = vrcp.pop 32.0
      %v250 = vmul.f32 32.0, %v249
      %v251 = vsub.f32 1.0, %v250
      %v252 = vmul.f32 %v249, %v251
      %v253 = vadd.f32 %v249, %v252
      %vm254 = vweird.f32 %v249
      %v255 = vsel %vm254, %v249, %v253
      %v256 = vmul.f32 %v245, %v255
      %v257 = vmul.f32 %v248, %v255
      %v258 = vsub.f32 %v239, %v256
      %v259 = vsub.f32 %v240, %v257
      %v260 = vmul.f32 %v258, %v258
      %v261 = vmul.f32 %v259, %v259
      %v262 = vsel %vm149, %v260, 0.0
      %263 = vadd.xlane.f32.xlu0 %v262
      %v264 = vpop.xlane.xlu0 %263
      %v265 = vsel %vm149, %v261, 0.0
      %266 = vadd.xlane.f32.xlu0 %v265
      %v267 = vpop.xlane.xlu0 %266
      %v268 = vmul.f32 %v264, %v255
      %v269 = vmul.f32 %v267, %v255
      %v270 = vadd.f32 %v268, 1e-05
      %v271 = vadd.f32 %v269, 1e-05
      %v272 = vrsqrt.pop %v270
      %v273 = vmul.f32 %v272, %v270
      %v274 = vmul.f32 %v273, %v272
      %v275 = vmul.f32 0.5, %v274
      %v276 = vsub.f32 1.5, %v275
      %v277 = vmul.f32 %v272, %v276
      %vm278 = vweird.f32 %v270
      %vm279 = vweird.f32 %v272
      %vm280 = vmor %vm278, %vm279
      %v281 = vsel %vm280, %v272, %v277
      %v282 = vrsqrt.pop %v271
      %v283 = vmul.f32 %v282, %v271
      %v284 = vmul.f32 %v283, %v282
      %v285 = vmul.f32 0.5, %v284
      %v286 = vsub.f32 1.5, %v285
      %v287 = vmul.f32 %v282, %v286
      %vm288 = vweird.f32 %v271
      %vm289 = vweird.f32 %v282
      %vm290 = vmor %vm288, %vm289
      %v291 = vsel %vm290, %v282, %v287
      %v292 = vmul.f32 %v258, %v281
      %v293 = vmul.f32 %v259, %v291
      %v295 = vperm.slane %v241, 0
      %v297 = vmul.f32 %v292, %v295
      %v298 = vmul.f32 %v293, %v295
      %v300 = vperm.slane %v242, 0
      %v302 = vadd.f32 %v297, %v300
      %v303 = vadd.f32 %v298, %v300
      %v304 = vpack.c.bf16 %v302, %v302
      %v305 = vpack.c.bf16 %v303, %v303
      %vm306 = vcmask 257024
      %307 = vst.msk [vmem:[%s9] sm:$0xf] %vm306, %v304
      %308 = vst.msk [vmem:[%s9 + $0x4] sm:$0xf] %vm306, %v305
    $region69: #{transformer_forward.17} parent=1 // pred_fallthru
      _
    // Predicated region
    $region70: #{transformer_forward.17} parent=1 // pred_check
      _
    $region71: #{transformer_forward.17} parent=1 // pred_check_branch
      %310 = sbr.rel (0) target = $region73
    $region72: #{transformer_forward.17} parent=1 // pred_region
      _
    $region73: #{transformer_forward.17} parent=1 // pred_fallthru
      _
    // Predicated region
    $region74: #{transformer_forward.17} parent=1 // pred_check
      _
    $region75: #{transformer_forward.17} parent=1 // pred_check_branch
      %312 = sbr.rel (0) target = $region77
    $region76: #{transformer_forward.17} parent=1 // pred_region
      _
    $region77: #{transformer_forward.17} parent=1 // pred_fallthru
      _
    %313 = vsyncpa [#allocation4], 1
    %314 = vsyncpa [#allocation6], 1
    %315 = vsyncpa [#allocation9], 1
    %316 = vsyncpa [#allocation12], 1

// kernel: transformer_forward.16
$region0: #{transformer_forward.16}
  #allocation0 [shape = 'u32[]', space=smem, size = 0x4, offset = 0x4, fixed_abs, tag = 'smem constant byte address 0x4 - core index']
  #allocation1 [shape = 'u32[72,128]{1,0:T(1,128)}', space=vmem, size = 0x9000, scoped, tag = 'internal scratch']
  #allocation2 [shape = 'bf16[8,64]{1,0:T(8,128)(2,1)}', space=vmem, size = 0x800, scoped, tag = 'scratch operand']
  %s0 = inlined_call_operand.vmem [shape: bf16[2,8,32], index: 0, kind: input, shape index: {}, may-alias: {0,1}]
  %s1 = inlined_call_operand.vmem [shape: bf16[2,8,32], index: 1, kind: input, shape index: {}, may-alias: {0,1}]
  %s2 = inlined_call_operand.vmem [shape: bf16[32,32], index: 2, kind: input, shape index: {}]
  %s3 = inlined_call_operand.vmem [shape: f32[1,32], index: 3, kind: input, shape index: {}]
  %s4 = inlined_call_operand.vmem [shape: bf16[32,64], index: 4, kind: input, shape index: {}]
  %s5 = inlined_call_operand.hbm [shape: f32[1,64], index: 5, kind: input, shape index: {}]
  %s6 = inlined_call_operand.vmem [shape: bf16[32,32], index: 6, kind: input, shape index: {}]
  %s7 = inlined_call_operand.hbm [shape: f32[1,32], index: 7, kind: input, shape index: {}]
  %s8 = inlined_call_operand.hbm [shape: f32[1,32], index: 8, kind: input, shape index: {}]
  %s9 = inlined_call_operand.hbm [shape: f32[1,32], index: 9, kind: input, shape index: {}]
  %s10 = inlined_call_operand.vmem [shape: bf16[2,8,32], index: 10, kind: output, shape index: {}]
  %s11 = sld [smem:[#allocation0]]
  $region93: #{transformer_forward.16} parent=0
    _
  %s13 = ssub.s32 1, %s11
  %s14 = scalar_select 0, %s13, %s11
  $region1: #{transformer_forward.16} parent=0
    #allocation3 [shape = 'u8[512]{0}', space=vmem, size = 0x400, scoped, tag = 'input window, operand 5, single buffered']
    #allocation4 [shape = 's32[2]{0}', space=sflag, size = 0x8, scoped, tag = 'scoped memory for transformer_forward.16']
    #allocation5 [shape = 'u8[512]{0}', space=vmem, size = 0x400, scoped, tag = 'input window, operand 7, single buffered']
    #allocation6 [shape = 's32[1]{0}', space=sflag, size = 0x4, scoped, tag = 'scoped memory for transformer_forward.16']
    #allocation7 [shape = 'u8[512]{0}', space=vmem, size = 0x400, scoped, tag = 'input window, operand 8, single buffered']
    #allocation8 [shape = 'u8[512]{0}', space=vmem, size = 0x400, scoped, tag = 'input window, operand 9, single buffered']
    #allocation9 [shape = 's32[1]{0}', space=sflag, size = 0x4, scoped, tag = 'scoped memory for transformer_forward.16']
    %15 = vsyncpa [#allocation4], 0
    %16 = vsyncpa [#allocation6], 0
    %17 = vsyncpa [#allocation9], 0
    loop: start=0, step=1, limit=4
    $region2: #{transformer_forward.16} parent=1 // loop_pre_header
      _
    $region3: #{transformer_forward.16} parent=1 // loop_header
      %s19 = sphi 0, %s23
      %p20 = scmp.ge.s32.totalorder %s19, 4
      %s26 = sphi 0, %s38
      %s27 = sphi 0, %s34
      %s28 = sphi 0, %s26
      %s29 = sphi 0, %s27
      %s30 = sphi 0, %s28
      %s31 = sphi 0, %s29
      %s43 = sphi 0, %s45
      %s46 = sphi 0, %s43
      %s47 = sphi 0, %s46
      %s63 = sphi 0, %s47
      %s69 = sphi 0, %s71
      %s72 = sphi 0, %s69
      %s73 = sphi 0, %s72
      %s89 = sphi 0, %s73
      %s93 = sphi 0, %s93
      %s95 = sphi 0, %s93
      %s96 = sphi 0, %s95
      %s110 = sphi 0, %s96
      %s114 = sphi 0, %s114
      %s116 = sphi 0, %s114
      %s117 = sphi 0, %s116
      %s131 = sphi 0, %s117
      %s135 = sphi 0, %s135
      %s137 = sphi 0, %s135
      %s138 = sphi 0, %s137
      %s152 = sphi 0, %s138
      %s156 = sphi 0, %s156
      %s158 = sphi 0, %s156
      %s159 = sphi 0, %s158
      %s173 = sphi 0, %s159
      %s177 = sphi 0, %s177
      %s179 = sphi 0, %s177
      %s180 = sphi 0, %s179
      %s194 = sphi 0, %s180
      %s198 = sphi 0, %s198
      %s200 = sphi 0, %s198
      %s201 = sphi 0, %s200
      %s215 = sphi 0, %s201
      %s219 = sphi 0, %s219
      %s221 = sphi 0, %s219
      %s222 = sphi 0, %s221
      %s236 = sphi 0, %s222
      %s240 = sphi 0, %s240
      %s242 = sphi 0, %s240
      %s243 = sphi 0, %s242
      %s257 = sphi 0, %s243
      %s265 = sphi 0, %s267
      %s268 = sphi 0, %s265
      %s269 = sphi 0, %s268
      %s285 = sphi 0, %s269
    $region4: #{transformer_forward.16} parent=1 // loop_header_branch
      %22 = sbr.rel (%p20) target = $region8
    $region5: #{transformer_forward.16} parent=1 // loop_body
      %s24 = ssub.s32 %s19, 1
      %s25 = ssub.s32 %s19, 2
      %s32 = sadd.s32 1, %s27
      %p33 = scmp.ge.s32.totalorder %s32, 1
      %s34 = scalar_select %p33, 0, %s32
      %s35 = sadd.s32 1, %s26
      %s36 = scalar_select %p33, %s35, %s26
      %p37 = scmp.ge.s32.totalorder %s36, 2
      %s38 = scalar_select %p37, 0, %s36
      %s39 = ssub.s32 %s26, %s38
      %s40 = ssub.s32 %s27, %s34
      %s41 = sor.u32 %s39, %s40
      %p42 = scmp.eq.s32.totalorder %s41, 0
      %s44 = sadd.s32 %s43, 1
      %s45 = scalar_select %p42, %s43, %s44
      %p48 = pneg %p42
      %p49 = scmp.eq.s32.totalorder %s19, 1
      %p50 = por %p48, %p49
      %p51 = scmp.ne.s32.totalorder %s43, %s46
      %p52 = scmp.eq.s32.totalorder %s19, 0
      %p53 = por %p51, %p52
      %p54 = scmp.ne.s32.totalorder %s43, %s46
      %p55 = scmp.eq.s32.totalorder %s24, 1
      %p56 = por %p54, %p55
      %p57 = scmp.ne.s32.totalorder %s46, %s47
      %p58 = scmp.eq.s32.totalorder %s24, 0
      %p59 = por %p57, %p58
      %p60 = scmp.ne.s32.totalorder %s46, %s47
      %p61 = scmp.eq.s32.totalorder %s25, 1
      %p62 = por %p60, %p61
      %p64 = scmp.ne.s32.totalorder %s47, %s63
      %p65 = scmp.eq.s32.totalorder %s25, 0
      %p66 = por %p64, %p65
      %s67 = ssub.s32 %s26, %s38
      %p68 = scmp.eq.s32.totalorder %s67, 0
      %s70 = sadd.s32 %s69, 1
      %s71 = scalar_select %p68, %s69, %s70
      %p74 = pneg %p68
      %p75 = scmp.eq.s32.totalorder %s19, 1
      %p76 = por %p74, %p75
      %p77 = scmp.ne.s32.totalorder %s69, %s72
      %p78 = scmp.eq.s32.totalorder %s19, 0
      %p79 = por %p77, %p78
      %p80 = scmp.ne.s32.totalorder %s69, %s72
      %p81 = scmp.eq.s32.totalorder %s24, 1
      %p82 = por %p80, %p81
      %p83 = scmp.ne.s32.totalorder %s72, %s73
      %p84 = scmp.eq.s32.totalorder %s24, 0
      %p85 = por %p83, %p84
      %p86 = scmp.ne.s32.totalorder %s72, %s73
      %p87 = scmp.eq.s32.totalorder %s25, 1
      %p88 = por %p86, %p87
      %p90 = scmp.ne.s32.totalorder %s73, %s89
      %p91 = scmp.eq.s32.totalorder %s25, 0
      %p92 = por %p90, %p91
      %s94 = sadd.s32 %s93, 1
      %p97 = scmp.eq.s32.totalorder %s19, 1
      %p98 = scmp.ne.s32.totalorder %s93, %s95
      %p99 = scmp.eq.s32.totalorder %s19, 0
      %p100 = por %p98, %p99
      %p101 = scmp.ne.s32.totalorder %s93, %s95
      %p102 = scmp.eq.s32.totalorder %s24, 1
      %p103 = por %p101, %p102
      %p104 = scmp.ne.s32.totalorder %s95, %s96
      %p105 = scmp.eq.s32.totalorder %s24, 0
      %p106 = por %p104, %p105
      %p107 = scmp.ne.s32.totalorder %s95, %s96
      %p108 = scmp.eq.s32.totalorder %s25, 1
      %p109 = por %p107, %p108
      %p111 = scmp.ne.s32.totalorder %s96, %s110
      %p112 = scmp.eq.s32.totalorder %s25, 0
      %p113 = por %p111, %p112
      %s115 = sadd.s32 %s114, 1
      %p118 = scmp.eq.s32.totalorder %s19, 1
      %p119 = scmp.ne.s32.totalorder %s114, %s116
      %p120 = scmp.eq.s32.totalorder %s19, 0
      %p121 = por %p119, %p120
      %p122 = scmp.ne.s32.totalorder %s114, %s116
      %p123 = scmp.eq.s32.totalorder %s24, 1
      %p124 = por %p122, %p123
      %p125 = scmp.ne.s32.totalorder %s116, %s117
      %p126 = scmp.eq.s32.totalorder %s24, 0
      %p127 = por %p125, %p126
      %p128 = scmp.ne.s32.totalorder %s116, %s117
      %p129 = scmp.eq.s32.totalorder %s25, 1
      %p130 = por %p128, %p129
      %p132 = scmp.ne.s32.totalorder %s117, %s131
      %p133 = scmp.eq.s32.totalorder %s25, 0
      %p134 = por %p132, %p133
      %s136 = sadd.s32 %s135, 1
      %p139 = scmp.eq.s32.totalorder %s19, 1
      %p140 = scmp.ne.s32.totalorder %s135, %s137
      %p141 = scmp.eq.s32.totalorder %s19, 0
      %p142 = por %p140, %p141
      %p143 = scmp.ne.s32.totalorder %s135, %s137
      %p144 = scmp.eq.s32.totalorder %s24, 1
      %p145 = por %p143, %p144
      %p146 = scmp.ne.s32.totalorder %s137, %s138
      %p147 = scmp.eq.s32.totalorder %s24, 0
      %p148 = por %p146, %p147
      %p149 = scmp.ne.s32.totalorder %s137, %s138
      %p150 = scmp.eq.s32.totalorder %s25, 1
      %p151 = por %p149, %p150
      %p153 = scmp.ne.s32.totalorder %s138, %s152
      %p154 = scmp.eq.s32.totalorder %s25, 0
      %p155 = por %p153, %p154
      %s157 = sadd.s32 %s156, 1
      %p160 = scmp.eq.s32.totalorder %s19, 1
      %p161 = scmp.ne.s32.totalorder %s156, %s158
      %p162 = scmp.eq.s32.totalorder %s19, 0
      %p163 = por %p161, %p162
      %p164 = scmp.ne.s32.totalorder %s156, %s158
      %p165 = scmp.eq.s32.totalorder %s24, 1
      %p166 = por %p164, %p165
      %p167 = scmp.ne.s32.totalorder %s158, %s159
      %p168 = scmp.eq.s32.totalorder %s24, 0
      %p169 = por %p167, %p168
      %p170 = scmp.ne.s32.totalorder %s158, %s159
      %p171 = scmp.eq.s32.totalorder %s25, 1
      %p172 = por %p170, %p171
      %p174 = scmp.ne.s32.totalorder %s159, %s173
      %p175 = scmp.eq.s32.totalorder %s25, 0
      %p176 = por %p174, %p175
      %s178 = sadd.s32 %s177, 1
      %p181 = scmp.eq.s32.totalorder %s19, 1
      %p182 = scmp.ne.s32.totalorder %s177, %s179
      %p183 = scmp.eq.s32.totalorder %s19, 0
      %p184 = por %p182, %p183
      %p185 = scmp.ne.s32.totalorder %s177, %s179
      %p186 = scmp.eq.s32.totalorder %s24, 1
      %p187 = por %p185, %p186
      %p188 = scmp.ne.s32.totalorder %s179, %s180
      %p189 = scmp.eq.s32.totalorder %s24, 0
      %p190 = por %p188, %p189
      %p191 = scmp.ne.s32.totalorder %s179, %s180
      %p192 = scmp.eq.s32.totalorder %s25, 1
      %p193 = por %p191, %p192
      %p195 = scmp.ne.s32.totalorder %s180, %s194
      %p196 = scmp.eq.s32.totalorder %s25, 0
      %p197 = por %p195, %p196
      %s199 = sadd.s32 %s198, 1
      %p202 = scmp.eq.s32.totalorder %s19, 1
      %p203 = scmp.ne.s32.totalorder %s198, %s200
      %p204 = scmp.eq.s32.totalorder %s19, 0
      %p205 = por %p203, %p204
      %p206 = scmp.ne.s32.totalorder %s198, %s200
      %p207 = scmp.eq.s32.totalorder %s24, 1
      %p208 = por %p206, %p207
      %p209 = scmp.ne.s32.totalorder %s200, %s201
      %p210 = scmp.eq.s32.totalorder %s24, 0
      %p211 = por %p209, %p210
      %p212 = scmp.ne.s32.totalorder %s200, %s201
      %p213 = scmp.eq.s32.totalorder %s25, 1
      %p214 = por %p212, %p213
      %p216 = scmp.ne.s32.totalorder %s201, %s215
      %p217 = scmp.eq.s32.totalorder %s25, 0
      %p218 = por %p216, %p217
      %s220 = sadd.s32 %s219, 1
      %p223 = scmp.eq.s32.totalorder %s19, 1
      %p224 = scmp.ne.s32.totalorder %s219, %s221
      %p225 = scmp.eq.s32.totalorder %s19, 0
      %p226 = por %p224, %p225
      %p227 = scmp.ne.s32.totalorder %s219, %s221
      %p228 = scmp.eq.s32.totalorder %s24, 1
      %p229 = por %p227, %p228
      %p230 = scmp.ne.s32.totalorder %s221, %s222
      %p231 = scmp.eq.s32.totalorder %s24, 0
      %p232 = por %p230, %p231
      %p233 = scmp.ne.s32.totalorder %s221, %s222
      %p234 = scmp.eq.s32.totalorder %s25, 1
      %p235 = por %p233, %p234
      %p237 = scmp.ne.s32.totalorder %s222, %s236
      %p238 = scmp.eq.s32.totalorder %s25, 0
      %p239 = por %p237, %p238
      %s241 = sadd.s32 %s240, 1
      %p244 = scmp.eq.s32.totalorder %s19, 1
      %p245 = scmp.ne.s32.totalorder %s240, %s242
      %p246 = scmp.eq.s32.totalorder %s19, 0
      %p247 = por %p245, %p246
      %p248 = scmp.ne.s32.totalorder %s240, %s242
      %p249 = scmp.eq.s32.totalorder %s24, 1
      %p250 = por %p248, %p249
      %p251 = scmp.ne.s32.totalorder %s242, %s243
      %p252 = scmp.eq.s32.totalorder %s24, 0
      %p253 = por %p251, %p252
      %p254 = scmp.ne.s32.totalorder %s242, %s243
      %p255 = scmp.eq.s32.totalorder %s25, 1
      %p256 = por %p254, %p255
      %p258 = scmp.ne.s32.totalorder %s243, %s257
      %p259 = scmp.eq.s32.totalorder %s25, 0
      %p260 = por %p258, %p259
      %s261 = ssub.s32 %s26, %s38
      %s262 = ssub.s32 %s27, %s34
      %s263 = sor.u32 %s261, %s262
      %p264 = scmp.eq.s32.totalorder %s263, 0
      %s266 = sadd.s32 %s265, 1
      %s267 = scalar_select %p264, %s265, %s266
      %p270 = pneg %p264
      %p271 = scmp.eq.s32.totalorder %s19, 1
      %p272 = por %p270, %p271
      %p273 = scmp.ne.s32.totalorder %s265, %s268
      %p274 = scmp.eq.s32.totalorder %s19, 0
      %p275 = por %p273, %p274
      %p276 = scmp.ne.s32.totalorder %s265, %s268
      %p277 = scmp.eq.s32.totalorder %s24, 1
      %p278 = por %p276, %p277
      %p279 = scmp.ne.s32.totalorder %s268, %s269
      %p280 = scmp.eq.s32.totalorder %s24, 0
      %p281 = por %p279, %p280
      %p282 = scmp.ne.s32.totalorder %s268, %s269
      %p283 = scmp.eq.s32.totalorder %s25, 1
      %p284 = por %p282, %p283
      %p286 = scmp.ne.s32.totalorder %s269, %s285
      %p287 = scmp.eq.s32.totalorder %s25, 0
      %p288 = por %p286, %p287
      %p289 = scmp.le.s32.totalorder 1, %s19
      %p290 = scmp.lt.s32.totalorder %s19, 3
      %p291 = pnand %p289, %p290
      %p292 = pneg %p291
      // Predicated region
      $region9: #{transformer_forward.16} parent=5 // pred_check
        _
      $region10: #{transformer_forward.16} parent=5 // pred_check_branch
        %294 = sbr.rel (%p291) target = $region12
      $region11: #{transformer_forward.16} parent=5 // pred_region
        %s295 = ssub.s32 %s19, 1
        // Predicated region
        $region13: #{transformer_forward.16} parent=11 // pred_check
          %p296 = pneg %p106
        $region14: #{transformer_forward.16} parent=11 // pred_check_branch
          %298 = sbr.rel (%p296) target = $region16
        $region15: #{transformer_forward.16} parent=11 // pred_region
          _
        $region16: #{transformer_forward.16} parent=11 // pred_fallthru
          _
        // Predicated region
        $region17: #{transformer_forward.16} parent=11 // pred_check
          %p299 = pneg %p127
        $region18: #{transformer_forward.16} parent=11 // pred_check_branch
          %301 = sbr.rel (%p299) target = $region20
        $region19: #{transformer_forward.16} parent=11 // pred_region
          _
        $region20: #{transformer_forward.16} parent=11 // pred_fallthru
          _
        // Predicated region
        $region21: #{transformer_forward.16} parent=11 // pred_check
          %p302 = pneg %p148
        $region22: #{transformer_forward.16} parent=11 // pred_check_branch
          %304 = sbr.rel (%p302) target = $region24
        $region23: #{transformer_forward.16} parent=11 // pred_region
          _
        $region24: #{transformer_forward.16} parent=11 // pred_fallthru
          _
        // Predicated region
        $region25: #{transformer_forward.16} parent=11 // pred_check
          %p305 = pneg %p169
        $region26: #{transformer_forward.16} parent=11 // pred_check_branch
          %307 = sbr.rel (%p305) target = $region28
        $region27: #{transformer_forward.16} parent=11 // pred_region
          %309 = vsyncadd [#allocation4], 0
          %s311 = sshll.u32 %s5, 4
          %s312 = int_to_ptr.hbm [resolvable:$true] %s311
          %s313 = sshll.u32 [#allocation3], 4
          %s314 = int_to_ptr.vmem [resolvable:$true] %s313
          %316 = dma.hbm_to_vmem [thread:$0]  %s312, 16, %s314, [#allocation4]
        $region28: #{transformer_forward.16} parent=11 // pred_fallthru
          _
        // Predicated region
        $region29: #{transformer_forward.16} parent=11 // pred_check
          %p317 = pneg %p190
        $region30: #{transformer_forward.16} parent=11 // pred_check_branch
          %319 = sbr.rel (%p317) target = $region32
        $region31: #{transformer_forward.16} parent=11 // pred_region
          _
        $region32: #{transformer_forward.16} parent=11 // pred_fallthru
          _
        // Predicated region
        $region33: #{transformer_forward.16} parent=11 // pred_check
          %p320 = pneg %p211
        $region34: #{transformer_forward.16} parent=11 // pred_check_branch
          %322 = sbr.rel (%p320) target = $region36
        $region35: #{transformer_forward.16} parent=11 // pred_region
          %324 = vsyncadd [#allocation6], 0
          %s326 = sshll.u32 %s7, 4
          %s327 = int_to_ptr.hbm [resolvable:$true] %s326
          %s328 = sshll.u32 [#allocation5], 4
          %s329 = int_to_ptr.vmem [resolvable:$true] %s328
          %331 = dma.hbm_to_vmem [thread:$0]  %s327, 16, %s329, [#allocation6]
        $region36: #{transformer_forward.16} parent=11 // pred_fallthru
          _
        // Predicated region
        $region37: #{transformer_forward.16} parent=11 // pred_check
          %p332 = pneg %p232
        $region38: #{transformer_forward.16} parent=11 // pred_check_branch
          %334 = sbr.rel (%p332) target = $region40
        $region39: #{transformer_forward.16} parent=11 // pred_region
          %336 = vsyncadd [#allocation6], 0
          %s338 = sshll.u32 %s8, 4
          %s339 = int_to_ptr.hbm [resolvable:$true] %s338
          %s340 = sshll.u32 [#allocation7], 4
          %s341 = int_to_ptr.vmem [resolvable:$true] %s340
          %343 = dma.hbm_to_vmem [thread:$0]  %s339, 16, %s341, [#allocation6]
        $region40: #{transformer_forward.16} parent=11 // pred_fallthru
          _
        // Predicated region
        $region41: #{transformer_forward.16} parent=11 // pred_check
          %p344 = pneg %p253
        $region42: #{transformer_forward.16} parent=11 // pred_check_branch
          %346 = sbr.rel (%p344) target = $region44
        $region43: #{transformer_forward.16} parent=11 // pred_region
          %348 = vsyncadd [#allocation9], 0
          %s350 = sshll.u32 %s9, 4
          %s351 = int_to_ptr.hbm [resolvable:$true] %s350
          %s352 = sshll.u32 [#allocation8], 4
          %s353 = int_to_ptr.vmem [resolvable:$true] %s352
          %355 = dma.hbm_to_vmem [thread:$0]  %s351, 16, %s353, [#allocation9]
        $region44: #{transformer_forward.16} parent=11 // pred_fallthru
          _
      $region12: #{transformer_forward.16} parent=5 // pred_fallthru
        _
      %p356 = scmp.lt.s32.totalorder %s19, 2
      // Predicated region
      $region45: #{transformer_forward.16} parent=5 // pred_check
        %p357 = pneg %p356
      $region46: #{transformer_forward.16} parent=5 // pred_check_branch
        %359 = sbr.rel (%p357) target = $region48
      $region47: #{transformer_forward.16} parent=5 // pred_region
        // Predicated region
        $region49: #{transformer_forward.16} parent=47 // pred_check
          %p360 = pneg %p53
        $region50: #{transformer_forward.16} parent=47 // pred_check_branch
          %362 = sbr.rel (%p360) target = $region52
        $region51: #{transformer_forward.16} parent=47 // pred_region
          %p363 = scmp.lt.s32.totalorder %s26, 1
          %s364 = scalar_select %p363, %s26, 1
          %p365 = scmp.lt.s32.totalorder %s27, 0
          %s366 = scalar_select %p365, %s27, 0
          %s367 = sadd.s32 %s366, %s364
          %s368 = smul.addr %s367, 4
          %s369 = scalar_lea.vmem %s0, %s368
        $region52: #{transformer_forward.16} parent=47 // pred_fallthru
          _
        // Predicated region
        $region53: #{transformer_forward.16} parent=47 // pred_check
          %p370 = pneg %p79
        $region54: #{transformer_forward.16} parent=47 // pred_check_branch
          %372 = sbr.rel (%p370) target = $region56
        $region55: #{transformer_forward.16} parent=47 // pred_region
          %p373 = scmp.lt.s32.totalorder %s26, 1
          %s374 = scalar_select %p373, %s26, 1
          %s375 = smul.addr %s374, 4
          %s376 = scalar_lea.vmem %s1, %s375
        $region56: #{transformer_forward.16} parent=47 // pred_fallthru
          _
      $region48: #{transformer_forward.16} parent=5 // pred_fallthru
        _
      %p377 = scmp.le.s32.totalorder 1, %s19
      %p378 = scmp.lt.s32.totalorder %s19, 3
      %p379 = pnand %p377, %p378
      %p380 = pneg %p379
      // Predicated region
      $region57: #{transformer_forward.16} parent=5 // pred_check
        _
      $region58: #{transformer_forward.16} parent=5 // pred_check_branch
        %382 = sbr.rel (%p379) target = $region60
      $region59: #{transformer_forward.16} parent=5 // pred_region
        %s383 = ssub.s32 %s19, 1
        // Predicated region
        $region61: #{transformer_forward.16} parent=59 // pred_check
          %p384 = pneg %p169
        $region62: #{transformer_forward.16} parent=59 // pred_check_branch
          %386 = sbr.rel (%p384) target = $region64
        $region63: #{transformer_forward.16} parent=59 // pred_region
          %388 = dma.done [#allocation4], 16
        $region64: #{transformer_forward.16} parent=59 // pred_fallthru
          _
        // Predicated region
        $region65: #{transformer_forward.16} parent=59 // pred_check
          %p389 = pneg %p211
        $region66: #{transformer_forward.16} parent=59 // pred_check_branch
          %391 = sbr.rel (%p389) target = $region68
        $region67: #{transformer_forward.16} parent=59 // pred_region
          %393 = dma.done [#allocation6], 16
        $region68: #{transformer_forward.16} parent=59 // pred_fallthru
          _
        // Predicated region
        $region69: #{transformer_forward.16} parent=59 // pred_check
          %p394 = pneg %p232
        $region70: #{transformer_forward.16} parent=59 // pred_check_branch
          %396 = sbr.rel (%p394) target = $region72
        $region71: #{transformer_forward.16} parent=59 // pred_region
          %398 = dma.done [#allocation6], 16
        $region72: #{transformer_forward.16} parent=59 // pred_fallthru
          _
        // Predicated region
        $region73: #{transformer_forward.16} parent=59 // pred_check
          %p399 = pneg %p253
        $region74: #{transformer_forward.16} parent=59 // pred_check_branch
          %401 = sbr.rel (%p399) target = $region76
        $region75: #{transformer_forward.16} parent=59 // pred_region
          %403 = dma.done [#allocation9], 16
        $region76: #{transformer_forward.16} parent=59 // pred_fallthru
          _
        %p404 = scmp.lt.s32.totalorder %s28, 1
        %s405 = scalar_select %p404, %s28, 1
        %p406 = scmp.lt.s32.totalorder %s29, 0
        %s407 = scalar_select %p406, %s29, 0
        %s408 = sadd.s32 %s407, %s405
        %s409 = smul.addr %s408, 4
        %s410 = scalar_lea.vmem %s0, %s409
        %p411 = pneg %p59
        %p412 = pneg %p56
        %p413 = scmp.lt.s32.totalorder %s28, 1
        %s414 = scalar_select %p413, %s28, 1
        %s415 = smul.addr %s414, 4
        %s416 = scalar_lea.vmem %s1, %s415
        %p417 = pneg %p85
        %p418 = pneg %p82
        %p419 = pneg %p106
        %p420 = pneg %p103
        %p421 = pneg %p127
        %p422 = pneg %p124
        %p423 = pneg %p148
        %p424 = pneg %p145
        %p425 = pneg %p169
        %p426 = pneg %p166
        %p427 = pneg %p190
        %p428 = pneg %p187
        %p429 = pneg %p211
        %p430 = pneg %p208
        %p431 = pneg %p232
        %p432 = pneg %p229
        %p433 = pneg %p253
        %p434 = pneg %p250
        %p435 = pneg %p281
        %p436 = pneg %p278
        %p437 = scmp.lt.s32.totalorder %s28, 1
        %s438 = scalar_select %p437, %s28, 1
        %p439 = scmp.lt.s32.totalorder %s29, 0
        %s440 = scalar_select %p439, %s29, 0
        %s441 = sadd.s32 %s440, %s438
        %s442 = smul.addr %s441, 4
        %s443 = scalar_lea.vmem %s10, %s442
        %p444 = scmp.lt.s32.totalorder %s28, 1
        %s445 = scalar_select %p444, %s28, 1
        %p446 = scmp.lt.s32.totalorder %s29, 0
        %s447 = scalar_select %p446, %s29, 0
        %s448 = sadd.s32 %s447, %s445
        %s449 = smul.addr %s448, 4
        %s450 = scalar_lea.vmem %s0, %s449
        %p451 = scmp.lt.s32.totalorder %s28, 1
        %s452 = scalar_select %p451, %s28, 1
        %s453 = smul.addr %s452, 4
        %s454 = scalar_lea.vmem %s1, %s453
        %p455 = scmp.lt.s32.totalorder %s28, 1
        %s456 = scalar_select %p455, %s28, 1
        %p457 = scmp.lt.s32.totalorder %s29, 0
        %s458 = scalar_select %p457, %s29, 0
        %s459 = sadd.s32 %s458, %s456
        %s460 = smul.addr %s459, 4
        %s461 = scalar_lea.vmem %s10, %s460
        %v463 = vld [vmem:[%s450] sm:$0xf]
        %p464 = scmp.eq.s32.totalorder %s29, 0
        // Predicated region
        $region77: #{transformer_forward.16} parent=59 // pred_check
          %p465 = pneg %p464
        $region78: #{transformer_forward.16} parent=59 // pred_check_branch
          %467 = sbr.rel (%p465) target = $region80
        $region79: #{transformer_forward.16} parent=59 // pred_region
          %v468 = vld [vmem:[%s454] sm:$0xf]
          %v469 = vld [vmem:[%s4] sm:$0xf]
          %v470 = vld [vmem:[%s4 + $0x4] sm:$0xf]
          %v471 = vld [vmem:[%s4 + $0x8] sm:$0xf]
          %v472 = vld [vmem:[%s4 + $0xc] sm:$0xf]
          %v473 = vld [vmem:[#allocation3] sm:$0x1]
          %v475 = vperm.slane %v473, 0
          %v481 = vunpack.c.l.b16 %v469
          %v482 = vunpack.c.l.b16 %v470
          %v483 = vunpack.c.l.b16 %v471
          %v484 = vunpack.c.l.b16 %v472
          %v485 = vpack.c.b16 %v482, %v481
          %v486 = vpack.c.b16 %v484, %v483
          %vm489 = vcmask 261120
          %v491 = vsel %vm489, %v468, 0
          %493 = vmatpush.bf16.msra.mxu0 0
          %494 = vmatpush.bf16.msra.mxu0 0
          %495 = vmatpush.bf16.msra.mxu0 0
          %496 = vmatpush.bf16.msra.mxu0 0
          %497 = vmatpush.bf16.msra.mxu0 0
          %498 = vmatpush.bf16.msra.mxu0 0
          %499 = vmatpush.bf16.msra.mxu0 %v486
          %500 = vmatpush.bf16.msra.mxu0 %v485
          %501 = vmatmul.bf16.gmra.mxu0 %v491
          %v502 = vpop.f32.mrf.mxu0
          %v503 = vadd.f32 %v475, %v502
          %v504 = vpop.f32.mrf.mxu0
          %505 = vdwg.mxu0
          %v506 = vpack.c.bf16 %v503, %v503
          %vm507 = vcmask 519168
          %508 = vst.msk [vmem:[#allocation2] sm:$0xf] %vm507, %v506
        $region80: #{transformer_forward.16} parent=59 // pred_fallthru
          _
        %v509 = vld [vmem:[%s2] sm:$0xf]
        %v510 = vld [vmem:[%s2 + $0x4] sm:$0xf]
        %v511 = vld [vmem:[%s2 + $0x8] sm:$0xf]
        %v512 = vld [vmem:[%s2 + $0xc] sm:$0xf]
        %v513 = vld [vmem:[%s3] sm:$0x1]
        %v515 = vperm.slane %v513, 0
        %v521 = vunpack.c.l.b16 %v509
        %v522 = vunpack.c.l.b16 %v510
        %v523 = vunpack.c.l.b16 %v511
        %v524 = vunpack.c.l.b16 %v512
        %v525 = vpack.c.b16 %v522, %v521
        %v526 = vpack.c.b16 %v524, %v523
        %vm529 = vcmask 261120
        %v531 = vsel %vm529, %v463, 0
        %533 = vmatpush.bf16.msra.mxu0 0
        %534 = vmatpush.bf16.msra.mxu0 0
        %535 = vmatpush.bf16.msra.mxu0 0
        %536 = vmatpush.bf16.msra.mxu0 0
        %537 = vmatpush.bf16.msra.mxu0 0
        %538 = vmatpush.bf16.msra.mxu0 0
        %539 = vmatpush.bf16.msra.mxu0 %v526
        %540 = vmatpush.bf16.msra.mxu0 %v525
        %541 = vmatmul.bf16.gmra.mxu0 %v531
        %v542 = vpop.f32.mrf.mxu0
        %v543 = vadd.f32 %v515, %v542
        %v544 = vpop.f32.mrf.mxu0
        %545 = vdwg.mxu0
        %v546 = vmul.f32 %v543, 0.35355338
        %v547 = vpack.c.bf16 %v546, %v546
        %v548 = vld [vmem:[#allocation2] sm:$0xf]
        %vm549 = vcmask 64512
        %v551 = vsel %vm549, %v547, 0
        %v554 = vsel %vm549, %v548, 0
        %556 = vmatpush.bf16.xpose.msra.mxu0 0
        %557 = vmatpush.bf16.xpose.msra.mxu0 0
        %558 = vmatpush.bf16.xpose.msra.mxu0 0
        %559 = vmatpush.bf16.xpose.msra.mxu0 0
        %560 = vmatpush.bf16.xpose.msra.mxu0 0
        %561 = vmatpush.bf16.xpose.msra.mxu0 0
        %562 = vmatpush.bf16.xpose.msra.mxu0 0
        %563 = vmatpush.bf16.xpose.msra.mxu0 %v554
        %564 = vmatmul.bf16.gmra.mxu0 %v551
        %v565 = vpop.f32.mrf.mxu0
        %v566 = vadd.f32 0.0, %v565
        %v567 = vpop.f32.mrf.mxu0
        %568 = vdwg.mxu0
        %v569 = vsel %vm549, %v566, -inf
        %570 = vmax.xlane.f32.xlu0 %v569
        %v571 = vpop.xlane.xlu0 %570
        %v572 = vsub.f32 %v566, %v571
        %v573 = vmul.f32 %v572, 1.442695
        %v574 = vpow.pop %v573
        %v575 = vsel %vm549, %v574, 0.0
        %576 = vadd.xlane.f32.xlu0 %v575
        %v577 = vpop.xlane.xlu0 %576
        %v578 = vrcp.pop %v577
        %v579 = vmul.f32 %v574, %v578
        %v580 = vpack.c.bf16 %v579, %v579
        %v582 = vunpack.c.l.b16 %v548
        %v583 = vpack.c.b16 %v582, %v582
        %584 = vrot.lane.b32.xlu0 %v583, 96
        %v585 = vpop.permute.xlu0 %584
        %v587 = vsel %vm549, %v580, 0
        %vm589 = vcmask 1043456
        %v591 = vsel %vm589, %v585, 0
        %593 = vmatpush.bf16.msra.mxu0 0
        %594 = vmatpush.bf16.msra.mxu0 0
        %595 = vmatpush.bf16.msra.mxu0 0
        %596 = vmatpush.bf16.msra.mxu0 0
        %597 = vmatpush.bf16.msra.mxu0 0
        %598 = vmatpush.bf16.msra.mxu0 0
        %599 = vmatpush.bf16.msra.mxu0 0
        %600 = vmatpush.bf16.msra.mxu0 %v591
        %601 = vmatmul.bf16.gmra.mxu0 %v587
        %v602 = vpop.f32.mrf.mxu0
        %v603 = vadd.f32 0.0, %v602
        %v604 = vpop.f32.mrf.mxu0
        %605 = vdwg.mxu0
        %v607 = vunpack.c.l.b16 %v547
        %v608 = vpack.c.b16 %v607, %v607
        %609 = vrot.lane.b32.xlu0 %v608, 120
        %v610 = vpop.permute.xlu0 %609
        %611 = vrot.lane.b32.xlu0 %v583, 120
        %v612 = vpop.permute.xlu0 %611
        %v614 = vsel %vm549, %v610, 0
        %v617 = vsel %vm549, %v612, 0
        %619 = vmatpush.bf16.xpose.msra.mxu0 0
        %620 = vmatpush.bf16.xpose.msra.mxu0 0
        %621 = vmatpush.bf16.xpose.msra.mxu0 0
        %622 = vmatpush.bf16.xpose.msra.mxu0 0
        %623 = vmatpush.bf16.xpose.msra.mxu0 0
        %624 = vmatpush.bf16.xpose.msra.mxu0 0
        %625 = vmatpush.bf16.xpose.msra.mxu0 0
        %626 = vmatpush.bf16.xpose.msra.mxu0 %v617
        %627 = vmatmul.bf16.gmra.mxu0 %v614
        %v628 = vpop.f32.mrf.mxu0
        %v629 = vadd.f32 0.0, %v628
        %v630 = vpop.f32.mrf.mxu0
        %631 = vdwg.mxu0
        %v632 = vsel %vm549, %v629, -inf
        %633 = vmax.xlane.f32.xlu0 %v632
        %v634 = vpop.xlane.xlu0 %633
        %v635 = vsub.f32 %v629, %v634
        %v636 = vmul.f32 %v635, 1.442695
        %v637 = vpow.pop %v636
        %v638 = vsel %vm549, %v637, 0.0
        %639 = vadd.xlane.f32.xlu0 %v638
        %v640 = vpop.xlane.xlu0 %639
        %v641 = vrcp.pop %v640
        %v642 = vmul.f32 %v637, %v641
        %v643 = vpack.c.bf16 %v642, %v642
        %644 = vrot.lane.b32.xlu0 %v583, 88
        %v645 = vpop.permute.xlu0 %644
        %v647 = vsel %vm549, %v643, 0
        %v650 = vsel %vm589, %v645, 0
        %652 = vmatpush.bf16.msra.mxu0 0
        %653 = vmatpush.bf16.msra.mxu0 0
        %654 = vmatpush.bf16.msra.mxu0 0
        %655 = vmatpush.bf16.msra.mxu0 0
        %656 = vmatpush.bf16.msra.mxu0 0
        %657 = vmatpush.bf16.msra.mxu0 0
        %658 = vmatpush.bf16.msra.mxu0 0
        %659 = vmatpush.bf16.msra.mxu0 %v650
        %660 = vmatmul.bf16.gmra.mxu0 %v647
        %v661 = vpop.f32.mrf.mxu0
        %v662 = vadd.f32 0.0, %v661
        %v663 = vpop.f32.mrf.mxu0
        %664 = vdwg.mxu0
        %665 = vrot.lane.b32.xlu0 %v608, 112
        %v666 = vpop.permute.xlu0 %665
        %667 = vrot.lane.b32.xlu0 %v583, 112
        %v668 = vpop.permute.xlu0 %667
        %v670 = vsel %vm549, %v666, 0
        %v673 = vsel %vm549, %v668, 0
        %675 = vmatpush.bf16.xpose.msra.mxu0 0
        %676 = vmatpush.bf16.xpose.msra.mxu0 0
        %677 = vmatpush.bf16.xpose.msra.mxu0 0
        %678 = vmatpush.bf16.xpose.msra.mxu0 0
        %679 = vmatpush.bf16.xpose.msra.mxu0 0
        %680 = vmatpush.bf16.xpose.msra.mxu0 0
        %681 = vmatpush.bf16.xpose.msra.mxu0 0
        %682 = vmatpush.bf16.xpose.msra.mxu0 %v673
        %683 = vmatmul.bf16.gmra.mxu0 %v670
        %v684 = vpop.f32.mrf.mxu0
        %v685 = vadd.f32 0.0, %v684
        %v686 = vpop.f32.mrf.mxu0
        %687 = vdwg.mxu0
        %v688 = vsel %vm549, %v685, -inf
        %689 = vmax.xlane.f32.xlu0 %v688
        %v690 = vpop.xlane.xlu0 %689
        %v691 = vsub.f32 %v685, %v690
        %v692 = vmul.f32 %v691, 1.442695
        %v693 = vpow.pop %v692
        %v694 = vsel %vm549, %v693, 0.0
        %695 = vadd.xlane.f32.xlu0 %v694
        %v696 = vpop.xlane.xlu0 %695
        %v697 = vrcp.pop %v696
        %v698 = vmul.f32 %v693, %v697
        %v699 = vpack.c.bf16 %v698, %v698
        %700 = vrot.lane.b32.xlu0 %v583, 80
        %v701 = vpop.permute.xlu0 %700
        %v703 = vsel %vm549, %v699, 0
        %v706 = vsel %vm589, %v701, 0
        %708 = vmatpush.bf16.msra.mxu0 0
        %709 = vmatpush.bf16.msra.mxu0 0
        %710 = vmatpush.bf16.msra.mxu0 0
        %711 = vmatpush.bf16.msra.mxu0 0
        %712 = vmatpush.bf16.msra.mxu0 0
        %713 = vmatpush.bf16.msra.mxu0 0
        %714 = vmatpush.bf16.msra.mxu0 0
        %715 = vmatpush.bf16.msra.mxu0 %v706
        %716 = vmatmul.bf16.gmra.mxu0 %v703
        %v717 = vpop.f32.mrf.mxu0
        %v718 = vadd.f32 0.0, %v717
        %v719 = vpop.f32.mrf.mxu0
        %720 = vdwg.mxu0
        %721 = vrot.lane.b32.xlu0 %v608, 104
        %v722 = vpop.permute.xlu0 %721
        %723 = vrot.lane.b32.xlu0 %v583, 104
        %v724 = vpop.permute.xlu0 %723
        %v726 = vsel %vm549, %v722, 0
        %v729 = vsel %vm549, %v724, 0
        %731 = vmatpush.bf16.xpose.msra.mxu0 0
        %732 = vmatpush.bf16.xpose.msra.mxu0 0
        %733 = vmatpush.bf16.xpose.msra.mxu0 0
        %734 = vmatpush.bf16.xpose.msra.mxu0 0
        %735 = vmatpush.bf16.xpose.msra.mxu0 0
        %736 = vmatpush.bf16.xpose.msra.mxu0 0
        %737 = vmatpush.bf16.xpose.msra.mxu0 0
        %738 = vmatpush.bf16.xpose.msra.mxu0 %v729
        %739 = vmatmul.bf16.gmra.mxu0 %v726
        %v740 = vpop.f32.mrf.mxu0
        %v741 = vadd.f32 0.0, %v740
        %v742 = vpop.f32.mrf.mxu0
        %743 = vdwg.mxu0
        %v744 = vsel %vm549, %v741, -inf
        %745 = vmax.xlane.f32.xlu0 %v744
        %v746 = vpop.xlane.xlu0 %745
        %v747 = vsub.f32 %v741, %v746
        %v748 = vmul.f32 %v747, 1.442695
        %v749 = vpow.pop %v748
        %v750 = vsel %vm549, %v749, 0.0
        %751 = vadd.xlane.f32.xlu0 %v750
        %v752 = vpop.xlane.xlu0 %751
        %v753 = vrcp.pop %v752
        %v754 = vmul.f32 %v749, %v753
        %v755 = vpack.c.bf16 %v754, %v754
        %756 = vrot.lane.b32.xlu0 %v583, 72
        %v757 = vpop.permute.xlu0 %756
        %v759 = vsel %vm549, %v755, 0
        %v762 = vsel %vm589, %v757, 0
        %764 = vmatpush.bf16.msra.mxu0 0
        %765 = vmatpush.bf16.msra.mxu0 0
        %766 = vmatpush.bf16.msra.mxu0 0
        %767 = vmatpush.bf16.msra.mxu0 0
        %768 = vmatpush.bf16.msra.mxu0 0
        %769 = vmatpush.bf16.msra.mxu0 0
        %770 = vmatpush.bf16.msra.mxu0 0
        %771 = vmatpush.bf16.msra.mxu0 %v762
        %772 = vmatmul.bf16.gmra.mxu0 %v759
        %v773 = vpop.f32.mrf.mxu0
        %v774 = vadd.f32 0.0, %v773
        %v775 = vpop.f32.mrf.mxu0
        %776 = vdwg.mxu0
        %778 = vrot.lane.b32.xlu0 %v662, 8
        %v779 = vpop.permute.xlu0 %778
        %782 = vrot.lane.b32.xlu0 %v718, 16
        %v783 = vpop.permute.xlu0 %782
        %786 = vrot.lane.b32.xlu0 %v774, 24
        %v787 = vpop.permute.xlu0 %786
        %v789 = vsel %vm549, %v603, %v779
        %vm790 = vcmask 130048
        %v791 = vsel %vm790, %v789, %v783
        %vm792 = vcmask 195584
        %v793 = vsel %vm792, %v791, %v787
        %v794 = vpack.c.bf16 %v793, %v793
        %v795 = vld [vmem:[%s6] sm:$0xf]
        %v796 = vld [vmem:[%s6 + $0x4] sm:$0xf]
        %v797 = vld [vmem:[%s6 + $0x8] sm:$0xf]
        %v798 = vld [vmem:[%s6 + $0xc] sm:$0xf]
        %v799 = vld [vmem:[#allocation5] sm:$0x1]
        %v801 = vperm.slane %v799, 0
        %v807 = vunpack.c.l.b16 %v795
        %v808 = vunpack.c.l.b16 %v796
        %v809 = vunpack.c.l.b16 %v797
        %v810 = vunpack.c.l.b16 %v798
        %v811 = vpack.c.b16 %v808, %v807
        %v812 = vpack.c.b16 %v810, %v809
        %v816 = vsel %vm529, %v794, 0
        %818 = vmatpush.bf16.msra.mxu0 0
        %819 = vmatpush.bf16.msra.mxu0 0
        %820 = vmatpush.bf16.msra.mxu0 0
        %821 = vmatpush.bf16.msra.mxu0 0
        %822 = vmatpush.bf16.msra.mxu0 0
        %823 = vmatpush.bf16.msra.mxu0 0
        %824 = vmatpush.bf16.msra.mxu0 %v812
        %825 = vmatpush.bf16.msra.mxu0 %v811
        %826 = vmatmul.bf16.gmra.mxu0 %v816
        %v827 = vpop.f32.mrf.mxu0
        %v828 = vadd.f32 %v801, %v827
        %v829 = vpop.f32.mrf.mxu0
        %830 = vdwg.mxu0
        %v831 = vunpack.c.l.bf16 %v463
        %v832 = vadd.f32 %v831, %v828
        %v833 = vld [vmem:[#allocation7] sm:$0x1]
        %v834 = vld [vmem:[#allocation8] sm:$0x1]
        %v835 = vsel %vm529, %v832, 0.0
        %836 = vadd.xlane.f32.xlu0 %v835
        %v837 = vpop.xlane.xlu0 %836
        %v838 = vrcp.pop 32.0
        %v839 = vmul.f32 32.0, %v838
        %v840 = vsub.f32 1.0, %v839
        %v841 = vmul.f32 %v838, %v840
        %v842 = vadd.f32 %v838, %v841
        %vm843 = vweird.f32 %v838
        %v844 = vsel %vm843, %v838, %v842
        %v845 = vmul.f32 %v837, %v844
        %v846 = vsub.f32 %v832, %v845
        %v847 = vmul.f32 %v846, %v846
        %v848 = vsel %vm529, %v847, 0.0
        %849 = vadd.xlane.f32.xlu0 %v848
        %v850 = vpop.xlane.xlu0 %849
        %v851 = vmul.f32 %v850, %v844
        %v852 = vadd.f32 %v851, 1e-05
        %v853 = vrsqrt.pop %v852
        %v854 = vmul.f32 %v853, %v852
        %v855 = vmul.f32 %v854, %v853
        %v856 = vmul.f32 0.5, %v855
        %v857 = vsub.f32 1.5, %v856
        %v858 = vmul.f32 %v853, %v857
        %vm859 = vweird.f32 %v852
        %vm860 = vweird.f32 %v853
        %vm861 = vmor %vm859, %vm860
        %v862 = vsel %vm861, %v853, %v858
        %v863 = vmul.f32 %v846, %v862
        %v865 = vperm.slane %v833, 0
        %v867 = vmul.f32 %v863, %v865
        %v869 = vperm.slane %v834, 0
        %v871 = vadd.f32 %v867, %v869
        %v872 = vpack.c.bf16 %v871, %v871
        %vm873 = vcmask 257024
        %874 = vst.msk [vmem:[%s461] sm:$0xf] %vm873, %v872
        %p875 = scmp.lt.s32.totalorder %s28, 1
        %s876 = scalar_select %p875, %s28, 1
        %p877 = scmp.lt.s32.totalorder %s29, 0
        %s878 = scalar_select %p877, %s29, 0
        %s879 = sadd.s32 %s878, %s876
        %s880 = smul.addr %s879, 4
        %s881 = scalar_lea.vmem %s10, %s880
        // Predicated region
        $region81: #{transformer_forward.16} parent=59 // pred_check
          %p882 = pneg %p278
        $region82: #{transformer_forward.16} parent=59 // pred_check_branch
          %884 = sbr.rel (%p882) target = $region84
        $region83: #{transformer_forward.16} parent=59 // pred_region
          _
        $region84: #{transformer_forward.16} parent=59 // pred_fallthru
          _
      $region60: #{transformer_forward.16} parent=5 // pred_fallthru
        _
      %p885 = scmp.le.s32.totalorder 2, %s19
      // Predicated region
      $region85: #{transformer_forward.16} parent=5 // pred_check
        %p886 = pneg %p885
      $region86: #{transformer_forward.16} parent=5 // pred_check_branch
        %888 = sbr.rel (%p886) target = $region88
      $region87: #{transformer_forward.16} parent=5 // pred_region
        %s889 = ssub.s32 %s19, 2
        // Predicated region
        $region89: #{transformer_forward.16} parent=87 // pred_check
          %p890 = pneg %p284
        $region90: #{transformer_forward.16} parent=87 // pred_check_branch
          %892 = sbr.rel (%p890) target = $region92
        $region91: #{transformer_forward.16} parent=87 // pred_region
          %p893 = scmp.lt.s32.totalorder %s30, 1
          %s894 = scalar_select %p893, %s30, 1
          %p895 = scmp.lt.s32.totalorder %s31, 0
          %s896 = scalar_select %p895, %s31, 0
          %s897 = sadd.s32 %s896, %s894
          %s898 = smul.addr %s897, 4
          %s899 = scalar_lea.vmem %s10, %s898
        $region92: #{transformer_forward.16} parent=87 // pred_fallthru
          _
      $region88: #{transformer_forward.16} parent=5 // pred_fallthru
        _
    $region6: #{transformer_forward.16} parent=1 // loop_footer
      %s23 = sadd.s32 1, %s19
    $region7: #{transformer_forward.16} parent=1 // loop_footer_branch
      %18 = sbr.rel target = $region3
    $region8: #{transformer_forward.16} parent=1 // loop_exit
      _
    %900 = vsyncpa [#allocation4], 1
    %s901 = scalar_lea.sflag [#allocation4], 1
    %902 = vsyncpa %s901, 1
    %903 = vsyncpa [#allocation6], 1
    %904 = vsyncpa [#allocation9], 1

// kernel: transformer_forward.21
$region0: #{transformer_forward.21}
  #allocation0 [shape = 'u32[]', space=smem, size = 0x4, offset = 0x4, fixed_abs, tag = 'smem constant byte address 0x4 - core index']
  #allocation1 [shape = 'u32[72,128]{1,0:T(1,128)}', space=vmem, size = 0x9000, scoped, tag = 'internal scratch']
  #allocation2 [shape = 'bf16[16,32]{1,0:T(8,128)(2,1)}', space=vmem, size = 0x1000, scoped, tag = 'scratch operand']
  %s0 = inlined_call_operand.vmem [shape: bf16[16,32], index: 0, kind: input, shape index: {}]
  %s1 = inlined_call_operand.vmem [shape: f32[1,32], index: 1, kind: input, shape index: {}]
  %s2 = inlined_call_operand.vmem [shape: f32[1,32], index: 2, kind: input, shape index: {}]
  %s3 = inlined_call_operand.vmem [shape: bf16[32,128], index: 3, kind: input, shape index: {}]
  %s4 = inlined_call_operand.vmem [shape: f32[1,128], index: 4, kind: input, shape index: {}]
  %s5 = inlined_call_operand.vmem [shape: f32[16,128], index: 5, kind: output, shape index: {}]
  %s6 = sld [smem:[#allocation0]]
  $region34: #{transformer_forward.21} parent=0
    _
  %s8 = ssub.s32 1, %s6
  %s9 = scalar_select 0, %s8, %s6
  // Predicated region
  $region2: #{transformer_forward.21} parent=0 // pred_check
    _
  $region3: #{transformer_forward.21} parent=0 // pred_check_branch
    %11 = sbr.rel (0) target = $region5
  $region4: #{transformer_forward.21} parent=0 // pred_region
    _
  $region5: #{transformer_forward.21} parent=0 // pred_fallthru
    _
  // Predicated region
  $region6: #{transformer_forward.21} parent=0 // pred_check
    _
  $region7: #{transformer_forward.21} parent=0 // pred_check_branch
    %13 = sbr.rel (0) target = $region9
  $region8: #{transformer_forward.21} parent=0 // pred_region
    _
  $region9: #{transformer_forward.21} parent=0 // pred_fallthru
    _
  // Predicated region
  $region10: #{transformer_forward.21} parent=0 // pred_check
    _
  $region11: #{transformer_forward.21} parent=0 // pred_check_branch
    %15 = sbr.rel (0) target = $region13
  $region12: #{transformer_forward.21} parent=0 // pred_region
    _
  $region13: #{transformer_forward.21} parent=0 // pred_fallthru
    _
  // Predicated region
  $region14: #{transformer_forward.21} parent=0 // pred_check
    _
  $region15: #{transformer_forward.21} parent=0 // pred_check_branch
    %17 = sbr.rel (0) target = $region17
  $region16: #{transformer_forward.21} parent=0 // pred_region
    _
  $region17: #{transformer_forward.21} parent=0 // pred_fallthru
    _
  // Predicated region
  $region18: #{transformer_forward.21} parent=0 // pred_check
    _
  $region19: #{transformer_forward.21} parent=0 // pred_check_branch
    %19 = sbr.rel (0) target = $region21
  $region20: #{transformer_forward.21} parent=0 // pred_region
    _
  $region21: #{transformer_forward.21} parent=0 // pred_fallthru
    _
  %p21 = scmp.eq.s32.totalorder 0, 0
  // Predicated region
  $region22: #{transformer_forward.21} parent=0 // pred_check
    %p22 = pneg %p21
  $region23: #{transformer_forward.21} parent=0 // pred_check_branch
    %24 = sbr.rel (%p22) target = $region25
  $region24: #{transformer_forward.21} parent=0 // pred_region
    %v25 = vld [vmem:[%s0] sm:$0xf]
    %v26 = vld [vmem:[%s0 + $0x4] sm:$0xf]
    %v27 = vunpack.c.l.bf16 %v25
    %v28 = vunpack.c.l.bf16 %v26
    %v29 = vld [vmem:[%s1] sm:$0x1]
    %v30 = vld [vmem:[%s2] sm:$0x1]
    %vm31 = vcmask 261120
    %v32 = vsel %vm31, %v27, 0.0
    %33 = vadd.xlane.f32.xlu0 %v32
    %v34 = vpop.xlane.xlu0 %33
    %v35 = vsel %vm31, %v28, 0.0
    %36 = vadd.xlane.f32.xlu0 %v35
    %v37 = vpop.xlane.xlu0 %36
    %v38 = vrcp.pop 32.0
    %v39 = vmul.f32 32.0, %v38
    %v40 = vsub.f32 1.0, %v39
    %v41 = vmul.f32 %v38, %v40
    %v42 = vadd.f32 %v38, %v41
    %vm43 = vweird.f32 %v38
    %v44 = vsel %vm43, %v38, %v42
    %v45 = vmul.f32 %v34, %v44
    %v46 = vmul.f32 %v37, %v44
    %v47 = vsub.f32 %v27, %v45
    %v48 = vsub.f32 %v28, %v46
    %v49 = vmul.f32 %v47, %v47
    %v50 = vmul.f32 %v48, %v48
    %v51 = vsel %vm31, %v49, 0.0
    %52 = vadd.xlane.f32.xlu0 %v51
    %v53 = vpop.xlane.xlu0 %52
    %v54 = vsel %vm31, %v50, 0.0
    %55 = vadd.xlane.f32.xlu0 %v54
    %v56 = vpop.xlane.xlu0 %55
    %v57 = vmul.f32 %v53, %v44
    %v58 = vmul.f32 %v56, %v44
    %v59 = vadd.f32 %v57, 1e-05
    %v60 = vadd.f32 %v58, 1e-05
    %v61 = vrsqrt.pop %v59
    %v62 = vmul.f32 %v61, %v59
    %v63 = vmul.f32 %v62, %v61
    %v64 = vmul.f32 0.5, %v63
    %v65 = vsub.f32 1.5, %v64
    %v66 = vmul.f32 %v61, %v65
    %vm67 = vweird.f32 %v59
    %vm68 = vweird.f32 %v61
    %vm69 = vmor %vm67, %vm68
    %v70 = vsel %vm69, %v61, %v66
    %v71 = vrsqrt.pop %v60
    %v72 = vmul.f32 %v71, %v60
    %v73 = vmul.f32 %v72, %v71
    %v74 = vmul.f32 0.5, %v73
    %v75 = vsub.f32 1.5, %v74
    %v76 = vmul.f32 %v71, %v75
    %vm77 = vweird.f32 %v60
    %vm78 = vweird.f32 %v71
    %vm79 = vmor %vm77, %vm78
    %v80 = vsel %vm79, %v71, %v76
    %v81 = vmul.f32 %v47, %v70
    %v82 = vmul.f32 %v48, %v80
    %v84 = vperm.slane %v29, 0
    %v86 = vmul.f32 %v81, %v84
    %v87 = vmul.f32 %v82, %v84
    %v89 = vperm.slane %v30, 0
    %v91 = vadd.f32 %v86, %v89
    %v92 = vadd.f32 %v87, %v89
    %v93 = vpack.c.bf16 %v91, %v91
    %v94 = vpack.c.bf16 %v92, %v92
    %vm95 = vcmask 257024
    %96 = vst.msk [vmem:[#allocation2] sm:$0xf] %vm95, %v93
    %97 = vst.msk [vmem:[#allocation2 + $0x4] sm:$0xf] %vm95, %v94
  $region25: #{transformer_forward.21} parent=0 // pred_fallthru
    _
  %v98 = vld [vmem:[#allocation2] sm:$0xf]
  %v99 = vld [vmem:[#allocation2 + $0x4] sm:$0xf]
  %v100 = vld [vmem:[%s3] sm:$0xf]
  %v101 = vld [vmem:[%s3 + $0x4] sm:$0xf]
  %v102 = vld [vmem:[%s3 + $0x8] sm:$0xf]
  %v103 = vld [vmem:[%s3 + $0xc] sm:$0xf]
  %v104 = vld [vmem:[%s4] sm:$0x1]
  %v106 = vperm.slane %v104, 0
  %v110 = vunpack.c.l.b16 %v98
  %v111 = vunpack.c.l.b16 %v99
  %v112 = vpack.c.b16 %v111, %v110
  %v117 = vunpack.c.l.b16 %v100
  %v118 = vunpack.c.l.b16 %v101
  %v119 = vunpack.c.l.b16 %v102
  %v120 = vunpack.c.l.b16 %v103
  %v121 = vpack.c.b16 %v118, %v117
  %v122 = vpack.c.b16 %v120, %v119
  %vm125 = vcmask 261120
  %v127 = vsel %vm125, %v112, 0
  %129 = vmatpush.bf16.msra.mxu0 0
  %130 = vmatpush.bf16.msra.mxu0 0
  %131 = vmatpush.bf16.msra.mxu0 0
  %132 = vmatpush.bf16.msra.mxu0 0
  %133 = vmatpush.bf16.msra.mxu0 0
  %134 = vmatpush.bf16.msra.mxu0 0
  %135 = vmatpush.bf16.msra.mxu0 %v122
  %136 = vmatpush.bf16.msra.mxu0 %v121
  %137 = vmatmul.bf16.gmra.mxu0 %v127
  %v138 = vpop.f32.mrf.mxu0
  %v139 = vadd.f32 %v106, %v138
  %v140 = vpop.f32.mrf.mxu0
  %v141 = vadd.f32 %v106, %v140
  %142 = vdwg.mxu0
  %143 = vst [vmem:[%s5] sm:$0xff] %v139
  %144 = vst [vmem:[%s5 + $0x8] sm:$0xff] %v141
  // Predicated region
  $region26: #{transformer_forward.21} parent=0 // pred_check
    _
  $region27: #{transformer_forward.21} parent=0 // pred_check_branch
    %146 = sbr.rel (0) target = $region29
  $region28: #{transformer_forward.21} parent=0 // pred_region
    _
  $region29: #{transformer_forward.21} parent=0 // pred_fallthru
    _
  // Predicated region
  $region30: #{transformer_forward.21} parent=0 // pred_check
    _
  $region31: #{transformer_forward.21} parent=0 // pred_check_branch
    %148 = sbr.rel (0) target = $region33
  $region32: #{transformer_forward.21} parent=0 // pred_region
    _
  $region33: #{transformer_forward.21} parent=0 // pred_fallthru
    _

</llo_original>
